<compile_context>
chip_gen: v7x
topology: tpu7x:2x2x1
jax: 0.10.0
libtpu: 0.0.40
codegen_flags: <defaults>
</compile_context>

<pallas_src>
import jax
import jax.numpy as jnp
from jax import lax
from jax.experimental import pallas as pl
from jax.experimental.pallas import tpu as pltpu

WORD_DIM = 200  # fixed by the module


def _softplus(v):
    # numerically stable softplus using only exp/log (kernel-safe)
    return jnp.maximum(v, 0.0) + jnp.log(1.0 + jnp.exp(-jnp.abs(v)))


# ------------------------------------------------------------------
# Fused kernel: BiLSTM stack + span gather + classifier + log_softmax
# ------------------------------------------------------------------
def _make_pred_finder_kernel(T, H, n_layers, N):
    H2, H8 = 2 * H, 8 * H

    def kernel(cand_ref, x_ref, *args):
        # cand_ref: SMEM (N, 2) int32 (scalar prefetch)
        # x_ref:    (T, d_in0) f32
        # args:     [w_ih_l, w_hh_l, b_l] * n_layers, cls_w, cls_b, out_ref, act_a, act_b, span_scr
        lstm_refs = args[:3 * n_layers]
        cls_w_ref, cls_b_ref, out_ref, act_a, act_b, span_scr = args[3 * n_layers:]
        act_bufs = (act_a, act_b)

        # Gate-grouped packed lane layout over 8H lanes:
        #   [ i_f i_b | f_f f_b | g_f g_b | o_f o_b ]   (each sub-block H lanes)
        lane = lax.broadcasted_iota(jnp.int32, (1, H8), 1)
        is_fwd_lane = (lane % H2) < H      # fwd half of every 2H gate group

        x_val = x_ref[...]                 # (T, d_in0) f32
        for layer in range(n_layers):
            w_ih = lstm_refs[3 * layer][...]       # (d_in, 8H) bf16  (fwd/bwd, gate-grouped)
            w_hh = lstm_refs[3 * layer + 1][...]   # (2H, 8H)  bf16  (block-diagonal fwd/bwd)
            bias = lstm_refs[3 * layer + 2][...]   # (1, 8H)   f32   (b_ih + b_hh)
            out_buf = act_bufs[layer % 2]          # (T, 2H) VMEM scratch

            # One MXU matmul: input projection of every timestep for BOTH directions.
            xw = jnp.dot(x_val.astype(jnp.bfloat16), w_ih,
                         preferred_element_type=jnp.float32) + bias   # (T, 8H) f32

            h = jnp.zeros((1, H2), jnp.float32)    # [h_fwd | h_bwd]
            c = jnp.zeros((1, H2), jnp.float32)    # [c_fwd | c_bwd]
            for t in range(T):                     # static full unroll (T is small & static)
                rt = T - 1 - t                     # position processed by the bwd direction
                rec = jnp.dot(h.astype(jnp.bfloat16), w_hh,
                              preferred_element_type=jnp.float32)     # (1, 8H) f32
                pre = jnp.where(is_fwd_lane, xw[t:t + 1, :], xw[rt:rt + 1, :])
                gates = pre + rec
                i_g = jax.nn.sigmoid(gates[:, 0 * H2:1 * H2])
                f_g = jax.nn.sigmoid(gates[:, 1 * H2:2 * H2])
                g_g = jnp.tanh(gates[:, 2 * H2:3 * H2])
                o_g = jax.nn.sigmoid(gates[:, 3 * H2:4 * H2])
                c = f_g * c + i_g * g_g
                h = o_g * jnp.tanh(c)
                out_buf[t:t + 1, 0:H] = h[:, 0:H]        # fwd hidden -> row t
                out_buf[rt:rt + 1, H:H2] = h[:, H:H2]    # bwd hidden -> row T-1-t
            x_val = out_buf[...]                         # (T, 2H) feeds the next layer

        # ---- span features from SMEM candidate indices + classifier + log_softmax ----
        feat_ref = act_bufs[(n_layers - 1) % 2]          # (T, 2H) BiLSTM features
        for n in range(N):                               # static unroll (N small)
            s_idx = cand_ref[n, 0]
            e_idx = cand_ref[n, 1]
            s_row = feat_ref[pl.ds(s_idx, 1), :]         # (1, 2H)
            e_row = feat_ref[pl.ds(e_idx, 1), :]         # (1, 2H)
            span_scr[n:n + 1, 0 * H2:1 * H2] = s_row
            span_scr[n:n + 1, 1 * H2:2 * H2] = e_row
            span_scr[n:n + 1, 2 * H2:3 * H2] = s_row + e_row
            span_scr[n:n + 1, 3 * H2:4 * H2] = s_row - e_row

        logits = jnp.dot(span_scr[...], cls_w_ref[...],
                         preferred_element_type=jnp.float32) + cls_b_ref[...]   # (N, 2)
        d = logits[:, 1:2] - logits[:, 0:1]
        # log_softmax over 2 classes in closed form (no cross-lane reductions):
        out_ref[:, 0:1] = -_softplus(d)
        out_ref[:, 1:2] = -_softplus(-d)

    return kernel


# ------------------------------------------------------------------
# Parameter construction (PyTorch layout) + one-time kernel-layout prep
# ------------------------------------------------------------------
def init_params(key, vocab_size, word_dim, pos_size, pos_dim, hidden_dim, n_layers):
    keys = jax.random.split(key, 4 + 8 * n_layers)
    ki = iter(keys)
    params = {
        "word_emb": jax.random.normal(next(ki), (vocab_size, word_dim), jnp.float32) * 0.1,
        "pos_emb": jax.random.normal(next(ki), (pos_size, pos_dim), jnp.float32) * 0.1,
        "cls_w": jax.random.normal(next(ki), (2, 8 * hidden_dim), jnp.float32) * 0.1,
        "cls_b": jax.random.normal(next(ki), (2,), jnp.float32) * 0.1,
        "lstm": [],
    }
    in_dim0 = word_dim + pos_dim
    for layer in range(n_layers):
        d_in = in_dim0 if layer == 0 else 2 * hidden_dim
        dirs = []
        for _ in range(2):  # forward, backward
            dirs.append({
                "w_ih": jax.random.normal(next(ki), (4 * hidden_dim, d_in), jnp.float32) * 0.1,
                "w_hh": jax.random.normal(next(ki), (4 * hidden_dim, hidden_dim), jnp.float32) * 0.1,
                "b_ih": jax.random.normal(next(ki), (4 * hidden_dim,), jnp.float32) * 0.1,
                "b_hh": jax.random.normal(next(ki), (4 * hidden_dim,), jnp.float32) * 0.1,
            })
        params["lstm"].append(dirs)
    return params


def _gate_grouped_ih(w_f, w_b, H):
    # (4H, d_in) torch layout -> (d_in, 8H) gate-grouped [i_f i_b f_f f_b g_f g_b o_f o_b]
    cols = []
    for gt in range(4):
        cols.append(jnp.transpose(w_f[gt * H:(gt + 1) * H, :]))
        cols.append(jnp.transpose(w_b[gt * H:(gt + 1) * H, :]))
    return jnp.concatenate(cols, axis=1)


def _gate_grouped_hh_blockdiag(w_f, w_b, H):
    # (4H, H) torch layouts -> (2H, 8H) block-diagonal so [h_f | h_b] @ blk gives both recurrences
    blk = jnp.zeros((2 * H, 8 * H), jnp.float32)
    for gt in range(4):
        blk = blk.at[0:H, gt * 2 * H: gt * 2 * H + H].set(
            jnp.transpose(w_f[gt * H:(gt + 1) * H, :]))
        blk = blk.at[H:2 * H, gt * 2 * H + H:(gt + 1) * 2 * H].set(
            jnp.transpose(w_b[gt * H:(gt + 1) * H, :]))
    return blk


def _gate_grouped_bias(b_f, b_b, H):
    pieces = []
    for gt in range(4):
        pieces.append(b_f[gt * H:(gt + 1) * H])
        pieces.append(b_b[gt * H:(gt + 1) * H])
    return jnp.concatenate(pieces).reshape(1, 8 * H)


def prepare_params(params):
    """Pre-transpose / pre-combine / pad / cast weights once (hoisted off the forward path)."""
    H = params["cls_w"].shape[1] // 8
    word_dim = params["word_emb"].shape[1]
    pos_dim = params["pos_emb"].shape[1]
    d_in0 = word_dim + pos_dim
    d_in0_pad = ((d_in0 + 15) // 16) * 16           # align for bf16 (16,128) tiling
    pad = d_in0_pad - d_in0

    prepared = {
        "word_emb": jnp.asarray(params["word_emb"], jnp.float32),
        # pad the POS table columns so the concatenated input is already aligned (zero cost/fwd)
        "pos_emb": jnp.pad(jnp.asarray(params["pos_emb"], jnp.float32), ((0, 0), (0, pad))),
        "cls_w_t": jnp.asarray(params["cls_w"], jnp.float32).T,       # (8H, 2)
        "cls_b": jnp.asarray(params["cls_b"], jnp.float32).reshape(1, 2),
        "lstm": [],
    }
    for layer, (fwd, bwd) in enumerate(params["lstm"]):
        w_ih = _gate_grouped_ih(fwd["w_ih"], bwd["w_ih"], H)          # (d_in, 8H)
        if layer == 0 and pad:
            w_ih = jnp.pad(w_ih, ((0, pad), (0, 0)))                  # zero rows for padded input
        w_hh = _gate_grouped_hh_blockdiag(fwd["w_hh"], bwd["w_hh"], H)
        bias = _gate_grouped_bias(fwd["b_ih"] + fwd["b_hh"], bwd["b_ih"] + bwd["b_hh"], H)
        prepared["lstm"].append((w_ih.astype(jnp.bfloat16),
                                 w_hh.astype(jnp.bfloat16),
                                 bias.astype(jnp.float32)))
    return prepared


# ------------------------------------------------------------------
# Forward pass (mirrors Pred_finder.forward) — one pallas_call
# ------------------------------------------------------------------
def pred_finder_forward(prepared, word_input, pos_input, pred_candidates):
    # Embedding lookups + concat (thin JAX glue, matches torch.cat(..., dim=1))
    word_embedded = jnp.take(prepared["word_emb"], word_input, axis=0)   # (T, 200)
    pos_embedded = jnp.take(prepared["pos_emb"], pos_input, axis=0)      # (T, pos_dim_padded)
    x = jnp.concatenate([word_embedded, pos_embedded], axis=1)           # (T, d_in0_padded)

    T, d_in0 = x.shape
    n_layers = len(prepared["lstm"])
    H = prepared["lstm"][0][1].shape[0] // 2
    H8 = 8 * H
    N = pred_candidates.shape[0]

    kernel = _make_pred_finder_kernel(T, H, n_layers, N)

    lstm_args = []
    in_specs = [pl.BlockSpec((T, d_in0), lambda i, cand: (0, 0))]
    for (w_ih, w_hh, b) in prepared["lstm"]:
        lstm_args += [w_ih, w_hh, b]
        in_specs += [
            pl.BlockSpec(w_ih.shape, lambda i, cand: (0, 0)),
            pl.BlockSpec(w_hh.shape, lambda i, cand: (0, 0)),
            pl.BlockSpec(b.shape, lambda i, cand: (0, 0)),
        ]
    in_specs += [
        pl.BlockSpec((H8, 2), lambda i, cand: (0, 0)),
        pl.BlockSpec((1, 2), lambda i, cand: (0, 0)),
    ]

    grid_spec = pltpu.PrefetchScalarGridSpec(
        num_scalar_prefetch=1,           # pred_candidates -> SMEM
        grid=(1,),
        in_specs=in_specs,
        out_specs=pl.BlockSpec((N, 2), lambda i, cand: (0, 0)),
        scratch_shapes=[
            pltpu.VMEM((T, 2 * H), jnp.float32),   # layer activations (ping)
            pltpu.VMEM((T, 2 * H), jnp.float32),   # layer activations (pong)
            pltpu.VMEM((N, H8), jnp.float32),      # span features
        ],
    )

    return pl.pallas_call(
        kernel,
        out_shape=jax.ShapeDtypeStruct((N, 2), jnp.float32),
        grid_spec=grid_spec,
        compiler_params=pltpu.CompilerParams(dimension_semantics=("arbitrary",)),
    )(pred_candidates.astype(jnp.int32), x.astype(jnp.float32), *lstm_args,
      prepared["cls_w_t"], prepared["cls_b"])


if __name__ == "__main__":
    # Small synthetic config consistent with the module.
    vocab_size = 50
    word_dim = WORD_DIM     # 200, fixed in the module
    pos_size = 10
    pos_dim = 16
    hidden_dim = 32
    n_layers = 2
    seq_len = 8
    num_candidates = 4

    key = jax.random.PRNGKey(0)
    k_par, k_word, k_pos, k_cand = jax.random.split(key, 4)

    params = init_params(k_par, vocab_size, word_dim, pos_size, pos_dim,
                         hidden_dim, n_layers)
    prepared = prepare_params(params)   # one-time weight re-layout (off the forward path)

    word_input = jax.random.randint(k_word, (seq_len,), 0, vocab_size, dtype=jnp.int32)
    pos_input = jax.random.randint(k_pos, (seq_len,), 0, pos_size, dtype=jnp.int32)
    pred_candidates = jax.random.randint(
        k_cand, (num_candidates, 2), 0, seq_len, dtype=jnp.int32)

    forward = jax.jit(pred_finder_forward)
    out = forward(prepared, word_input, pos_input, pred_candidates)
    out = jax.block_until_ready(out)

    assert out.shape == (num_candidates, 2)
    assert bool(jnp.all(jnp.isfinite(out)))
    # log_softmax sanity: per-row probabilities sum to 1
    assert bool(jnp.all(jnp.abs(jnp.sum(jnp.exp(out), axis=1) - 1.0) < 1e-4))
    print("KERNEL_OK")
</pallas_src>

<mosaic_0001>
module attributes {stable_mosaic.version = 11 : i64} {
  func.func @kernel(%arg0: i32, %arg1: memref<4x2xi32, #tpu.memory_space<smem>>, %arg2: memref<8x224xf32, #tpu.memory_space<vmem>>, %arg3: memref<224x256xbf16, #tpu.memory_space<vmem>>, %arg4: memref<64x256xbf16, #tpu.memory_space<vmem>>, %arg5: memref<1x256xf32, #tpu.memory_space<vmem>>, %arg6: memref<64x256xbf16, #tpu.memory_space<vmem>>, %arg7: memref<64x256xbf16, #tpu.memory_space<vmem>>, %arg8: memref<1x256xf32, #tpu.memory_space<vmem>>, %arg9: memref<256x2xf32, #tpu.memory_space<vmem>>, %arg10: memref<1x2xf32, #tpu.memory_space<vmem>>, %arg11: memref<4x2xf32, #tpu.memory_space<vmem>>, %arg12: memref<8x64xf32, #tpu.memory_space<vmem>>, %arg13: memref<8x64xf32, #tpu.memory_space<vmem>>, %arg14: memref<4x256xf32, #tpu.memory_space<vmem>>) attributes {dimension_semantics = [#tpu.dimension_semantics<arbitrary>], iteration_bounds = array<i64: 1>, scalar_prefetch = 1 : i64, scratch_operands = 3 : i64, tpu.core_type = #tpu.core_type<tc>, window_params = [{pipeline_mode = #tpu.pipeline_mode<synchronous>, transform_indices = @transform_0, window_bounds = array<i64: 8, 224>}, {pipeline_mode = #tpu.pipeline_mode<synchronous>, transform_indices = @transform_1, window_bounds = array<i64: 224, 256>}, {pipeline_mode = #tpu.pipeline_mode<synchronous>, transform_indices = @transform_2, window_bounds = array<i64: 64, 256>}, {pipeline_mode = #tpu.pipeline_mode<synchronous>, transform_indices = @transform_3, window_bounds = array<i64: 1, 256>}, {pipeline_mode = #tpu.pipeline_mode<synchronous>, transform_indices = @transform_4, window_bounds = array<i64: 64, 256>}, {pipeline_mode = #tpu.pipeline_mode<synchronous>, transform_indices = @transform_5, window_bounds = array<i64: 64, 256>}, {pipeline_mode = #tpu.pipeline_mode<synchronous>, transform_indices = @transform_6, window_bounds = array<i64: 1, 256>}, {pipeline_mode = #tpu.pipeline_mode<synchronous>, transform_indices = @transform_7, window_bounds = array<i64: 256, 2>}, {pipeline_mode = #tpu.pipeline_mode<synchronous>, transform_indices = @transform_8, window_bounds = array<i64: 1, 2>}, {pipeline_mode = #tpu.pipeline_mode<synchronous>, transform_indices = @transform_9, window_bounds = array<i64: 4, 2>}]} {
    %0 = tpu.iota {dimensions = array<i32: 1>} : vector<1x256xi32>
    %c64_i32 = arith.constant 64 : i32
    %c0_i32 = arith.constant 0 : i32
    %1 = arith.cmpi eq, %c64_i32, %c0_i32 : i32
    %c1_i32 = arith.constant 1 : i32
    %2 = arith.select %1, %c1_i32, %c64_i32 : i32
    %3 = vector.broadcast %2 : i32 to vector<1x256xi32>
    %4 = arith.remsi %0, %3 : vector<1x256xi32>
    %c0_i32_0 = arith.constant 0 : i32
    %5 = vector.broadcast %c0_i32_0 : i32 to vector<1x256xi32>
    %6 = arith.cmpi ne, %4, %5 : vector<1x256xi32>
    %c0_i32_1 = arith.constant 0 : i32
    %7 = vector.broadcast %c0_i32_1 : i32 to vector<1x256xi32>
    %8 = arith.cmpi slt, %4, %7 : vector<1x256xi32>
    %c0_i32_2 = arith.constant 0 : i32
    %9 = arith.cmpi slt, %2, %c0_i32_2 : i32
    %10 = vector.broadcast %9 : i1 to vector<1x256xi1>
    %11 = vector.broadcast %10 : vector<1x256xi1> to vector<1x256xi1>
    %12 = arith.xori %8, %11 : vector<1x256xi1>
    %13 = arith.andi %12, %6 : vector<1x256xi1>
    %14 = vector.broadcast %2 : i32 to vector<1x256xi32>
    %15 = arith.addi %4, %14 : vector<1x256xi32>
    %16 = arith.select %13, %15, %4 : vector<1x256xi1>, vector<1x256xi32>
    %c32_i32 = arith.constant 32 : i32
    %17 = vector.broadcast %c32_i32 : i32 to vector<1x256xi32>
    %18 = arith.cmpi slt, %16, %17 : vector<1x256xi32>
    %c0 = arith.constant 0 : index
    %c0_3 = arith.constant 0 : index
    %19 = vector.load %arg2[%c0, %c0_3] : memref<8x224xf32, #tpu.memory_space<vmem>>, vector<8x224xf32>
    %c0_4 = arith.constant 0 : index
    %c0_5 = arith.constant 0 : index
    %20 = vector.load %arg3[%c0_4, %c0_5] : memref<224x256xbf16, #tpu.memory_space<vmem>>, vector<224x256xbf16>
    %c0_6 = arith.constant 0 : index
    %c0_7 = arith.constant 0 : index
    %21 = vector.load %arg4[%c0_6, %c0_7] : memref<64x256xbf16, #tpu.memory_space<vmem>>, vector<64x256xbf16>
    %c0_8 = arith.constant 0 : index
    %c0_9 = arith.constant 0 : index
    %22 = vector.load %arg5[%c0_8, %c0_9] : memref<1x256xf32, #tpu.memory_space<vmem>>, vector<1x256xf32>
    %23 = arith.truncf %19 : vector<8x224xf32> to vector<8x224xbf16>
    %cst = arith.constant dense<0.000000e+00> : vector<8x256xf32>
    %24 = tpu.matmul %23, %20, %cst {dimension_numbers = #tpu.dot_dimension_numbers<[1], [0], [0], [1], [0, 0, 1, 1], [], []>} : vector<8x224xbf16>, vector<224x256xbf16>, vector<8x256xf32> -> vector<8x256xf32>
    %25 = vector.broadcast %22 : vector<1x256xf32> to vector<8x256xf32>
    %26 = arith.addf %24, %25 : vector<8x256xf32>
    %cst_10 = arith.constant 0.000000e+00 : f32
    %27 = vector.broadcast %cst_10 : f32 to vector<1x64xf32>
    %cst_11 = arith.constant 0.000000e+00 : f32
    %28 = vector.broadcast %cst_11 : f32 to vector<1x64xf32>
    %29 = arith.truncf %27 : vector<1x64xf32> to vector<1x64xbf16>
    %cst_12 = arith.constant dense<0.000000e+00> : vector<1x256xf32>
    %30 = tpu.matmul %29, %21, %cst_12 {dimension_numbers = #tpu.dot_dimension_numbers<[1], [0], [0], [1], [0, 0, 1, 1], [], []>} : vector<1x64xbf16>, vector<64x256xbf16>, vector<1x256xf32> -> vector<1x256xf32>
    %31 = vector.extract_strided_slice %26 {offsets = [0, 0], sizes = [1, 256], strides = [1, 1]} : vector<8x256xf32> to vector<1x256xf32>
    %32 = vector.extract_strided_slice %26 {offsets = [7, 0], sizes = [1, 256], strides = [1, 1]} : vector<8x256xf32> to vector<1x256xf32>
    %33 = arith.select %18, %31, %32 : vector<1x256xi1>, vector<1x256xf32>
    %34 = arith.addf %33, %30 : vector<1x256xf32>
    %35 = vector.extract_strided_slice %34 {offsets = [0, 0], sizes = [1, 64], strides = [1, 1]} : vector<1x256xf32> to vector<1x64xf32>
    %36 = arith.negf %35 : vector<1x64xf32>
    %37 = math.exp %36 : vector<1x64xf32>
    %cst_13 = arith.constant 1.000000e+00 : f32
    %38 = vector.broadcast %cst_13 : f32 to vector<1x64xf32>
    %39 = arith.addf %38, %37 : vector<1x64xf32>
    %40 = arith.divf %38, %39 : vector<1x64xf32>
    %41 = vector.extract_strided_slice %34 {offsets = [0, 64], sizes = [1, 64], strides = [1, 1]} : vector<1x256xf32> to vector<1x64xf32>
    %42 = arith.negf %41 : vector<1x64xf32>
    %43 = math.exp %42 : vector<1x64xf32>
    %cst_14 = arith.constant 1.000000e+00 : f32
    %44 = vector.broadcast %cst_14 : f32 to vector<1x64xf32>
    %45 = arith.addf %44, %43 : vector<1x64xf32>
    %46 = arith.divf %44, %45 : vector<1x64xf32>
    %47 = vector.extract_strided_slice %34 {offsets = [0, 128], sizes = [1, 64], strides = [1, 1]} : vector<1x256xf32> to vector<1x64xf32>
    %48 = math.tanh %47 : vector<1x64xf32>
    %49 = vector.extract_strided_slice %34 {offsets = [0, 192], sizes = [1, 64], strides = [1, 1]} : vector<1x256xf32> to vector<1x64xf32>
    %50 = arith.negf %49 : vector<1x64xf32>
    %51 = math.exp %50 : vector<1x64xf32>
    %cst_15 = arith.constant 1.000000e+00 : f32
    %52 = vector.broadcast %cst_15 : f32 to vector<1x64xf32>
    %53 = arith.addf %52, %51 : vector<1x64xf32>
    %54 = arith.divf %52, %53 : vector<1x64xf32>
    %55 = arith.mulf %46, %28 : vector<1x64xf32>
    %56 = arith.mulf %40, %48 : vector<1x64xf32>
    %57 = arith.addf %55, %56 : vector<1x64xf32>
    %58 = math.tanh %57 : vector<1x64xf32>
    %59 = arith.mulf %54, %58 : vector<1x64xf32>
    %60 = vector.extract_strided_slice %59 {offsets = [0, 0], sizes = [1, 32], strides = [1, 1]} : vector<1x64xf32> to vector<1x32xf32>
    %c0_16 = arith.constant 0 : index
    %c0_17 = arith.constant 0 : index
    %61 = vector.load %arg12[%c0_16, %c0_17] : memref<8x64xf32, #tpu.memory_space<vmem>>, vector<1x32xf32>
    tpu.vector_store %arg12[%c0_16, %c0_17], %60 {strides = array<i32>} : memref<8x64xf32, #tpu.memory_space<vmem>>, vector<1x32xf32>,
    %62 = vector.extract_strided_slice %59 {offsets = [0, 32], sizes = [1, 32], strides = [1, 1]} : vector<1x64xf32> to vector<1x32xf32>
    %c7 = arith.constant 7 : index
    %c32 = arith.constant 32 : index
    %63 = vector.load %arg12[%c7, %c32] : memref<8x64xf32, #tpu.memory_space<vmem>>, vector<1x32xf32>
    tpu.vector_store %arg12[%c7, %c32], %62 {strides = array<i32>} : memref<8x64xf32, #tpu.memory_space<vmem>>, vector<1x32xf32>,
    %64 = arith.truncf %59 : vector<1x64xf32> to vector<1x64xbf16>
    %cst_18 = arith.constant dense<0.000000e+00> : vector<1x256xf32>
    %65 = tpu.matmul %64, %21, %cst_18 {dimension_numbers = #tpu.dot_dimension_numbers<[1], [0], [0], [1], [0, 0, 1, 1], [], []>} : vector<1x64xbf16>, vector<64x256xbf16>, vector<1x256xf32> -> vector<1x256xf32>
    %66 = vector.extract_strided_slice %26 {offsets = [1, 0], sizes = [1, 256], strides = [1, 1]} : vector<8x256xf32> to vector<1x256xf32>
    %67 = vector.extract_strided_slice %26 {offsets = [6, 0], sizes = [1, 256], strides = [1, 1]} : vector<8x256xf32> to vector<1x256xf32>
    %68 = arith.select %18, %66, %67 : vector<1x256xi1>, vector<1x256xf32>
    %69 = arith.addf %68, %65 : vector<1x256xf32>
    %70 = vector.extract_strided_slice %69 {offsets = [0, 0], sizes = [1, 64], strides = [1, 1]} : vector<1x256xf32> to vector<1x64xf32>
    %71 = arith.negf %70 : vector<1x64xf32>
    %72 = math.exp %71 : vector<1x64xf32>
    %cst_19 = arith.constant 1.000000e+00 : f32
    %73 = vector.broadcast %cst_19 : f32 to vector<1x64xf32>
    %74 = arith.addf %73, %72 : vector<1x64xf32>
    %75 = arith.divf %73, %74 : vector<1x64xf32>
    %76 = vector.extract_strided_slice %69 {offsets = [0, 64], sizes = [1, 64], strides = [1, 1]} : vector<1x256xf32> to vector<1x64xf32>
    %77 = arith.negf %76 : vector<1x64xf32>
    %78 = math.exp %77 : vector<1x64xf32>
    %cst_20 = arith.constant 1.000000e+00 : f32
    %79 = vector.broadcast %cst_20 : f32 to vector<1x64xf32>
    %80 = arith.addf %79, %78 : vector<1x64xf32>
    %81 = arith.divf %79, %80 : vector<1x64xf32>
    %82 = vector.extract_strided_slice %69 {offsets = [0, 128], sizes = [1, 64], strides = [1, 1]} : vector<1x256xf32> to vector<1x64xf32>
    %83 = math.tanh %82 : vector<1x64xf32>
    %84 = vector.extract_strided_slice %69 {offsets = [0, 192], sizes = [1, 64], strides = [1, 1]} : vector<1x256xf32> to vector<1x64xf32>
    %85 = arith.negf %84 : vector<1x64xf32>
    %86 = math.exp %85 : vector<1x64xf32>
    %cst_21 = arith.constant 1.000000e+00 : f32
    %87 = vector.broadcast %cst_21 : f32 to vector<1x64xf32>
    %88 = arith.addf %87, %86 : vector<1x64xf32>
    %89 = arith.divf %87, %88 : vector<1x64xf32>
    %90 = arith.mulf %81, %57 : vector<1x64xf32>
    %91 = arith.mulf %75, %83 : vector<1x64xf32>
    %92 = arith.addf %90, %91 : vector<1x64xf32>
    %93 = math.tanh %92 : vector<1x64xf32>
    %94 = arith.mulf %89, %93 : vector<1x64xf32>
    %95 = vector.extract_strided_slice %94 {offsets = [0, 0], sizes = [1, 32], strides = [1, 1]} : vector<1x64xf32> to vector<1x32xf32>
    %c1 = arith.constant 1 : index
    %c0_22 = arith.constant 0 : index
    %96 = vector.load %arg12[%c1, %c0_22] : memref<8x64xf32, #tpu.memory_space<vmem>>, vector<1x32xf32>
    tpu.vector_store %arg12[%c1, %c0_22], %95 {strides = array<i32>} : memref<8x64xf32, #tpu.memory_space<vmem>>, vector<1x32xf32>,
    %97 = vector.extract_strided_slice %94 {offsets = [0, 32], sizes = [1, 32], strides = [1, 1]} : vector<1x64xf32> to vector<1x32xf32>
    %c6 = arith.constant 6 : index
    %c32_23 = arith.constant 32 : index
    %98 = vector.load %arg12[%c6, %c32_23] : memref<8x64xf32, #tpu.memory_space<vmem>>, vector<1x32xf32>
    tpu.vector_store %arg12[%c6, %c32_23], %97 {strides = array<i32>} : memref<8x64xf32, #tpu.memory_space<vmem>>, vector<1x32xf32>,
    %99 = arith.truncf %94 : vector<1x64xf32> to vector<1x64xbf16>
    %cst_24 = arith.constant dense<0.000000e+00> : vector<1x256xf32>
    %100 = tpu.matmul %99, %21, %cst_24 {dimension_numbers = #tpu.dot_dimension_numbers<[1], [0], [0], [1], [0, 0, 1, 1], [], []>} : vector<1x64xbf16>, vector<64x256xbf16>, vector<1x256xf32> -> vector<1x256xf32>
    %101 = vector.extract_strided_slice %26 {offsets = [2, 0], sizes = [1, 256], strides = [1, 1]} : vector<8x256xf32> to vector<1x256xf32>
    %102 = vector.extract_strided_slice %26 {offsets = [5, 0], sizes = [1, 256], strides = [1, 1]} : vector<8x256xf32> to vector<1x256xf32>
    %103 = arith.select %18, %101, %102 : vector<1x256xi1>, vector<1x256xf32>
    %104 = arith.addf %103, %100 : vector<1x256xf32>
    %105 = vector.extract_strided_slice %104 {offsets = [0, 0], sizes = [1, 64], strides = [1, 1]} : vector<1x256xf32> to vector<1x64xf32>
    %106 = arith.negf %105 : vector<1x64xf32>
    %107 = math.exp %106 : vector<1x64xf32>
    %cst_25 = arith.constant 1.000000e+00 : f32
    %108 = vector.broadcast %cst_25 : f32 to vector<1x64xf32>
    %109 = arith.addf %108, %107 : vector<1x64xf32>
    %110 = arith.divf %108, %109 : vector<1x64xf32>
    %111 = vector.extract_strided_slice %104 {offsets = [0, 64], sizes = [1, 64], strides = [1, 1]} : vector<1x256xf32> to vector<1x64xf32>
    %112 = arith.negf %111 : vector<1x64xf32>
    %113 = math.exp %112 : vector<1x64xf32>
    %cst_26 = arith.constant 1.000000e+00 : f32
    %114 = vector.broadcast %cst_26 : f32 to vector<1x64xf32>
    %115 = arith.addf %114, %113 : vector<1x64xf32>
    %116 = arith.divf %114, %115 : vector<1x64xf32>
    %117 = vector.extract_strided_slice %104 {offsets = [0, 128], sizes = [1, 64], strides = [1, 1]} : vector<1x256xf32> to vector<1x64xf32>
    %118 = math.tanh %117 : vector<1x64xf32>
    %119 = vector.extract_strided_slice %104 {offsets = [0, 192], sizes = [1, 64], strides = [1, 1]} : vector<1x256xf32> to vector<1x64xf32>
    %120 = arith.negf %119 : vector<1x64xf32>
    %121 = math.exp %120 : vector<1x64xf32>
    %cst_27 = arith.constant 1.000000e+00 : f32
    %122 = vector.broadcast %cst_27 : f32 to vector<1x64xf32>
    %123 = arith.addf %122, %121 : vector<1x64xf32>
    %124 = arith.divf %122, %123 : vector<1x64xf32>
    %125 = arith.mulf %116, %92 : vector<1x64xf32>
    %126 = arith.mulf %110, %118 : vector<1x64xf32>
    %127 = arith.addf %125, %126 : vector<1x64xf32>
    %128 = math.tanh %127 : vector<1x64xf32>
    %129 = arith.mulf %124, %128 : vector<1x64xf32>
    %130 = vector.extract_strided_slice %129 {offsets = [0, 0], sizes = [1, 32], strides = [1, 1]} : vector<1x64xf32> to vector<1x32xf32>
    %c2 = arith.constant 2 : index
    %c0_28 = arith.constant 0 : index
    %131 = vector.load %arg12[%c2, %c0_28] : memref<8x64xf32, #tpu.memory_space<vmem>>, vector<1x32xf32>
    tpu.vector_store %arg12[%c2, %c0_28], %130 {strides = array<i32>} : memref<8x64xf32, #tpu.memory_space<vmem>>, vector<1x32xf32>,
    %132 = vector.extract_strided_slice %129 {offsets = [0, 32], sizes = [1, 32], strides = [1, 1]} : vector<1x64xf32> to vector<1x32xf32>
    %c5 = arith.constant 5 : index
    %c32_29 = arith.constant 32 : index
    %133 = vector.load %arg12[%c5, %c32_29] : memref<8x64xf32, #tpu.memory_space<vmem>>, vector<1x32xf32>
    tpu.vector_store %arg12[%c5, %c32_29], %132 {strides = array<i32>} : memref<8x64xf32, #tpu.memory_space<vmem>>, vector<1x32xf32>,
    %134 = arith.truncf %129 : vector<1x64xf32> to vector<1x64xbf16>
    %cst_30 = arith.constant dense<0.000000e+00> : vector<1x256xf32>
    %135 = tpu.matmul %134, %21, %cst_30 {dimension_numbers = #tpu.dot_dimension_numbers<[1], [0], [0], [1], [0, 0, 1, 1], [], []>} : vector<1x64xbf16>, vector<64x256xbf16>, vector<1x256xf32> -> vector<1x256xf32>
    %136 = vector.extract_strided_slice %26 {offsets = [3, 0], sizes = [1, 256], strides = [1, 1]} : vector<8x256xf32> to vector<1x256xf32>
    %137 = vector.extract_strided_slice %26 {offsets = [4, 0], sizes = [1, 256], strides = [1, 1]} : vector<8x256xf32> to vector<1x256xf32>
    %138 = arith.select %18, %136, %137 : vector<1x256xi1>, vector<1x256xf32>
    %139 = arith.addf %138, %135 : vector<1x256xf32>
    %140 = vector.extract_strided_slice %139 {offsets = [0, 0], sizes = [1, 64], strides = [1, 1]} : vector<1x256xf32> to vector<1x64xf32>
    %141 = arith.negf %140 : vector<1x64xf32>
    %142 = math.exp %141 : vector<1x64xf32>
    %cst_31 = arith.constant 1.000000e+00 : f32
    %143 = vector.broadcast %cst_31 : f32 to vector<1x64xf32>
    %144 = arith.addf %143, %142 : vector<1x64xf32>
    %145 = arith.divf %143, %144 : vector<1x64xf32>
    %146 = vector.extract_strided_slice %139 {offsets = [0, 64], sizes = [1, 64], strides = [1, 1]} : vector<1x256xf32> to vector<1x64xf32>
    %147 = arith.negf %146 : vector<1x64xf32>
    %148 = math.exp %147 : vector<1x64xf32>
    %cst_32 = arith.constant 1.000000e+00 : f32
    %149 = vector.broadcast %cst_32 : f32 to vector<1x64xf32>
    %150 = arith.addf %149, %148 : vector<1x64xf32>
    %151 = arith.divf %149, %150 : vector<1x64xf32>
    %152 = vector.extract_strided_slice %139 {offsets = [0, 128], sizes = [1, 64], strides = [1, 1]} : vector<1x256xf32> to vector<1x64xf32>
    %153 = math.tanh %152 : vector<1x64xf32>
    %154 = vector.extract_strided_slice %139 {offsets = [0, 192], sizes = [1, 64], strides = [1, 1]} : vector<1x256xf32> to vector<1x64xf32>
    %155 = arith.negf %154 : vector<1x64xf32>
    %156 = math.exp %155 : vector<1x64xf32>
    %cst_33 = arith.constant 1.000000e+00 : f32
    %157 = vector.broadcast %cst_33 : f32 to vector<1x64xf32>
    %158 = arith.addf %157, %156 : vector<1x64xf32>
    %159 = arith.divf %157, %158 : vector<1x64xf32>
    %160 = arith.mulf %151, %127 : vector<1x64xf32>
    %161 = arith.mulf %145, %153 : vector<1x64xf32>
    %162 = arith.addf %160, %161 : vector<1x64xf32>
    %163 = math.tanh %162 : vector<1x64xf32>
    %164 = arith.mulf %159, %163 : vector<1x64xf32>
    %165 = vector.extract_strided_slice %164 {offsets = [0, 0], sizes = [1, 32], strides = [1, 1]} : vector<1x64xf32> to vector<1x32xf32>
    %c3 = arith.constant 3 : index
    %c0_34 = arith.constant 0 : index
    %166 = vector.load %arg12[%c3, %c0_34] : memref<8x64xf32, #tpu.memory_space<vmem>>, vector<1x32xf32>
    tpu.vector_store %arg12[%c3, %c0_34], %165 {strides = array<i32>} : memref<8x64xf32, #tpu.memory_space<vmem>>, vector<1x32xf32>,
    %167 = vector.extract_strided_slice %164 {offsets = [0, 32], sizes = [1, 32], strides = [1, 1]} : vector<1x64xf32> to vector<1x32xf32>
    %c4 = arith.constant 4 : index
    %c32_35 = arith.constant 32 : index
    %168 = vector.load %arg12[%c4, %c32_35] : memref<8x64xf32, #tpu.memory_space<vmem>>, vector<1x32xf32>
    tpu.vector_store %arg12[%c4, %c32_35], %167 {strides = array<i32>} : memref<8x64xf32, #tpu.memory_space<vmem>>, vector<1x32xf32>,
    %169 = arith.truncf %164 : vector<1x64xf32> to vector<1x64xbf16>
    %cst_36 = arith.constant dense<0.000000e+00> : vector<1x256xf32>
    %170 = tpu.matmul %169, %21, %cst_36 {dimension_numbers = #tpu.dot_dimension_numbers<[1], [0], [0], [1], [0, 0, 1, 1], [], []>} : vector<1x64xbf16>, vector<64x256xbf16>, vector<1x256xf32> -> vector<1x256xf32>
    %171 = vector.extract_strided_slice %26 {offsets = [4, 0], sizes = [1, 256], strides = [1, 1]} : vector<8x256xf32> to vector<1x256xf32>
    %172 = vector.extract_strided_slice %26 {offsets = [3, 0], sizes = [1, 256], strides = [1, 1]} : vector<8x256xf32> to vector<1x256xf32>
    %173 = arith.select %18, %171, %172 : vector<1x256xi1>, vector<1x256xf32>
    %174 = arith.addf %173, %170 : vector<1x256xf32>
    %175 = vector.extract_strided_slice %174 {offsets = [0, 0], sizes = [1, 64], strides = [1, 1]} : vector<1x256xf32> to vector<1x64xf32>
    %176 = arith.negf %175 : vector<1x64xf32>
    %177 = math.exp %176 : vector<1x64xf32>
    %cst_37 = arith.constant 1.000000e+00 : f32
    %178 = vector.broadcast %cst_37 : f32 to vector<1x64xf32>
    %179 = arith.addf %178, %177 : vector<1x64xf32>
    %180 = arith.divf %178, %179 : vector<1x64xf32>
    %181 = vector.extract_strided_slice %174 {offsets = [0, 64], sizes = [1, 64], strides = [1, 1]} : vector<1x256xf32> to vector<1x64xf32>
    %182 = arith.negf %181 : vector<1x64xf32>
    %183 = math.exp %182 : vector<1x64xf32>
    %cst_38 = arith.constant 1.000000e+00 : f32
    %184 = vector.broadcast %cst_38 : f32 to vector<1x64xf32>
    %185 = arith.addf %184, %183 : vector<1x64xf32>
    %186 = arith.divf %184, %185 : vector<1x64xf32>
    %187 = vector.extract_strided_slice %174 {offsets = [0, 128], sizes = [1, 64], strides = [1, 1]} : vector<1x256xf32> to vector<1x64xf32>
    %188 = math.tanh %187 : vector<1x64xf32>
    %189 = vector.extract_strided_slice %174 {offsets = [0, 192], sizes = [1, 64], strides = [1, 1]} : vector<1x256xf32> to vector<1x64xf32>
    %190 = arith.negf %189 : vector<1x64xf32>
    %191 = math.exp %190 : vector<1x64xf32>
    %cst_39 = arith.constant 1.000000e+00 : f32
    %192 = vector.broadcast %cst_39 : f32 to vector<1x64xf32>
    %193 = arith.addf %192, %191 : vector<1x64xf32>
    %194 = arith.divf %192, %193 : vector<1x64xf32>
    %195 = arith.mulf %186, %162 : vector<1x64xf32>
    %196 = arith.mulf %180, %188 : vector<1x64xf32>
    %197 = arith.addf %195, %196 : vector<1x64xf32>
    %198 = math.tanh %197 : vector<1x64xf32>
    %199 = arith.mulf %194, %198 : vector<1x64xf32>
    %200 = vector.extract_strided_slice %199 {offsets = [0, 0], sizes = [1, 32], strides = [1, 1]} : vector<1x64xf32> to vector<1x32xf32>
    %c4_40 = arith.constant 4 : index
    %c0_41 = arith.constant 0 : index
    %201 = vector.load %arg12[%c4_40, %c0_41] : memref<8x64xf32, #tpu.memory_space<vmem>>, vector<1x32xf32>
    tpu.vector_store %arg12[%c4_40, %c0_41], %200 {strides = array<i32>} : memref<8x64xf32, #tpu.memory_space<vmem>>, vector<1x32xf32>,
    %202 = vector.extract_strided_slice %199 {offsets = [0, 32], sizes = [1, 32], strides = [1, 1]} : vector<1x64xf32> to vector<1x32xf32>
    %c3_42 = arith.constant 3 : index
    %c32_43 = arith.constant 32 : index
    %203 = vector.load %arg12[%c3_42, %c32_43] : memref<8x64xf32, #tpu.memory_space<vmem>>, vector<1x32xf32>
    tpu.vector_store %arg12[%c3_42, %c32_43], %202 {strides = array<i32>} : memref<8x64xf32, #tpu.memory_space<vmem>>, vector<1x32xf32>,
    %204 = arith.truncf %199 : vector<1x64xf32> to vector<1x64xbf16>
    %cst_44 = arith.constant dense<0.000000e+00> : vector<1x256xf32>
    %205 = tpu.matmul %204, %21, %cst_44 {dimension_numbers = #tpu.dot_dimension_numbers<[1], [0], [0], [1], [0, 0, 1, 1], [], []>} : vector<1x64xbf16>, vector<64x256xbf16>, vector<1x256xf32> -> vector<1x256xf32>
    %206 = vector.extract_strided_slice %26 {offsets = [5, 0], sizes = [1, 256], strides = [1, 1]} : vector<8x256xf32> to vector<1x256xf32>
    %207 = vector.extract_strided_slice %26 {offsets = [2, 0], sizes = [1, 256], strides = [1, 1]} : vector<8x256xf32> to vector<1x256xf32>
    %208 = arith.select %18, %206, %207 : vector<1x256xi1>, vector<1x256xf32>
    %209 = arith.addf %208, %205 : vector<1x256xf32>
    %210 = vector.extract_strided_slice %209 {offsets = [0, 0], sizes = [1, 64], strides = [1, 1]} : vector<1x256xf32> to vector<1x64xf32>
    %211 = arith.negf %210 : vector<1x64xf32>
    %212 = math.exp %211 : vector<1x64xf32>
    %cst_45 = arith.constant 1.000000e+00 : f32
    %213 = vector.broadcast %cst_45 : f32 to vector<1x64xf32>
    %214 = arith.addf %213, %212 : vector<1x64xf32>
    %215 = arith.divf %213, %214 : vector<1x64xf32>
    %216 = vector.extract_strided_slice %209 {offsets = [0, 64], sizes = [1, 64], strides = [1, 1]} : vector<1x256xf32> to vector<1x64xf32>
    %217 = arith.negf %216 : vector<1x64xf32>
    %218 = math.exp %217 : vector<1x64xf32>
    %cst_46 = arith.constant 1.000000e+00 : f32
    %219 = vector.broadcast %cst_46 : f32 to vector<1x64xf32>
    %220 = arith.addf %219, %218 : vector<1x64xf32>
    %221 = arith.divf %219, %220 : vector<1x64xf32>
    %222 = vector.extract_strided_slice %209 {offsets = [0, 128], sizes = [1, 64], strides = [1, 1]} : vector<1x256xf32> to vector<1x64xf32>
    %223 = math.tanh %222 : vector<1x64xf32>
    %224 = vector.extract_strided_slice %209 {offsets = [0, 192], sizes = [1, 64], strides = [1, 1]} : vector<1x256xf32> to vector<1x64xf32>
    %225 = arith.negf %224 : vector<1x64xf32>
    %226 = math.exp %225 : vector<1x64xf32>
    %cst_47 = arith.constant 1.000000e+00 : f32
    %227 = vector.broadcast %cst_47 : f32 to vector<1x64xf32>
    %228 = arith.addf %227, %226 : vector<1x64xf32>
    %229 = arith.divf %227, %228 : vector<1x64xf32>
    %230 = arith.mulf %221, %197 : vector<1x64xf32>
    %231 = arith.mulf %215, %223 : vector<1x64xf32>
    %232 = arith.addf %230, %231 : vector<1x64xf32>
    %233 = math.tanh %232 : vector<1x64xf32>
    %234 = arith.mulf %229, %233 : vector<1x64xf32>
    %235 = vector.extract_strided_slice %234 {offsets = [0, 0], sizes = [1, 32], strides = [1, 1]} : vector<1x64xf32> to vector<1x32xf32>
    %c5_48 = arith.constant 5 : index
    %c0_49 = arith.constant 0 : index
    %236 = vector.load %arg12[%c5_48, %c0_49] : memref<8x64xf32, #tpu.memory_space<vmem>>, vector<1x32xf32>
    tpu.vector_store %arg12[%c5_48, %c0_49], %235 {strides = array<i32>} : memref<8x64xf32, #tpu.memory_space<vmem>>, vector<1x32xf32>,
    %237 = vector.extract_strided_slice %234 {offsets = [0, 32], sizes = [1, 32], strides = [1, 1]} : vector<1x64xf32> to vector<1x32xf32>
    %c2_50 = arith.constant 2 : index
    %c32_51 = arith.constant 32 : index
    %238 = vector.load %arg12[%c2_50, %c32_51] : memref<8x64xf32, #tpu.memory_space<vmem>>, vector<1x32xf32>
    tpu.vector_store %arg12[%c2_50, %c32_51], %237 {strides = array<i32>} : memref<8x64xf32, #tpu.memory_space<vmem>>, vector<1x32xf32>,
    %239 = arith.truncf %234 : vector<1x64xf32> to vector<1x64xbf16>
    %cst_52 = arith.constant dense<0.000000e+00> : vector<1x256xf32>
    %240 = tpu.matmul %239, %21, %cst_52 {dimension_numbers = #tpu.dot_dimension_numbers<[1], [0], [0], [1], [0, 0, 1, 1], [], []>} : vector<1x64xbf16>, vector<64x256xbf16>, vector<1x256xf32> -> vector<1x256xf32>
    %241 = vector.extract_strided_slice %26 {offsets = [6, 0], sizes = [1, 256], strides = [1, 1]} : vector<8x256xf32> to vector<1x256xf32>
    %242 = vector.extract_strided_slice %26 {offsets = [1, 0], sizes = [1, 256], strides = [1, 1]} : vector<8x256xf32> to vector<1x256xf32>
    %243 = arith.select %18, %241, %242 : vector<1x256xi1>, vector<1x256xf32>
    %244 = arith.addf %243, %240 : vector<1x256xf32>
    %245 = vector.extract_strided_slice %244 {offsets = [0, 0], sizes = [1, 64], strides = [1, 1]} : vector<1x256xf32> to vector<1x64xf32>
    %246 = arith.negf %245 : vector<1x64xf32>
    %247 = math.exp %246 : vector<1x64xf32>
    %cst_53 = arith.constant 1.000000e+00 : f32
    %248 = vector.broadcast %cst_53 : f32 to vector<1x64xf32>
    %249 = arith.addf %248, %247 : vector<1x64xf32>
    %250 = arith.divf %248, %249 : vector<1x64xf32>
    %251 = vector.extract_strided_slice %244 {offsets = [0, 64], sizes = [1, 64], strides = [1, 1]} : vector<1x256xf32> to vector<1x64xf32>
    %252 = arith.negf %251 : vector<1x64xf32>
    %253 = math.exp %252 : vector<1x64xf32>
    %cst_54 = arith.constant 1.000000e+00 : f32
    %254 = vector.broadcast %cst_54 : f32 to vector<1x64xf32>
    %255 = arith.addf %254, %253 : vector<1x64xf32>
    %256 = arith.divf %254, %255 : vector<1x64xf32>
    %257 = vector.extract_strided_slice %244 {offsets = [0, 128], sizes = [1, 64], strides = [1, 1]} : vector<1x256xf32> to vector<1x64xf32>
    %258 = math.tanh %257 : vector<1x64xf32>
    %259 = vector.extract_strided_slice %244 {offsets = [0, 192], sizes = [1, 64], strides = [1, 1]} : vector<1x256xf32> to vector<1x64xf32>
    %260 = arith.negf %259 : vector<1x64xf32>
    %261 = math.exp %260 : vector<1x64xf32>
    %cst_55 = arith.constant 1.000000e+00 : f32
    %262 = vector.broadcast %cst_55 : f32 to vector<1x64xf32>
    %263 = arith.addf %262, %261 : vector<1x64xf32>
    %264 = arith.divf %262, %263 : vector<1x64xf32>
    %265 = arith.mulf %256, %232 : vector<1x64xf32>
    %266 = arith.mulf %250, %258 : vector<1x64xf32>
    %267 = arith.addf %265, %266 : vector<1x64xf32>
    %268 = math.tanh %267 : vector<1x64xf32>
    %269 = arith.mulf %264, %268 : vector<1x64xf32>
    %270 = vector.extract_strided_slice %269 {offsets = [0, 0], sizes = [1, 32], strides = [1, 1]} : vector<1x64xf32> to vector<1x32xf32>
    %c6_56 = arith.constant 6 : index
    %c0_57 = arith.constant 0 : index
    %271 = vector.load %arg12[%c6_56, %c0_57] : memref<8x64xf32, #tpu.memory_space<vmem>>, vector<1x32xf32>
    tpu.vector_store %arg12[%c6_56, %c0_57], %270 {strides = array<i32>} : memref<8x64xf32, #tpu.memory_space<vmem>>, vector<1x32xf32>,
    %272 = vector.extract_strided_slice %269 {offsets = [0, 32], sizes = [1, 32], strides = [1, 1]} : vector<1x64xf32> to vector<1x32xf32>
    %c1_58 = arith.constant 1 : index
    %c32_59 = arith.constant 32 : index
    %273 = vector.load %arg12[%c1_58, %c32_59] : memref<8x64xf32, #tpu.memory_space<vmem>>, vector<1x32xf32>
    tpu.vector_store %arg12[%c1_58, %c32_59], %272 {strides = array<i32>} : memref<8x64xf32, #tpu.memory_space<vmem>>, vector<1x32xf32>,
    %274 = arith.truncf %269 : vector<1x64xf32> to vector<1x64xbf16>
    %cst_60 = arith.constant dense<0.000000e+00> : vector<1x256xf32>
    %275 = tpu.matmul %274, %21, %cst_60 {dimension_numbers = #tpu.dot_dimension_numbers<[1], [0], [0], [1], [0, 0, 1, 1], [], []>} : vector<1x64xbf16>, vector<64x256xbf16>, vector<1x256xf32> -> vector<1x256xf32>
    %276 = vector.extract_strided_slice %26 {offsets = [7, 0], sizes = [1, 256], strides = [1, 1]} : vector<8x256xf32> to vector<1x256xf32>
    %277 = vector.extract_strided_slice %26 {offsets = [0, 0], sizes = [1, 256], strides = [1, 1]} : vector<8x256xf32> to vector<1x256xf32>
    %278 = arith.select %18, %276, %277 : vector<1x256xi1>, vector<1x256xf32>
    %279 = arith.addf %278, %275 : vector<1x256xf32>
    %280 = vector.extract_strided_slice %279 {offsets = [0, 0], sizes = [1, 64], strides = [1, 1]} : vector<1x256xf32> to vector<1x64xf32>
    %281 = arith.negf %280 : vector<1x64xf32>
    %282 = math.exp %281 : vector<1x64xf32>
    %cst_61 = arith.constant 1.000000e+00 : f32
    %283 = vector.broadcast %cst_61 : f32 to vector<1x64xf32>
    %284 = arith.addf %283, %282 : vector<1x64xf32>
    %285 = arith.divf %283, %284 : vector<1x64xf32>
    %286 = vector.extract_strided_slice %279 {offsets = [0, 64], sizes = [1, 64], strides = [1, 1]} : vector<1x256xf32> to vector<1x64xf32>
    %287 = arith.negf %286 : vector<1x64xf32>
    %288 = math.exp %287 : vector<1x64xf32>
    %cst_62 = arith.constant 1.000000e+00 : f32
    %289 = vector.broadcast %cst_62 : f32 to vector<1x64xf32>
    %290 = arith.addf %289, %288 : vector<1x64xf32>
    %291 = arith.divf %289, %290 : vector<1x64xf32>
    %292 = vector.extract_strided_slice %279 {offsets = [0, 128], sizes = [1, 64], strides = [1, 1]} : vector<1x256xf32> to vector<1x64xf32>
    %293 = math.tanh %292 : vector<1x64xf32>
    %294 = vector.extract_strided_slice %279 {offsets = [0, 192], sizes = [1, 64], strides = [1, 1]} : vector<1x256xf32> to vector<1x64xf32>
    %295 = arith.negf %294 : vector<1x64xf32>
    %296 = math.exp %295 : vector<1x64xf32>
    %cst_63 = arith.constant 1.000000e+00 : f32
    %297 = vector.broadcast %cst_63 : f32 to vector<1x64xf32>
    %298 = arith.addf %297, %296 : vector<1x64xf32>
    %299 = arith.divf %297, %298 : vector<1x64xf32>
    %300 = arith.mulf %291, %267 : vector<1x64xf32>
    %301 = arith.mulf %285, %293 : vector<1x64xf32>
    %302 = arith.addf %300, %301 : vector<1x64xf32>
    %303 = math.tanh %302 : vector<1x64xf32>
    %304 = arith.mulf %299, %303 : vector<1x64xf32>
    %305 = vector.extract_strided_slice %304 {offsets = [0, 0], sizes = [1, 32], strides = [1, 1]} : vector<1x64xf32> to vector<1x32xf32>
    %c7_64 = arith.constant 7 : index
    %c0_65 = arith.constant 0 : index
    %306 = vector.load %arg12[%c7_64, %c0_65] : memref<8x64xf32, #tpu.memory_space<vmem>>, vector<1x32xf32>
    tpu.vector_store %arg12[%c7_64, %c0_65], %305 {strides = array<i32>} : memref<8x64xf32, #tpu.memory_space<vmem>>, vector<1x32xf32>,
    %307 = vector.extract_strided_slice %304 {offsets = [0, 32], sizes = [1, 32], strides = [1, 1]} : vector<1x64xf32> to vector<1x32xf32>
    %c0_66 = arith.constant 0 : index
    %c32_67 = arith.constant 32 : index
    %308 = vector.load %arg12[%c0_66, %c32_67] : memref<8x64xf32, #tpu.memory_space<vmem>>, vector<1x32xf32>
    tpu.vector_store %arg12[%c0_66, %c32_67], %307 {strides = array<i32>} : memref<8x64xf32, #tpu.memory_space<vmem>>, vector<1x32xf32>,
    %c0_68 = arith.constant 0 : index
    %c0_69 = arith.constant 0 : index
    %309 = vector.load %arg12[%c0_68, %c0_69] : memref<8x64xf32, #tpu.memory_space<vmem>>, vector<8x64xf32>
    %c0_70 = arith.constant 0 : index
    %c0_71 = arith.constant 0 : index
    %310 = vector.load %arg6[%c0_70, %c0_71] : memref<64x256xbf16, #tpu.memory_space<vmem>>, vector<64x256xbf16>
    %c0_72 = arith.constant 0 : index
    %c0_73 = arith.constant 0 : index
    %311 = vector.load %arg7[%c0_72, %c0_73] : memref<64x256xbf16, #tpu.memory_space<vmem>>, vector<64x256xbf16>
    %c0_74 = arith.constant 0 : index
    %c0_75 = arith.constant 0 : index
    %312 = vector.load %arg8[%c0_74, %c0_75] : memref<1x256xf32, #tpu.memory_space<vmem>>, vector<1x256xf32>
    %313 = arith.truncf %309 : vector<8x64xf32> to vector<8x64xbf16>
    %cst_76 = arith.constant dense<0.000000e+00> : vector<8x256xf32>
    %314 = tpu.matmul %313, %310, %cst_76 {dimension_numbers = #tpu.dot_dimension_numbers<[1], [0], [0], [1], [0, 0, 1, 1], [], []>} : vector<8x64xbf16>, vector<64x256xbf16>, vector<8x256xf32> -> vector<8x256xf32>
    %315 = vector.broadcast %312 : vector<1x256xf32> to vector<8x256xf32>
    %316 = arith.addf %314, %315 : vector<8x256xf32>
    %cst_77 = arith.constant 0.000000e+00 : f32
    %317 = vector.broadcast %cst_77 : f32 to vector<1x64xf32>
    %cst_78 = arith.constant 0.000000e+00 : f32
    %318 = vector.broadcast %cst_78 : f32 to vector<1x64xf32>
    %319 = arith.truncf %317 : vector<1x64xf32> to vector<1x64xbf16>
    %cst_79 = arith.constant dense<0.000000e+00> : vector<1x256xf32>
    %320 = tpu.matmul %319, %311, %cst_79 {dimension_numbers = #tpu.dot_dimension_numbers<[1], [0], [0], [1], [0, 0, 1, 1], [], []>} : vector<1x64xbf16>, vector<64x256xbf16>, vector<1x256xf32> -> vector<1x256xf32>
    %321 = vector.extract_strided_slice %316 {offsets = [0, 0], sizes = [1, 256], strides = [1, 1]} : vector<8x256xf32> to vector<1x256xf32>
    %322 = vector.extract_strided_slice %316 {offsets = [7, 0], sizes = [1, 256], strides = [1, 1]} : vector<8x256xf32> to vector<1x256xf32>
    %323 = arith.select %18, %321, %322 : vector<1x256xi1>, vector<1x256xf32>
    %324 = arith.addf %323, %320 : vector<1x256xf32>
    %325 = vector.extract_strided_slice %324 {offsets = [0, 0], sizes = [1, 64], strides = [1, 1]} : vector<1x256xf32> to vector<1x64xf32>
    %326 = arith.negf %325 : vector<1x64xf32>
    %327 = math.exp %326 : vector<1x64xf32>
    %cst_80 = arith.constant 1.000000e+00 : f32
    %328 = vector.broadcast %cst_80 : f32 to vector<1x64xf32>
    %329 = arith.addf %328, %327 : vector<1x64xf32>
    %330 = arith.divf %328, %329 : vector<1x64xf32>
    %331 = vector.extract_strided_slice %324 {offsets = [0, 64], sizes = [1, 64], strides = [1, 1]} : vector<1x256xf32> to vector<1x64xf32>
    %332 = arith.negf %331 : vector<1x64xf32>
    %333 = math.exp %332 : vector<1x64xf32>
    %cst_81 = arith.constant 1.000000e+00 : f32
    %334 = vector.broadcast %cst_81 : f32 to vector<1x64xf32>
    %335 = arith.addf %334, %333 : vector<1x64xf32>
    %336 = arith.divf %334, %335 : vector<1x64xf32>
    %337 = vector.extract_strided_slice %324 {offsets = [0, 128], sizes = [1, 64], strides = [1, 1]} : vector<1x256xf32> to vector<1x64xf32>
    %338 = math.tanh %337 : vector<1x64xf32>
    %339 = vector.extract_strided_slice %324 {offsets = [0, 192], sizes = [1, 64], strides = [1, 1]} : vector<1x256xf32> to vector<1x64xf32>
    %340 = arith.negf %339 : vector<1x64xf32>
    %341 = math.exp %340 : vector<1x64xf32>
    %cst_82 = arith.constant 1.000000e+00 : f32
    %342 = vector.broadcast %cst_82 : f32 to vector<1x64xf32>
    %343 = arith.addf %342, %341 : vector<1x64xf32>
    %344 = arith.divf %342, %343 : vector<1x64xf32>
    %345 = arith.mulf %336, %318 : vector<1x64xf32>
    %346 = arith.mulf %330, %338 : vector<1x64xf32>
    %347 = arith.addf %345, %346 : vector<1x64xf32>
    %348 = math.tanh %347 : vector<1x64xf32>
    %349 = arith.mulf %344, %348 : vector<1x64xf32>
    %350 = vector.extract_strided_slice %349 {offsets = [0, 0], sizes = [1, 32], strides = [1, 1]} : vector<1x64xf32> to vector<1x32xf32>
    %c0_83 = arith.constant 0 : index
    %c0_84 = arith.constant 0 : index
    %351 = vector.load %arg13[%c0_83, %c0_84] : memref<8x64xf32, #tpu.memory_space<vmem>>, vector<1x32xf32>
    tpu.vector_store %arg13[%c0_83, %c0_84], %350 {strides = array<i32>} : memref<8x64xf32, #tpu.memory_space<vmem>>, vector<1x32xf32>,
    %352 = vector.extract_strided_slice %349 {offsets = [0, 32], sizes = [1, 32], strides = [1, 1]} : vector<1x64xf32> to vector<1x32xf32>
    %c7_85 = arith.constant 7 : index
    %c32_86 = arith.constant 32 : index
    %353 = vector.load %arg13[%c7_85, %c32_86] : memref<8x64xf32, #tpu.memory_space<vmem>>, vector<1x32xf32>
    tpu.vector_store %arg13[%c7_85, %c32_86], %352 {strides = array<i32>} : memref<8x64xf32, #tpu.memory_space<vmem>>, vector<1x32xf32>,
    %354 = arith.truncf %349 : vector<1x64xf32> to vector<1x64xbf16>
    %cst_87 = arith.constant dense<0.000000e+00> : vector<1x256xf32>
    %355 = tpu.matmul %354, %311, %cst_87 {dimension_numbers = #tpu.dot_dimension_numbers<[1], [0], [0], [1], [0, 0, 1, 1], [], []>} : vector<1x64xbf16>, vector<64x256xbf16>, vector<1x256xf32> -> vector<1x256xf32>
    %356 = vector.extract_strided_slice %316 {offsets = [1, 0], sizes = [1, 256], strides = [1, 1]} : vector<8x256xf32> to vector<1x256xf32>
    %357 = vector.extract_strided_slice %316 {offsets = [6, 0], sizes = [1, 256], strides = [1, 1]} : vector<8x256xf32> to vector<1x256xf32>
    %358 = arith.select %18, %356, %357 : vector<1x256xi1>, vector<1x256xf32>
    %359 = arith.addf %358, %355 : vector<1x256xf32>
    %360 = vector.extract_strided_slice %359 {offsets = [0, 0], sizes = [1, 64], strides = [1, 1]} : vector<1x256xf32> to vector<1x64xf32>
    %361 = arith.negf %360 : vector<1x64xf32>
    %362 = math.exp %361 : vector<1x64xf32>
    %cst_88 = arith.constant 1.000000e+00 : f32
    %363 = vector.broadcast %cst_88 : f32 to vector<1x64xf32>
    %364 = arith.addf %363, %362 : vector<1x64xf32>
    %365 = arith.divf %363, %364 : vector<1x64xf32>
    %366 = vector.extract_strided_slice %359 {offsets = [0, 64], sizes = [1, 64], strides = [1, 1]} : vector<1x256xf32> to vector<1x64xf32>
    %367 = arith.negf %366 : vector<1x64xf32>
    %368 = math.exp %367 : vector<1x64xf32>
    %cst_89 = arith.constant 1.000000e+00 : f32
    %369 = vector.broadcast %cst_89 : f32 to vector<1x64xf32>
    %370 = arith.addf %369, %368 : vector<1x64xf32>
    %371 = arith.divf %369, %370 : vector<1x64xf32>
    %372 = vector.extract_strided_slice %359 {offsets = [0, 128], sizes = [1, 64], strides = [1, 1]} : vector<1x256xf32> to vector<1x64xf32>
    %373 = math.tanh %372 : vector<1x64xf32>
    %374 = vector.extract_strided_slice %359 {offsets = [0, 192], sizes = [1, 64], strides = [1, 1]} : vector<1x256xf32> to vector<1x64xf32>
    %375 = arith.negf %374 : vector<1x64xf32>
    %376 = math.exp %375 : vector<1x64xf32>
    %cst_90 = arith.constant 1.000000e+00 : f32
    %377 = vector.broadcast %cst_90 : f32 to vector<1x64xf32>
    %378 = arith.addf %377, %376 : vector<1x64xf32>
    %379 = arith.divf %377, %378 : vector<1x64xf32>
    %380 = arith.mulf %371, %347 : vector<1x64xf32>
    %381 = arith.mulf %365, %373 : vector<1x64xf32>
    %382 = arith.addf %380, %381 : vector<1x64xf32>
    %383 = math.tanh %382 : vector<1x64xf32>
    %384 = arith.mulf %379, %383 : vector<1x64xf32>
    %385 = vector.extract_strided_slice %384 {offsets = [0, 0], sizes = [1, 32], strides = [1, 1]} : vector<1x64xf32> to vector<1x32xf32>
    %c1_91 = arith.constant 1 : index
    %c0_92 = arith.constant 0 : index
    %386 = vector.load %arg13[%c1_91, %c0_92] : memref<8x64xf32, #tpu.memory_space<vmem>>, vector<1x32xf32>
    tpu.vector_store %arg13[%c1_91, %c0_92], %385 {strides = array<i32>} : memref<8x64xf32, #tpu.memory_space<vmem>>, vector<1x32xf32>,
    %387 = vector.extract_strided_slice %384 {offsets = [0, 32], sizes = [1, 32], strides = [1, 1]} : vector<1x64xf32> to vector<1x32xf32>
    %c6_93 = arith.constant 6 : index
    %c32_94 = arith.constant 32 : index
    %388 = vector.load %arg13[%c6_93, %c32_94] : memref<8x64xf32, #tpu.memory_space<vmem>>, vector<1x32xf32>
    tpu.vector_store %arg13[%c6_93, %c32_94], %387 {strides = array<i32>} : memref<8x64xf32, #tpu.memory_space<vmem>>, vector<1x32xf32>,
    %389 = arith.truncf %384 : vector<1x64xf32> to vector<1x64xbf16>
    %cst_95 = arith.constant dense<0.000000e+00> : vector<1x256xf32>
    %390 = tpu.matmul %389, %311, %cst_95 {dimension_numbers = #tpu.dot_dimension_numbers<[1], [0], [0], [1], [0, 0, 1, 1], [], []>} : vector<1x64xbf16>, vector<64x256xbf16>, vector<1x256xf32> -> vector<1x256xf32>
    %391 = vector.extract_strided_slice %316 {offsets = [2, 0], sizes = [1, 256], strides = [1, 1]} : vector<8x256xf32> to vector<1x256xf32>
    %392 = vector.extract_strided_slice %316 {offsets = [5, 0], sizes = [1, 256], strides = [1, 1]} : vector<8x256xf32> to vector<1x256xf32>
    %393 = arith.select %18, %391, %392 : vector<1x256xi1>, vector<1x256xf32>
    %394 = arith.addf %393, %390 : vector<1x256xf32>
    %395 = vector.extract_strided_slice %394 {offsets = [0, 0], sizes = [1, 64], strides = [1, 1]} : vector<1x256xf32> to vector<1x64xf32>
    %396 = arith.negf %395 : vector<1x64xf32>
    %397 = math.exp %396 : vector<1x64xf32>
    %cst_96 = arith.constant 1.000000e+00 : f32
    %398 = vector.broadcast %cst_96 : f32 to vector<1x64xf32>
    %399 = arith.addf %398, %397 : vector<1x64xf32>
    %400 = arith.divf %398, %399 : vector<1x64xf32>
    %401 = vector.extract_strided_slice %394 {offsets = [0, 64], sizes = [1, 64], strides = [1, 1]} : vector<1x256xf32> to vector<1x64xf32>
    %402 = arith.negf %401 : vector<1x64xf32>
    %403 = math.exp %402 : vector<1x64xf32>
    %cst_97 = arith.constant 1.000000e+00 : f32
    %404 = vector.broadcast %cst_97 : f32 to vector<1x64xf32>
    %405 = arith.addf %404, %403 : vector<1x64xf32>
    %406 = arith.divf %404, %405 : vector<1x64xf32>
    %407 = vector.extract_strided_slice %394 {offsets = [0, 128], sizes = [1, 64], strides = [1, 1]} : vector<1x256xf32> to vector<1x64xf32>
    %408 = math.tanh %407 : vector<1x64xf32>
    %409 = vector.extract_strided_slice %394 {offsets = [0, 192], sizes = [1, 64], strides = [1, 1]} : vector<1x256xf32> to vector<1x64xf32>
    %410 = arith.negf %409 : vector<1x64xf32>
    %411 = math.exp %410 : vector<1x64xf32>
    %cst_98 = arith.constant 1.000000e+00 : f32
    %412 = vector.broadcast %cst_98 : f32 to vector<1x64xf32>
    %413 = arith.addf %412, %411 : vector<1x64xf32>
    %414 = arith.divf %412, %413 : vector<1x64xf32>
    %415 = arith.mulf %406, %382 : vector<1x64xf32>
    %416 = arith.mulf %400, %408 : vector<1x64xf32>
    %417 = arith.addf %415, %416 : vector<1x64xf32>
    %418 = math.tanh %417 : vector<1x64xf32>
    %419 = arith.mulf %414, %418 : vector<1x64xf32>
    %420 = vector.extract_strided_slice %419 {offsets = [0, 0], sizes = [1, 32], strides = [1, 1]} : vector<1x64xf32> to vector<1x32xf32>
    %c2_99 = arith.constant 2 : index
    %c0_100 = arith.constant 0 : index
    %421 = vector.load %arg13[%c2_99, %c0_100] : memref<8x64xf32, #tpu.memory_space<vmem>>, vector<1x32xf32>
    tpu.vector_store %arg13[%c2_99, %c0_100], %420 {strides = array<i32>} : memref<8x64xf32, #tpu.memory_space<vmem>>, vector<1x32xf32>,
    %422 = vector.extract_strided_slice %419 {offsets = [0, 32], sizes = [1, 32], strides = [1, 1]} : vector<1x64xf32> to vector<1x32xf32>
    %c5_101 = arith.constant 5 : index
    %c32_102 = arith.constant 32 : index
    %423 = vector.load %arg13[%c5_101, %c32_102] : memref<8x64xf32, #tpu.memory_space<vmem>>, vector<1x32xf32>
    tpu.vector_store %arg13[%c5_101, %c32_102], %422 {strides = array<i32>} : memref<8x64xf32, #tpu.memory_space<vmem>>, vector<1x32xf32>,
    %424 = arith.truncf %419 : vector<1x64xf32> to vector<1x64xbf16>
    %cst_103 = arith.constant dense<0.000000e+00> : vector<1x256xf32>
    %425 = tpu.matmul %424, %311, %cst_103 {dimension_numbers = #tpu.dot_dimension_numbers<[1], [0], [0], [1], [0, 0, 1, 1], [], []>} : vector<1x64xbf16>, vector<64x256xbf16>, vector<1x256xf32> -> vector<1x256xf32>
    %426 = vector.extract_strided_slice %316 {offsets = [3, 0], sizes = [1, 256], strides = [1, 1]} : vector<8x256xf32> to vector<1x256xf32>
    %427 = vector.extract_strided_slice %316 {offsets = [4, 0], sizes = [1, 256], strides = [1, 1]} : vector<8x256xf32> to vector<1x256xf32>
    %428 = arith.select %18, %426, %427 : vector<1x256xi1>, vector<1x256xf32>
    %429 = arith.addf %428, %425 : vector<1x256xf32>
    %430 = vector.extract_strided_slice %429 {offsets = [0, 0], sizes = [1, 64], strides = [1, 1]} : vector<1x256xf32> to vector<1x64xf32>
    %431 = arith.negf %430 : vector<1x64xf32>
    %432 = math.exp %431 : vector<1x64xf32>
    %cst_104 = arith.constant 1.000000e+00 : f32
    %433 = vector.broadcast %cst_104 : f32 to vector<1x64xf32>
    %434 = arith.addf %433, %432 : vector<1x64xf32>
    %435 = arith.divf %433, %434 : vector<1x64xf32>
    %436 = vector.extract_strided_slice %429 {offsets = [0, 64], sizes = [1, 64], strides = [1, 1]} : vector<1x256xf32> to vector<1x64xf32>
    %437 = arith.negf %436 : vector<1x64xf32>
    %438 = math.exp %437 : vector<1x64xf32>
    %cst_105 = arith.constant 1.000000e+00 : f32
    %439 = vector.broadcast %cst_105 : f32 to vector<1x64xf32>
    %440 = arith.addf %439, %438 : vector<1x64xf32>
    %441 = arith.divf %439, %440 : vector<1x64xf32>
    %442 = vector.extract_strided_slice %429 {offsets = [0, 128], sizes = [1, 64], strides = [1, 1]} : vector<1x256xf32> to vector<1x64xf32>
    %443 = math.tanh %442 : vector<1x64xf32>
    %444 = vector.extract_strided_slice %429 {offsets = [0, 192], sizes = [1, 64], strides = [1, 1]} : vector<1x256xf32> to vector<1x64xf32>
    %445 = arith.negf %444 : vector<1x64xf32>
    %446 = math.exp %445 : vector<1x64xf32>
    %cst_106 = arith.constant 1.000000e+00 : f32
    %447 = vector.broadcast %cst_106 : f32 to vector<1x64xf32>
    %448 = arith.addf %447, %446 : vector<1x64xf32>
    %449 = arith.divf %447, %448 : vector<1x64xf32>
    %450 = arith.mulf %441, %417 : vector<1x64xf32>
    %451 = arith.mulf %435, %443 : vector<1x64xf32>
    %452 = arith.addf %450, %451 : vector<1x64xf32>
    %453 = math.tanh %452 : vector<1x64xf32>
    %454 = arith.mulf %449, %453 : vector<1x64xf32>
    %455 = vector.extract_strided_slice %454 {offsets = [0, 0], sizes = [1, 32], strides = [1, 1]} : vector<1x64xf32> to vector<1x32xf32>
    %c3_107 = arith.constant 3 : index
    %c0_108 = arith.constant 0 : index
    %456 = vector.load %arg13[%c3_107, %c0_108] : memref<8x64xf32, #tpu.memory_space<vmem>>, vector<1x32xf32>
    tpu.vector_store %arg13[%c3_107, %c0_108], %455 {strides = array<i32>} : memref<8x64xf32, #tpu.memory_space<vmem>>, vector<1x32xf32>,
    %457 = vector.extract_strided_slice %454 {offsets = [0, 32], sizes = [1, 32], strides = [1, 1]} : vector<1x64xf32> to vector<1x32xf32>
    %c4_109 = arith.constant 4 : index
    %c32_110 = arith.constant 32 : index
    %458 = vector.load %arg13[%c4_109, %c32_110] : memref<8x64xf32, #tpu.memory_space<vmem>>, vector<1x32xf32>
    tpu.vector_store %arg13[%c4_109, %c32_110], %457 {strides = array<i32>} : memref<8x64xf32, #tpu.memory_space<vmem>>, vector<1x32xf32>,
    %459 = arith.truncf %454 : vector<1x64xf32> to vector<1x64xbf16>
    %cst_111 = arith.constant dense<0.000000e+00> : vector<1x256xf32>
    %460 = tpu.matmul %459, %311, %cst_111 {dimension_numbers = #tpu.dot_dimension_numbers<[1], [0], [0], [1], [0, 0, 1, 1], [], []>} : vector<1x64xbf16>, vector<64x256xbf16>, vector<1x256xf32> -> vector<1x256xf32>
    %461 = vector.extract_strided_slice %316 {offsets = [4, 0], sizes = [1, 256], strides = [1, 1]} : vector<8x256xf32> to vector<1x256xf32>
    %462 = vector.extract_strided_slice %316 {offsets = [3, 0], sizes = [1, 256], strides = [1, 1]} : vector<8x256xf32> to vector<1x256xf32>
    %463 = arith.select %18, %461, %462 : vector<1x256xi1>, vector<1x256xf32>
    %464 = arith.addf %463, %460 : vector<1x256xf32>
    %465 = vector.extract_strided_slice %464 {offsets = [0, 0], sizes = [1, 64], strides = [1, 1]} : vector<1x256xf32> to vector<1x64xf32>
    %466 = arith.negf %465 : vector<1x64xf32>
    %467 = math.exp %466 : vector<1x64xf32>
    %cst_112 = arith.constant 1.000000e+00 : f32
    %468 = vector.broadcast %cst_112 : f32 to vector<1x64xf32>
    %469 = arith.addf %468, %467 : vector<1x64xf32>
    %470 = arith.divf %468, %469 : vector<1x64xf32>
    %471 = vector.extract_strided_slice %464 {offsets = [0, 64], sizes = [1, 64], strides = [1, 1]} : vector<1x256xf32> to vector<1x64xf32>
    %472 = arith.negf %471 : vector<1x64xf32>
    %473 = math.exp %472 : vector<1x64xf32>
    %cst_113 = arith.constant 1.000000e+00 : f32
    %474 = vector.broadcast %cst_113 : f32 to vector<1x64xf32>
    %475 = arith.addf %474, %473 : vector<1x64xf32>
    %476 = arith.divf %474, %475 : vector<1x64xf32>
    %477 = vector.extract_strided_slice %464 {offsets = [0, 128], sizes = [1, 64], strides = [1, 1]} : vector<1x256xf32> to vector<1x64xf32>
    %478 = math.tanh %477 : vector<1x64xf32>
    %479 = vector.extract_strided_slice %464 {offsets = [0, 192], sizes = [1, 64], strides = [1, 1]} : vector<1x256xf32> to vector<1x64xf32>
    %480 = arith.negf %479 : vector<1x64xf32>
    %481 = math.exp %480 : vector<1x64xf32>
    %cst_114 = arith.constant 1.000000e+00 : f32
    %482 = vector.broadcast %cst_114 : f32 to vector<1x64xf32>
    %483 = arith.addf %482, %481 : vector<1x64xf32>
    %484 = arith.divf %482, %483 : vector<1x64xf32>
    %485 = arith.mulf %476, %452 : vector<1x64xf32>
    %486 = arith.mulf %470, %478 : vector<1x64xf32>
    %487 = arith.addf %485, %486 : vector<1x64xf32>
    %488 = math.tanh %487 : vector<1x64xf32>
    %489 = arith.mulf %484, %488 : vector<1x64xf32>
    %490 = vector.extract_strided_slice %489 {offsets = [0, 0], sizes = [1, 32], strides = [1, 1]} : vector<1x64xf32> to vector<1x32xf32>
    %c4_115 = arith.constant 4 : index
    %c0_116 = arith.constant 0 : index
    %491 = vector.load %arg13[%c4_115, %c0_116] : memref<8x64xf32, #tpu.memory_space<vmem>>, vector<1x32xf32>
    tpu.vector_store %arg13[%c4_115, %c0_116], %490 {strides = array<i32>} : memref<8x64xf32, #tpu.memory_space<vmem>>, vector<1x32xf32>,
    %492 = vector.extract_strided_slice %489 {offsets = [0, 32], sizes = [1, 32], strides = [1, 1]} : vector<1x64xf32> to vector<1x32xf32>
    %c3_117 = arith.constant 3 : index
    %c32_118 = arith.constant 32 : index
    %493 = vector.load %arg13[%c3_117, %c32_118] : memref<8x64xf32, #tpu.memory_space<vmem>>, vector<1x32xf32>
    tpu.vector_store %arg13[%c3_117, %c32_118], %492 {strides = array<i32>} : memref<8x64xf32, #tpu.memory_space<vmem>>, vector<1x32xf32>,
    %494 = arith.truncf %489 : vector<1x64xf32> to vector<1x64xbf16>
    %cst_119 = arith.constant dense<0.000000e+00> : vector<1x256xf32>
    %495 = tpu.matmul %494, %311, %cst_119 {dimension_numbers = #tpu.dot_dimension_numbers<[1], [0], [0], [1], [0, 0, 1, 1], [], []>} : vector<1x64xbf16>, vector<64x256xbf16>, vector<1x256xf32> -> vector<1x256xf32>
    %496 = vector.extract_strided_slice %316 {offsets = [5, 0], sizes = [1, 256], strides = [1, 1]} : vector<8x256xf32> to vector<1x256xf32>
    %497 = vector.extract_strided_slice %316 {offsets = [2, 0], sizes = [1, 256], strides = [1, 1]} : vector<8x256xf32> to vector<1x256xf32>
    %498 = arith.select %18, %496, %497 : vector<1x256xi1>, vector<1x256xf32>
    %499 = arith.addf %498, %495 : vector<1x256xf32>
    %500 = vector.extract_strided_slice %499 {offsets = [0, 0], sizes = [1, 64], strides = [1, 1]} : vector<1x256xf32> to vector<1x64xf32>
    %501 = arith.negf %500 : vector<1x64xf32>
    %502 = math.exp %501 : vector<1x64xf32>
    %cst_120 = arith.constant 1.000000e+00 : f32
    %503 = vector.broadcast %cst_120 : f32 to vector<1x64xf32>
    %504 = arith.addf %503, %502 : vector<1x64xf32>
    %505 = arith.divf %503, %504 : vector<1x64xf32>
    %506 = vector.extract_strided_slice %499 {offsets = [0, 64], sizes = [1, 64], strides = [1, 1]} : vector<1x256xf32> to vector<1x64xf32>
    %507 = arith.negf %506 : vector<1x64xf32>
    %508 = math.exp %507 : vector<1x64xf32>
    %cst_121 = arith.constant 1.000000e+00 : f32
    %509 = vector.broadcast %cst_121 : f32 to vector<1x64xf32>
    %510 = arith.addf %509, %508 : vector<1x64xf32>
    %511 = arith.divf %509, %510 : vector<1x64xf32>
    %512 = vector.extract_strided_slice %499 {offsets = [0, 128], sizes = [1, 64], strides = [1, 1]} : vector<1x256xf32> to vector<1x64xf32>
    %513 = math.tanh %512 : vector<1x64xf32>
    %514 = vector.extract_strided_slice %499 {offsets = [0, 192], sizes = [1, 64], strides = [1, 1]} : vector<1x256xf32> to vector<1x64xf32>
    %515 = arith.negf %514 : vector<1x64xf32>
    %516 = math.exp %515 : vector<1x64xf32>
    %cst_122 = arith.constant 1.000000e+00 : f32
    %517 = vector.broadcast %cst_122 : f32 to vector<1x64xf32>
    %518 = arith.addf %517, %516 : vector<1x64xf32>
    %519 = arith.divf %517, %518 : vector<1x64xf32>
    %520 = arith.mulf %511, %487 : vector<1x64xf32>
    %521 = arith.mulf %505, %513 : vector<1x64xf32>
    %522 = arith.addf %520, %521 : vector<1x64xf32>
    %523 = math.tanh %522 : vector<1x64xf32>
    %524 = arith.mulf %519, %523 : vector<1x64xf32>
    %525 = vector.extract_strided_slice %524 {offsets = [0, 0], sizes = [1, 32], strides = [1, 1]} : vector<1x64xf32> to vector<1x32xf32>
    %c5_123 = arith.constant 5 : index
    %c0_124 = arith.constant 0 : index
    %526 = vector.load %arg13[%c5_123, %c0_124] : memref<8x64xf32, #tpu.memory_space<vmem>>, vector<1x32xf32>
    tpu.vector_store %arg13[%c5_123, %c0_124], %525 {strides = array<i32>} : memref<8x64xf32, #tpu.memory_space<vmem>>, vector<1x32xf32>,
    %527 = vector.extract_strided_slice %524 {offsets = [0, 32], sizes = [1, 32], strides = [1, 1]} : vector<1x64xf32> to vector<1x32xf32>
    %c2_125 = arith.constant 2 : index
    %c32_126 = arith.constant 32 : index
    %528 = vector.load %arg13[%c2_125, %c32_126] : memref<8x64xf32, #tpu.memory_space<vmem>>, vector<1x32xf32>
    tpu.vector_store %arg13[%c2_125, %c32_126], %527 {strides = array<i32>} : memref<8x64xf32, #tpu.memory_space<vmem>>, vector<1x32xf32>,
    %529 = arith.truncf %524 : vector<1x64xf32> to vector<1x64xbf16>
    %cst_127 = arith.constant dense<0.000000e+00> : vector<1x256xf32>
    %530 = tpu.matmul %529, %311, %cst_127 {dimension_numbers = #tpu.dot_dimension_numbers<[1], [0], [0], [1], [0, 0, 1, 1], [], []>} : vector<1x64xbf16>, vector<64x256xbf16>, vector<1x256xf32> -> vector<1x256xf32>
    %531 = vector.extract_strided_slice %316 {offsets = [6, 0], sizes = [1, 256], strides = [1, 1]} : vector<8x256xf32> to vector<1x256xf32>
    %532 = vector.extract_strided_slice %316 {offsets = [1, 0], sizes = [1, 256], strides = [1, 1]} : vector<8x256xf32> to vector<1x256xf32>
    %533 = arith.select %18, %531, %532 : vector<1x256xi1>, vector<1x256xf32>
    %534 = arith.addf %533, %530 : vector<1x256xf32>
    %535 = vector.extract_strided_slice %534 {offsets = [0, 0], sizes = [1, 64], strides = [1, 1]} : vector<1x256xf32> to vector<1x64xf32>
    %536 = arith.negf %535 : vector<1x64xf32>
    %537 = math.exp %536 : vector<1x64xf32>
    %cst_128 = arith.constant 1.000000e+00 : f32
    %538 = vector.broadcast %cst_128 : f32 to vector<1x64xf32>
    %539 = arith.addf %538, %537 : vector<1x64xf32>
    %540 = arith.divf %538, %539 : vector<1x64xf32>
    %541 = vector.extract_strided_slice %534 {offsets = [0, 64], sizes = [1, 64], strides = [1, 1]} : vector<1x256xf32> to vector<1x64xf32>
    %542 = arith.negf %541 : vector<1x64xf32>
    %543 = math.exp %542 : vector<1x64xf32>
    %cst_129 = arith.constant 1.000000e+00 : f32
    %544 = vector.broadcast %cst_129 : f32 to vector<1x64xf32>
    %545 = arith.addf %544, %543 : vector<1x64xf32>
    %546 = arith.divf %544, %545 : vector<1x64xf32>
    %547 = vector.extract_strided_slice %534 {offsets = [0, 128], sizes = [1, 64], strides = [1, 1]} : vector<1x256xf32> to vector<1x64xf32>
    %548 = math.tanh %547 : vector<1x64xf32>
    %549 = vector.extract_strided_slice %534 {offsets = [0, 192], sizes = [1, 64], strides = [1, 1]} : vector<1x256xf32> to vector<1x64xf32>
    %550 = arith.negf %549 : vector<1x64xf32>
    %551 = math.exp %550 : vector<1x64xf32>
    %cst_130 = arith.constant 1.000000e+00 : f32
    %552 = vector.broadcast %cst_130 : f32 to vector<1x64xf32>
    %553 = arith.addf %552, %551 : vector<1x64xf32>
    %554 = arith.divf %552, %553 : vector<1x64xf32>
    %555 = arith.mulf %546, %522 : vector<1x64xf32>
    %556 = arith.mulf %540, %548 : vector<1x64xf32>
    %557 = arith.addf %555, %556 : vector<1x64xf32>
    %558 = math.tanh %557 : vector<1x64xf32>
    %559 = arith.mulf %554, %558 : vector<1x64xf32>
    %560 = vector.extract_strided_slice %559 {offsets = [0, 0], sizes = [1, 32], strides = [1, 1]} : vector<1x64xf32> to vector<1x32xf32>
    %c6_131 = arith.constant 6 : index
    %c0_132 = arith.constant 0 : index
    %561 = vector.load %arg13[%c6_131, %c0_132] : memref<8x64xf32, #tpu.memory_space<vmem>>, vector<1x32xf32>
    tpu.vector_store %arg13[%c6_131, %c0_132], %560 {strides = array<i32>} : memref<8x64xf32, #tpu.memory_space<vmem>>, vector<1x32xf32>,
    %562 = vector.extract_strided_slice %559 {offsets = [0, 32], sizes = [1, 32], strides = [1, 1]} : vector<1x64xf32> to vector<1x32xf32>
    %c1_133 = arith.constant 1 : index
    %c32_134 = arith.constant 32 : index
    %563 = vector.load %arg13[%c1_133, %c32_134] : memref<8x64xf32, #tpu.memory_space<vmem>>, vector<1x32xf32>
    tpu.vector_store %arg13[%c1_133, %c32_134], %562 {strides = array<i32>} : memref<8x64xf32, #tpu.memory_space<vmem>>, vector<1x32xf32>,
    %564 = arith.truncf %559 : vector<1x64xf32> to vector<1x64xbf16>
    %cst_135 = arith.constant dense<0.000000e+00> : vector<1x256xf32>
    %565 = tpu.matmul %564, %311, %cst_135 {dimension_numbers = #tpu.dot_dimension_numbers<[1], [0], [0], [1], [0, 0, 1, 1], [], []>} : vector<1x64xbf16>, vector<64x256xbf16>, vector<1x256xf32> -> vector<1x256xf32>
    %566 = vector.extract_strided_slice %316 {offsets = [7, 0], sizes = [1, 256], strides = [1, 1]} : vector<8x256xf32> to vector<1x256xf32>
    %567 = vector.extract_strided_slice %316 {offsets = [0, 0], sizes = [1, 256], strides = [1, 1]} : vector<8x256xf32> to vector<1x256xf32>
    %568 = arith.select %18, %566, %567 : vector<1x256xi1>, vector<1x256xf32>
    %569 = arith.addf %568, %565 : vector<1x256xf32>
    %570 = vector.extract_strided_slice %569 {offsets = [0, 0], sizes = [1, 64], strides = [1, 1]} : vector<1x256xf32> to vector<1x64xf32>
    %571 = arith.negf %570 : vector<1x64xf32>
    %572 = math.exp %571 : vector<1x64xf32>
    %cst_136 = arith.constant 1.000000e+00 : f32
    %573 = vector.broadcast %cst_136 : f32 to vector<1x64xf32>
    %574 = arith.addf %573, %572 : vector<1x64xf32>
    %575 = arith.divf %573, %574 : vector<1x64xf32>
    %576 = vector.extract_strided_slice %569 {offsets = [0, 64], sizes = [1, 64], strides = [1, 1]} : vector<1x256xf32> to vector<1x64xf32>
    %577 = arith.negf %576 : vector<1x64xf32>
    %578 = math.exp %577 : vector<1x64xf32>
    %cst_137 = arith.constant 1.000000e+00 : f32
    %579 = vector.broadcast %cst_137 : f32 to vector<1x64xf32>
    %580 = arith.addf %579, %578 : vector<1x64xf32>
    %581 = arith.divf %579, %580 : vector<1x64xf32>
    %582 = vector.extract_strided_slice %569 {offsets = [0, 128], sizes = [1, 64], strides = [1, 1]} : vector<1x256xf32> to vector<1x64xf32>
    %583 = math.tanh %582 : vector<1x64xf32>
    %584 = vector.extract_strided_slice %569 {offsets = [0, 192], sizes = [1, 64], strides = [1, 1]} : vector<1x256xf32> to vector<1x64xf32>
    %585 = arith.negf %584 : vector<1x64xf32>
    %586 = math.exp %585 : vector<1x64xf32>
    %cst_138 = arith.constant 1.000000e+00 : f32
    %587 = vector.broadcast %cst_138 : f32 to vector<1x64xf32>
    %588 = arith.addf %587, %586 : vector<1x64xf32>
    %589 = arith.divf %587, %588 : vector<1x64xf32>
    %590 = arith.mulf %581, %557 : vector<1x64xf32>
    %591 = arith.mulf %575, %583 : vector<1x64xf32>
    %592 = arith.addf %590, %591 : vector<1x64xf32>
    %593 = math.tanh %592 : vector<1x64xf32>
    %594 = arith.mulf %589, %593 : vector<1x64xf32>
    %595 = vector.extract_strided_slice %594 {offsets = [0, 0], sizes = [1, 32], strides = [1, 1]} : vector<1x64xf32> to vector<1x32xf32>
    %c7_139 = arith.constant 7 : index
    %c0_140 = arith.constant 0 : index
    %596 = vector.load %arg13[%c7_139, %c0_140] : memref<8x64xf32, #tpu.memory_space<vmem>>, vector<1x32xf32>
    tpu.vector_store %arg13[%c7_139, %c0_140], %595 {strides = array<i32>} : memref<8x64xf32, #tpu.memory_space<vmem>>, vector<1x32xf32>,
    %597 = vector.extract_strided_slice %594 {offsets = [0, 32], sizes = [1, 32], strides = [1, 1]} : vector<1x64xf32> to vector<1x32xf32>
    %c0_141 = arith.constant 0 : index
    %c32_142 = arith.constant 32 : index
    %598 = vector.load %arg13[%c0_141, %c32_142] : memref<8x64xf32, #tpu.memory_space<vmem>>, vector<1x32xf32>
    tpu.vector_store %arg13[%c0_141, %c32_142], %597 {strides = array<i32>} : memref<8x64xf32, #tpu.memory_space<vmem>>, vector<1x32xf32>,
    %c0_143 = arith.constant 0 : index
    %c0_144 = arith.constant 0 : index
    %599 = memref.load %arg1[%c0_143, %c0_144] : memref<4x2xi32, #tpu.memory_space<smem>>
    %c0_145 = arith.constant 0 : index
    %c1_146 = arith.constant 1 : index
    %600 = memref.load %arg1[%c0_145, %c1_146] : memref<4x2xi32, #tpu.memory_space<smem>>
    %601 = arith.index_cast %599 : i32 to index
    %c0_147 = arith.constant 0 : index
    %602 = vector.load %arg13[%601, %c0_147] : memref<8x64xf32, #tpu.memory_space<vmem>>, vector<1x64xf32>
    %603 = arith.index_cast %600 : i32 to index
    %c0_148 = arith.constant 0 : index
    %604 = vector.load %arg13[%603, %c0_148] : memref<8x64xf32, #tpu.memory_space<vmem>>, vector<1x64xf32>
    %c0_149 = arith.constant 0 : index
    %c0_150 = arith.constant 0 : index
    %605 = vector.load %arg14[%c0_149, %c0_150] : memref<4x256xf32, #tpu.memory_space<vmem>>, vector<1x64xf32>
    tpu.vector_store %arg14[%c0_149, %c0_150], %602 {strides = array<i32>} : memref<4x256xf32, #tpu.memory_space<vmem>>, vector<1x64xf32>,
    %c0_151 = arith.constant 0 : index
    %c64 = arith.constant 64 : index
    %606 = vector.load %arg14[%c0_151, %c64] : memref<4x256xf32, #tpu.memory_space<vmem>>, vector<1x64xf32>
    tpu.vector_store %arg14[%c0_151, %c64], %604 {strides = array<i32>} : memref<4x256xf32, #tpu.memory_space<vmem>>, vector<1x64xf32>,
    %607 = arith.addf %602, %604 : vector<1x64xf32>
    %c0_152 = arith.constant 0 : index
    %c128 = arith.constant 128 : index
    %608 = vector.load %arg14[%c0_152, %c128] : memref<4x256xf32, #tpu.memory_space<vmem>>, vector<1x64xf32>
    tpu.vector_store %arg14[%c0_152, %c128], %607 {strides = array<i32>} : memref<4x256xf32, #tpu.memory_space<vmem>>, vector<1x64xf32>,
    %609 = arith.subf %602, %604 : vector<1x64xf32>
    %c0_153 = arith.constant 0 : index
    %c192 = arith.constant 192 : index
    %610 = vector.load %arg14[%c0_153, %c192] : memref<4x256xf32, #tpu.memory_space<vmem>>, vector<1x64xf32>
    tpu.vector_store %arg14[%c0_153, %c192], %609 {strides = array<i32>} : memref<4x256xf32, #tpu.memory_space<vmem>>, vector<1x64xf32>,
    %c1_154 = arith.constant 1 : index
    %c0_155 = arith.constant 0 : index
    %611 = memref.load %arg1[%c1_154, %c0_155] : memref<4x2xi32, #tpu.memory_space<smem>>
    %c1_156 = arith.constant 1 : index
    %c1_157 = arith.constant 1 : index
    %612 = memref.load %arg1[%c1_156, %c1_157] : memref<4x2xi32, #tpu.memory_space<smem>>
    %613 = arith.index_cast %611 : i32 to index
    %c0_158 = arith.constant 0 : index
    %614 = vector.load %arg13[%613, %c0_158] : memref<8x64xf32, #tpu.memory_space<vmem>>, vector<1x64xf32>
    %615 = arith.index_cast %612 : i32 to index
    %c0_159 = arith.constant 0 : index
    %616 = vector.load %arg13[%615, %c0_159] : memref<8x64xf32, #tpu.memory_space<vmem>>, vector<1x64xf32>
    %c1_160 = arith.constant 1 : index
    %c0_161 = arith.constant 0 : index
    %617 = vector.load %arg14[%c1_160, %c0_161] : memref<4x256xf32, #tpu.memory_space<vmem>>, vector<1x64xf32>
    tpu.vector_store %arg14[%c1_160, %c0_161], %614 {strides = array<i32>} : memref<4x256xf32, #tpu.memory_space<vmem>>, vector<1x64xf32>,
    %c1_162 = arith.constant 1 : index
    %c64_163 = arith.constant 64 : index
    %618 = vector.load %arg14[%c1_162, %c64_163] : memref<4x256xf32, #tpu.memory_space<vmem>>, vector<1x64xf32>
    tpu.vector_store %arg14[%c1_162, %c64_163], %616 {strides = array<i32>} : memref<4x256xf32, #tpu.memory_space<vmem>>, vector<1x64xf32>,
    %619 = arith.addf %614, %616 : vector<1x64xf32>
    %c1_164 = arith.constant 1 : index
    %c128_165 = arith.constant 128 : index
    %620 = vector.load %arg14[%c1_164, %c128_165] : memref<4x256xf32, #tpu.memory_space<vmem>>, vector<1x64xf32>
    tpu.vector_store %arg14[%c1_164, %c128_165], %619 {strides = array<i32>} : memref<4x256xf32, #tpu.memory_space<vmem>>, vector<1x64xf32>,
    %621 = arith.subf %614, %616 : vector<1x64xf32>
    %c1_166 = arith.constant 1 : index
    %c192_167 = arith.constant 192 : index
    %622 = vector.load %arg14[%c1_166, %c192_167] : memref<4x256xf32, #tpu.memory_space<vmem>>, vector<1x64xf32>
    tpu.vector_store %arg14[%c1_166, %c192_167], %621 {strides = array<i32>} : memref<4x256xf32, #tpu.memory_space<vmem>>, vector<1x64xf32>,
    %c2_168 = arith.constant 2 : index
    %c0_169 = arith.constant 0 : index
    %623 = memref.load %arg1[%c2_168, %c0_169] : memref<4x2xi32, #tpu.memory_space<smem>>
    %c2_170 = arith.constant 2 : index
    %c1_171 = arith.constant 1 : index
    %624 = memref.load %arg1[%c2_170, %c1_171] : memref<4x2xi32, #tpu.memory_space<smem>>
    %625 = arith.index_cast %623 : i32 to index
    %c0_172 = arith.constant 0 : index
    %626 = vector.load %arg13[%625, %c0_172] : memref<8x64xf32, #tpu.memory_space<vmem>>, vector<1x64xf32>
    %627 = arith.index_cast %624 : i32 to index
    %c0_173 = arith.constant 0 : index
    %628 = vector.load %arg13[%627, %c0_173] : memref<8x64xf32, #tpu.memory_space<vmem>>, vector<1x64xf32>
    %c2_174 = arith.constant 2 : index
    %c0_175 = arith.constant 0 : index
    %629 = vector.load %arg14[%c2_174, %c0_175] : memref<4x256xf32, #tpu.memory_space<vmem>>, vector<1x64xf32>
    tpu.vector_store %arg14[%c2_174, %c0_175], %626 {strides = array<i32>} : memref<4x256xf32, #tpu.memory_space<vmem>>, vector<1x64xf32>,
    %c2_176 = arith.constant 2 : index
    %c64_177 = arith.constant 64 : index
    %630 = vector.load %arg14[%c2_176, %c64_177] : memref<4x256xf32, #tpu.memory_space<vmem>>, vector<1x64xf32>
    tpu.vector_store %arg14[%c2_176, %c64_177], %628 {strides = array<i32>} : memref<4x256xf32, #tpu.memory_space<vmem>>, vector<1x64xf32>,
    %631 = arith.addf %626, %628 : vector<1x64xf32>
    %c2_178 = arith.constant 2 : index
    %c128_179 = arith.constant 128 : index
    %632 = vector.load %arg14[%c2_178, %c128_179] : memref<4x256xf32, #tpu.memory_space<vmem>>, vector<1x64xf32>
    tpu.vector_store %arg14[%c2_178, %c128_179], %631 {strides = array<i32>} : memref<4x256xf32, #tpu.memory_space<vmem>>, vector<1x64xf32>,
    %633 = arith.subf %626, %628 : vector<1x64xf32>
    %c2_180 = arith.constant 2 : index
    %c192_181 = arith.constant 192 : index
    %634 = vector.load %arg14[%c2_180, %c192_181] : memref<4x256xf32, #tpu.memory_space<vmem>>, vector<1x64xf32>
    tpu.vector_store %arg14[%c2_180, %c192_181], %633 {strides = array<i32>} : memref<4x256xf32, #tpu.memory_space<vmem>>, vector<1x64xf32>,
    %c3_182 = arith.constant 3 : index
    %c0_183 = arith.constant 0 : index
    %635 = memref.load %arg1[%c3_182, %c0_183] : memref<4x2xi32, #tpu.memory_space<smem>>
    %c3_184 = arith.constant 3 : index
    %c1_185 = arith.constant 1 : index
    %636 = memref.load %arg1[%c3_184, %c1_185] : memref<4x2xi32, #tpu.memory_space<smem>>
    %637 = arith.index_cast %635 : i32 to index
    %c0_186 = arith.constant 0 : index
    %638 = vector.load %arg13[%637, %c0_186] : memref<8x64xf32, #tpu.memory_space<vmem>>, vector<1x64xf32>
    %639 = arith.index_cast %636 : i32 to index
    %c0_187 = arith.constant 0 : index
    %640 = vector.load %arg13[%639, %c0_187] : memref<8x64xf32, #tpu.memory_space<vmem>>, vector<1x64xf32>
    %c3_188 = arith.constant 3 : index
    %c0_189 = arith.constant 0 : index
    %641 = vector.load %arg14[%c3_188, %c0_189] : memref<4x256xf32, #tpu.memory_space<vmem>>, vector<1x64xf32>
    tpu.vector_store %arg14[%c3_188, %c0_189], %638 {strides = array<i32>} : memref<4x256xf32, #tpu.memory_space<vmem>>, vector<1x64xf32>,
    %c3_190 = arith.constant 3 : index
    %c64_191 = arith.constant 64 : index
    %642 = vector.load %arg14[%c3_190, %c64_191] : memref<4x256xf32, #tpu.memory_space<vmem>>, vector<1x64xf32>
    tpu.vector_store %arg14[%c3_190, %c64_191], %640 {strides = array<i32>} : memref<4x256xf32, #tpu.memory_space<vmem>>, vector<1x64xf32>,
    %643 = arith.addf %638, %640 : vector<1x64xf32>
    %c3_192 = arith.constant 3 : index
    %c128_193 = arith.constant 128 : index
    %644 = vector.load %arg14[%c3_192, %c128_193] : memref<4x256xf32, #tpu.memory_space<vmem>>, vector<1x64xf32>
    tpu.vector_store %arg14[%c3_192, %c128_193], %643 {strides = array<i32>} : memref<4x256xf32, #tpu.memory_space<vmem>>, vector<1x64xf32>,
    %645 = arith.subf %638, %640 : vector<1x64xf32>
    %c3_194 = arith.constant 3 : index
    %c192_195 = arith.constant 192 : index
    %646 = vector.load %arg14[%c3_194, %c192_195] : memref<4x256xf32, #tpu.memory_space<vmem>>, vector<1x64xf32>
    tpu.vector_store %arg14[%c3_194, %c192_195], %645 {strides = array<i32>} : memref<4x256xf32, #tpu.memory_space<vmem>>, vector<1x64xf32>,
    %c0_196 = arith.constant 0 : index
    %c0_197 = arith.constant 0 : index
    %647 = vector.load %arg14[%c0_196, %c0_197] : memref<4x256xf32, #tpu.memory_space<vmem>>, vector<4x256xf32>
    %c0_198 = arith.constant 0 : index
    %c0_199 = arith.constant 0 : index
    %648 = vector.load %arg9[%c0_198, %c0_199] : memref<256x2xf32, #tpu.memory_space<vmem>>, vector<256x2xf32>
    %cst_200 = arith.constant dense<0.000000e+00> : vector<4x2xf32>
    %649 = tpu.matmul %647, %648, %cst_200 {dimension_numbers = #tpu.dot_dimension_numbers<[1], [0], [0], [1], [0, 0, 1, 1], [], []>} : vector<4x256xf32>, vector<256x2xf32>, vector<4x2xf32> -> vector<4x2xf32>
    %c0_201 = arith.constant 0 : index
    %c0_202 = arith.constant 0 : index
    %650 = vector.load %arg10[%c0_201, %c0_202] : memref<1x2xf32, #tpu.memory_space<vmem>>, vector<1x2xf32>
    %651 = vector.broadcast %650 : vector<1x2xf32> to vector<4x2xf32>
    %652 = arith.addf %649, %651 : vector<4x2xf32>
    %653 = vector.extract_strided_slice %652 {offsets = [0, 1], sizes = [4, 1], strides = [1, 1]} : vector<4x2xf32> to vector<4x1xf32>
    %654 = vector.extract_strided_slice %652 {offsets = [0, 0], sizes = [4, 1], strides = [1, 1]} : vector<4x2xf32> to vector<4x1xf32>
    %655 = arith.subf %653, %654 : vector<4x1xf32>
    %cst_203 = arith.constant 0.000000e+00 : f32
    %656 = vector.broadcast %cst_203 : f32 to vector<4x1xf32>
    %657 = arith.maximumf %655, %656 : vector<4x1xf32>
    %658 = math.absf %655 : vector<4x1xf32>
    %cst_204 = arith.constant 0.000000e+00 : f32
    %659 = vector.broadcast %cst_204 : f32 to vector<4x1xf32>
    %660 = arith.subf %659, %658 : vector<4x1xf32>
    %661 = math.exp %660 : vector<4x1xf32>
    %cst_205 = arith.constant 1.000000e+00 : f32
    %662 = vector.broadcast %cst_205 : f32 to vector<4x1xf32>
    %663 = arith.addf %662, %661 : vector<4x1xf32>
    %664 = math.log %663 : vector<4x1xf32>
    %665 = arith.addf %657, %664 : vector<4x1xf32>
    %cst_206 = arith.constant 0.000000e+00 : f32
    %666 = vector.broadcast %cst_206 : f32 to vector<4x1xf32>
    %667 = arith.subf %666, %665 : vector<4x1xf32>
    %c0_207 = arith.constant 0 : index
    %c0_208 = arith.constant 0 : index
    %668 = vector.load %arg11[%c0_207, %c0_208] : memref<4x2xf32, #tpu.memory_space<vmem>>, vector<4x1xf32>
    tpu.vector_store %arg11[%c0_207, %c0_208], %667 {strides = array<i32>} : memref<4x2xf32, #tpu.memory_space<vmem>>, vector<4x1xf32>,
    %cst_209 = arith.constant 0.000000e+00 : f32
    %669 = vector.broadcast %cst_209 : f32 to vector<4x1xf32>
    %670 = arith.subf %669, %655 : vector<4x1xf32>
    %cst_210 = arith.constant 0.000000e+00 : f32
    %671 = vector.broadcast %cst_210 : f32 to vector<4x1xf32>
    %672 = arith.maximumf %670, %671 : vector<4x1xf32>
    %673 = math.absf %670 : vector<4x1xf32>
    %cst_211 = arith.constant 0.000000e+00 : f32
    %674 = vector.broadcast %cst_211 : f32 to vector<4x1xf32>
    %675 = arith.subf %674, %673 : vector<4x1xf32>
    %676 = math.exp %675 : vector<4x1xf32>
    %cst_212 = arith.constant 1.000000e+00 : f32
    %677 = vector.broadcast %cst_212 : f32 to vector<4x1xf32>
    %678 = arith.addf %677, %676 : vector<4x1xf32>
    %679 = math.log %678 : vector<4x1xf32>
    %680 = arith.addf %672, %679 : vector<4x1xf32>
    %cst_213 = arith.constant 0.000000e+00 : f32
    %681 = vector.broadcast %cst_213 : f32 to vector<4x1xf32>
    %682 = arith.subf %681, %680 : vector<4x1xf32>
    %c0_214 = arith.constant 0 : index
    %c1_215 = arith.constant 1 : index
    %683 = vector.load %arg11[%c0_214, %c1_215] : memref<4x2xf32, #tpu.memory_space<vmem>>, vector<4x1xf32>
    tpu.vector_store %arg11[%c0_214, %c1_215], %682 {strides = array<i32>} : memref<4x2xf32, #tpu.memory_space<vmem>>, vector<4x1xf32>,
    return
  }
  func.func @transform_0(%arg0: i32, %arg1: memref<4x2xi32, #tpu.memory_space<smem>>) -> (i32, i32) {
    %c0_i32 = arith.constant 0 : i32
    %c0_i32_0 = arith.constant 0 : i32
    %c0_i32_1 = arith.constant 0 : i32
    return %c0_i32, %c0_i32_0 : i32, i32
  }
  func.func @transform_1(%arg0: i32, %arg1: memref<4x2xi32, #tpu.memory_space<smem>>) -> (i32, i32) {
    %c0_i32 = arith.constant 0 : i32
    %c0_i32_0 = arith.constant 0 : i32
    %c0_i32_1 = arith.constant 0 : i32
    return %c0_i32, %c0_i32_0 : i32, i32
  }
  func.func @transform_2(%arg0: i32, %arg1: memref<4x2xi32, #tpu.memory_space<smem>>) -> (i32, i32) {
    %c0_i32 = arith.constant 0 : i32
    %c0_i32_0 = arith.constant 0 : i32
    %c0_i32_1 = arith.constant 0 : i32
    return %c0_i32, %c0_i32_0 : i32, i32
  }
  func.func @transform_3(%arg0: i32, %arg1: memref<4x2xi32, #tpu.memory_space<smem>>) -> (i32, i32) {
    %c0_i32 = arith.constant 0 : i32
    %c0_i32_0 = arith.constant 0 : i32
    %c0_i32_1 = arith.constant 0 : i32
    return %c0_i32, %c0_i32_0 : i32, i32
  }
  func.func @transform_4(%arg0: i32, %arg1: memref<4x2xi32, #tpu.memory_space<smem>>) -> (i32, i32) {
    %c0_i32 = arith.constant 0 : i32
    %c0_i32_0 = arith.constant 0 : i32
    %c0_i32_1 = arith.constant 0 : i32
    return %c0_i32, %c0_i32_0 : i32, i32
  }
  func.func @transform_5(%arg0: i32, %arg1: memref<4x2xi32, #tpu.memory_space<smem>>) -> (i32, i32) {
    %c0_i32 = arith.constant 0 : i32
    %c0_i32_0 = arith.constant 0 : i32
    %c0_i32_1 = arith.constant 0 : i32
    return %c0_i32, %c0_i32_0 : i32, i32
  }
  func.func @transform_6(%arg0: i32, %arg1: memref<4x2xi32, #tpu.memory_space<smem>>) -> (i32, i32) {
    %c0_i32 = arith.constant 0 : i32
    %c0_i32_0 = arith.constant 0 : i32
    %c0_i32_1 = arith.constant 0 : i32
    return %c0_i32, %c0_i32_0 : i32, i32
  }
  func.func @transform_7(%arg0: i32, %arg1: memref<4x2xi32, #tpu.memory_space<smem>>) -> (i32, i32) {
    %c0_i32 = arith.constant 0 : i32
    %c0_i32_0 = arith.constant 0 : i32
    %c0_i32_1 = arith.constant 0 : i32
    return %c0_i32, %c0_i32_0 : i32, i32
  }
  func.func @transform_8(%arg0: i32, %arg1: memref<4x2xi32, #tpu.memory_space<smem>>) -> (i32, i32) {
    %c0_i32 = arith.constant 0 : i32
    %c0_i32_0 = arith.constant 0 : i32
    %c0_i32_1 = arith.constant 0 : i32
    return %c0_i32, %c0_i32_0 : i32, i32
  }
  func.func @transform_9(%arg0: i32, %arg1: memref<4x2xi32, #tpu.memory_space<smem>>) -> (i32, i32) {
    %c0_i32 = arith.constant 0 : i32
    %c0_i32_0 = arith.constant 0 : i32
    %c0_i32_1 = arith.constant 0 : i32
    return %c0_i32, %c0_i32_0 : i32, i32
  }
}

</mosaic_0001>

<llo_original>
// kernel: pred_finder_forward.1
$region0: #{pred_finder_forward.1}
  #allocation0 [shape = 'u32[]', space=smem, size = 0x4, offset = 0x4, fixed_abs, tag = 'smem constant byte address 0x4 - core index']
  #allocation1 [shape = 'u32[144,128]{1,0:T(1,128)}', space=vmem, size = 0x12000, scoped, tag = 'internal scratch']
  #allocation2 [shape = 'f32[8,64]{1,0:T(8,128)}', space=vmem, size = 0x1000, scoped, tag = 'scratch operand']
  #allocation3 [shape = 'f32[8,64]{1,0:T(8,128)}', space=vmem, size = 0x1000, scoped, tag = 'scratch operand']
  #allocation4 [shape = 'f32[4,256]{1,0:T(4,128)}', space=vmem, size = 0x1000, scoped, tag = 'scratch operand']
  #allocation5 [shape = 's32[1]{0}', space=sflag, size = 0x4, scoped, tag = 'scoped memory for pred_finder_forward.1']
  #allocation6 [shape = 'u8[2048]{0}', space=smem, size = 0x800, scoped, tag = 'prefetched SMEM operand 0']
  %s0 = inlined_call_operand.vmem [shape: s32[4,2], index: 0, kind: input, shape index: {}]
  %s1 = inlined_call_operand.vmem [shape: f32[8,224], index: 1, kind: input, shape index: {}]
  %s2 = inlined_call_operand.vmem [shape: bf16[224,256], index: 2, kind: input, shape index: {}]
  %s3 = inlined_call_operand.vmem [shape: bf16[64,256], index: 3, kind: input, shape index: {}]
  %s4 = inlined_call_operand.vmem [shape: f32[1,256], index: 4, kind: input, shape index: {}]
  %s5 = inlined_call_operand.vmem [shape: bf16[64,256], index: 5, kind: input, shape index: {}]
  %s6 = inlined_call_operand.vmem [shape: bf16[64,256], index: 6, kind: input, shape index: {}]
  %s7 = inlined_call_operand.vmem [shape: f32[1,256], index: 7, kind: input, shape index: {}]
  %s8 = inlined_call_operand.vmem [shape: f32[256,2], index: 8, kind: input, shape index: {}]
  %s9 = inlined_call_operand.vmem [shape: f32[1,2], index: 9, kind: input, shape index: {}]
  %s10 = inlined_call_operand.vmem [shape: f32[4,2], index: 10, kind: output, shape index: {}]
  %s11 = sld [smem:[#allocation0]]
  $region46: #{pred_finder_forward.1} parent=0
    _
  %s13 = ssub.s32 1, %s11
  %s14 = scalar_select 0, %s13, %s11
  %s15 = sshll.u32 %s0, 4
  %s16 = int_to_ptr.vmem [resolvable:$true] %s15
  %18 = dma.vmem_to_smem %s16, 64, [#allocation6], [#allocation5]
  %19 = dma.done [#allocation5], 64
  %20 = sfence
  // Predicated region
  $region2: #{pred_finder_forward.1} parent=0 // pred_check
    _
  $region3: #{pred_finder_forward.1} parent=0 // pred_check_branch
    %22 = sbr.rel (0) target = $region5
  $region4: #{pred_finder_forward.1} parent=0 // pred_region
    _
  $region5: #{pred_finder_forward.1} parent=0 // pred_fallthru
    _
  // Predicated region
  $region6: #{pred_finder_forward.1} parent=0 // pred_check
    _
  $region7: #{pred_finder_forward.1} parent=0 // pred_check_branch
    %24 = sbr.rel (0) target = $region9
  $region8: #{pred_finder_forward.1} parent=0 // pred_region
    _
  $region9: #{pred_finder_forward.1} parent=0 // pred_fallthru
    _
  // Predicated region
  $region10: #{pred_finder_forward.1} parent=0 // pred_check
    _
  $region11: #{pred_finder_forward.1} parent=0 // pred_check_branch
    %26 = sbr.rel (0) target = $region13
  $region12: #{pred_finder_forward.1} parent=0 // pred_region
    _
  $region13: #{pred_finder_forward.1} parent=0 // pred_fallthru
    _
  // Predicated region
  $region14: #{pred_finder_forward.1} parent=0 // pred_check
    _
  $region15: #{pred_finder_forward.1} parent=0 // pred_check_branch
    %28 = sbr.rel (0) target = $region17
  $region16: #{pred_finder_forward.1} parent=0 // pred_region
    _
  $region17: #{pred_finder_forward.1} parent=0 // pred_fallthru
    _
  // Predicated region
  $region18: #{pred_finder_forward.1} parent=0 // pred_check
    _
  $region19: #{pred_finder_forward.1} parent=0 // pred_check_branch
    %30 = sbr.rel (0) target = $region21
  $region20: #{pred_finder_forward.1} parent=0 // pred_region
    _
  $region21: #{pred_finder_forward.1} parent=0 // pred_fallthru
    _
  // Predicated region
  $region22: #{pred_finder_forward.1} parent=0 // pred_check
    _
  $region23: #{pred_finder_forward.1} parent=0 // pred_check_branch
    %32 = sbr.rel (0) target = $region25
  $region24: #{pred_finder_forward.1} parent=0 // pred_region
    _
  $region25: #{pred_finder_forward.1} parent=0 // pred_fallthru
    _
  // Predicated region
  $region26: #{pred_finder_forward.1} parent=0 // pred_check
    _
  $region27: #{pred_finder_forward.1} parent=0 // pred_check_branch
    %34 = sbr.rel (0) target = $region29
  $region28: #{pred_finder_forward.1} parent=0 // pred_region
    _
  $region29: #{pred_finder_forward.1} parent=0 // pred_fallthru
    _
  // Predicated region
  $region30: #{pred_finder_forward.1} parent=0 // pred_check
    _
  $region31: #{pred_finder_forward.1} parent=0 // pred_check_branch
    %36 = sbr.rel (0) target = $region33
  $region32: #{pred_finder_forward.1} parent=0 // pred_region
    _
  $region33: #{pred_finder_forward.1} parent=0 // pred_fallthru
    _
  // Predicated region
  $region34: #{pred_finder_forward.1} parent=0 // pred_check
    _
  $region35: #{pred_finder_forward.1} parent=0 // pred_check_branch
    %38 = sbr.rel (0) target = $region37
  $region36: #{pred_finder_forward.1} parent=0 // pred_region
    _
  $region37: #{pred_finder_forward.1} parent=0 // pred_fallthru
    _
  %v40 = vlaneseq
  %v41 = vand.u32 %v40, 127
  %v42 = vadd.s32 %v41, 128
  %vm43 = vcmp.lt.s32.totalorder %v41, 0
  %v44 = vsub.s32 0, %v41
  %v45 = vsel %vm43, %v44, %v41
  %v46 = vshrl.u32 %v45, 6
  %v47 = vand.u32 %v45, 63
  %v48 = vsub.s32 0, %v47
  %v49 = vsel %vm43, %v48, %v47
  %vm50 = vcmp.lt.s32.totalorder %v42, 0
  %v51 = vsub.s32 0, %v42
  %v52 = vsel %vm50, %v51, %v42
  %v53 = vshrl.u32 %v52, 6
  %v54 = vand.u32 %v52, 63
  %v55 = vsub.s32 0, %v54
  %v56 = vsel %vm50, %v55, %v54
  %vm57 = vcmp.ne.s32.totalorder %v49, 0
  %vm58 = vcmp.ne.s32.totalorder %v56, 0
  %vm59 = vcmp.lt.s32.totalorder %v49, 0
  %vm60 = vcmp.lt.s32.totalorder %v56, 0
  %vm61 = vmand %vm59, %vm57
  %vm62 = vmand %vm60, %vm58
  %v63 = vadd.s32 %v49, 64
  %v64 = vadd.s32 %v56, 64
  %v65 = vsel %vm61, %v63, %v49
  %v66 = vsel %vm62, %v64, %v56
  %vm67 = vcmp.lt.s32.totalorder %v65, 32
  %vm68 = vcmp.lt.s32.totalorder %v66, 32
  %v69 = vld [vmem:[%s1] sm:$0xff]
  %v70 = vld [vmem:[%s1 + $0x8] sm:$0xff]
  %v71 = vld [vmem:[%s2] sm:$0xff]
  %v72 = vld [vmem:[%s2 + $0x8] sm:$0xff]
  %v73 = vld [vmem:[%s2 + $0x10] sm:$0xff]
  %v74 = vld [vmem:[%s2 + $0x18] sm:$0xff]
  %v75 = vld [vmem:[%s2 + $0x20] sm:$0xff]
  %v76 = vld [vmem:[%s2 + $0x28] sm:$0xff]
  %v77 = vld [vmem:[%s2 + $0x30] sm:$0xff]
  %v78 = vld [vmem:[%s2 + $0x38] sm:$0xff]
  %v79 = vld [vmem:[%s2 + $0x40] sm:$0xff]
  %v80 = vld [vmem:[%s2 + $0x48] sm:$0xff]
  %v81 = vld [vmem:[%s2 + $0x50] sm:$0xff]
  %v82 = vld [vmem:[%s2 + $0x58] sm:$0xff]
  %v83 = vld [vmem:[%s2 + $0x60] sm:$0xff]
  %v84 = vld [vmem:[%s2 + $0x68] sm:$0xff]
  %v85 = vld [vmem:[%s2 + $0x70] sm:$0xff]
  %v86 = vld [vmem:[%s2 + $0x78] sm:$0xff]
  %v87 = vld [vmem:[%s2 + $0x80] sm:$0xff]
  %v88 = vld [vmem:[%s2 + $0x88] sm:$0xff]
  %v89 = vld [vmem:[%s2 + $0x90] sm:$0xff]
  %v90 = vld [vmem:[%s2 + $0x98] sm:$0xff]
  %v91 = vld [vmem:[%s2 + $0xa0] sm:$0xff]
  %v92 = vld [vmem:[%s2 + $0xa8] sm:$0xff]
  %v93 = vld [vmem:[%s2 + $0xb0] sm:$0xff]
  %v94 = vld [vmem:[%s2 + $0xb8] sm:$0xff]
  %v95 = vld [vmem:[%s2 + $0xc0] sm:$0xff]
  %v96 = vld [vmem:[%s2 + $0xc8] sm:$0xff]
  %v97 = vld [vmem:[%s2 + $0xd0] sm:$0xff]
  %v98 = vld [vmem:[%s2 + $0xd8] sm:$0xff]
  %v99 = vld [vmem:[%s3] sm:$0xff]
  %v100 = vld [vmem:[%s3 + $0x8] sm:$0xff]
  %v101 = vld [vmem:[%s3 + $0x10] sm:$0xff]
  %v102 = vld [vmem:[%s3 + $0x18] sm:$0xff]
  %v103 = vld [vmem:[%s3 + $0x20] sm:$0xff]
  %v104 = vld [vmem:[%s3 + $0x28] sm:$0xff]
  %v105 = vld [vmem:[%s3 + $0x30] sm:$0xff]
  %v106 = vld [vmem:[%s3 + $0x38] sm:$0xff]
  %v107 = vld [vmem:[%s4] sm:$0x3]
  %v108 = vpack.c.bf16 %v69, %v69
  %v109 = vpack.c.bf16 %v70, %v70
  %v111 = vlaneseq
  %v112 = vshrl.u32 %v111, 7
  %v113 = vsub.s32 0, %v112
  %v114 = vrot.slane %v107, %v113
  %v115 = vlaneseq
  %v116 = vshrl.u32 %v115, 7
  %v117 = vsub.s32 1, %v116
  %v118 = vrot.slane %v107, %v117
  %v149 = vunpack.c.l.b16 %v71
  %v150 = vunpack.c.h.b16 %v71
  %v151 = vunpack.c.l.b16 %v72
  %v152 = vunpack.c.h.b16 %v72
  %v153 = vunpack.c.l.b16 %v73
  %v154 = vunpack.c.h.b16 %v73
  %v155 = vunpack.c.l.b16 %v74
  %v156 = vunpack.c.h.b16 %v74
  %v157 = vunpack.c.l.b16 %v75
  %v158 = vunpack.c.h.b16 %v75
  %v159 = vunpack.c.l.b16 %v76
  %v160 = vunpack.c.h.b16 %v76
  %v161 = vunpack.c.l.b16 %v77
  %v162 = vunpack.c.h.b16 %v77
  %v163 = vunpack.c.l.b16 %v78
  %v164 = vunpack.c.h.b16 %v78
  %v165 = vunpack.c.l.b16 %v79
  %v166 = vunpack.c.h.b16 %v79
  %v167 = vunpack.c.l.b16 %v80
  %v168 = vunpack.c.h.b16 %v80
  %v169 = vunpack.c.l.b16 %v81
  %v170 = vunpack.c.h.b16 %v81
  %v171 = vunpack.c.l.b16 %v82
  %v172 = vunpack.c.h.b16 %v82
  %v173 = vunpack.c.l.b16 %v83
  %v174 = vunpack.c.h.b16 %v83
  %v175 = vunpack.c.l.b16 %v84
  %v176 = vunpack.c.h.b16 %v84
  %v177 = vunpack.c.l.b16 %v85
  %v178 = vunpack.c.h.b16 %v85
  %v179 = vunpack.c.l.b16 %v86
  %v180 = vunpack.c.h.b16 %v86
  %v181 = vunpack.c.l.b16 %v87
  %v182 = vunpack.c.h.b16 %v87
  %v183 = vunpack.c.l.b16 %v88
  %v184 = vunpack.c.h.b16 %v88
  %v185 = vunpack.c.l.b16 %v89
  %v186 = vunpack.c.h.b16 %v89
  %v187 = vunpack.c.l.b16 %v90
  %v188 = vunpack.c.h.b16 %v90
  %v189 = vunpack.c.l.b16 %v91
  %v190 = vunpack.c.h.b16 %v91
  %v191 = vunpack.c.l.b16 %v92
  %v192 = vunpack.c.h.b16 %v92
  %v193 = vunpack.c.l.b16 %v93
  %v194 = vunpack.c.h.b16 %v93
  %v195 = vunpack.c.l.b16 %v94
  %v196 = vunpack.c.h.b16 %v94
  %v197 = vunpack.c.l.b16 %v95
  %v198 = vunpack.c.h.b16 %v95
  %v199 = vunpack.c.l.b16 %v96
  %v200 = vunpack.c.h.b16 %v96
  %v201 = vunpack.c.l.b16 %v97
  %v202 = vunpack.c.h.b16 %v97
  %v203 = vunpack.c.l.b16 %v98
  %v204 = vunpack.c.h.b16 %v98
  %v205 = vpack.c.b16 %v151, %v149
  %v206 = vpack.c.b16 %v152, %v150
  %v207 = vpack.c.b16 %v155, %v153
  %v208 = vpack.c.b16 %v156, %v154
  %v209 = vpack.c.b16 %v159, %v157
  %v210 = vpack.c.b16 %v160, %v158
  %v211 = vpack.c.b16 %v163, %v161
  %v212 = vpack.c.b16 %v164, %v162
  %v213 = vpack.c.b16 %v167, %v165
  %v214 = vpack.c.b16 %v168, %v166
  %v215 = vpack.c.b16 %v171, %v169
  %v216 = vpack.c.b16 %v172, %v170
  %v217 = vpack.c.b16 %v175, %v173
  %v218 = vpack.c.b16 %v176, %v174
  %v219 = vpack.c.b16 %v179, %v177
  %v220 = vpack.c.b16 %v180, %v178
  %v221 = vpack.c.b16 %v183, %v181
  %v222 = vpack.c.b16 %v184, %v182
  %v223 = vpack.c.b16 %v187, %v185
  %v224 = vpack.c.b16 %v188, %v186
  %v225 = vpack.c.b16 %v191, %v189
  %v226 = vpack.c.b16 %v192, %v190
  %v227 = vpack.c.b16 %v195, %v193
  %v228 = vpack.c.b16 %v196, %v194
  %v229 = vpack.c.b16 %v199, %v197
  %v230 = vpack.c.b16 %v200, %v198
  %v231 = vpack.c.b16 %v203, %v201
  %v232 = vpack.c.b16 %v204, %v202
  %vm261 = vcmask 785408
  %v263 = vsel %vm261, %v109, 0
  %265 = vmatprep.subr.bf16.mxu0 %v206
  %266 = vmatpush1.bf16.msra.mxu0 %v205
  %267 = vmatprep.subr.bf16.mxu0 %v208
  %268 = vmatpush1.bf16.msra.mxu0 %v207
  %269 = vmatprep.subr.bf16.mxu0 %v210
  %270 = vmatpush1.bf16.msra.mxu0 %v209
  %271 = vmatprep.subr.bf16.mxu0 %v212
  %272 = vmatpush1.bf16.msra.mxu0 %v211
  %273 = vmatprep.subr.bf16.mxu0 %v214
  %274 = vmatpush1.bf16.msra.mxu0 %v213
  %275 = vmatprep.subr.bf16.mxu0 %v216
  %276 = vmatpush1.bf16.msra.mxu0 %v215
  %277 = vmatprep.subr.bf16.mxu0 %v218
  %278 = vmatpush1.bf16.msra.mxu0 %v217
  %279 = vmatprep.subr.bf16.mxu0 %v220
  %280 = vmatpush1.bf16.msra.mxu0 %v219
  %281 = vmatprep.subr.bf16.mxu0 %v222
  %282 = vmatpush1.bf16.msra.mxu0 %v221
  %283 = vmatprep.subr.bf16.mxu0 %v224
  %284 = vmatpush1.bf16.msra.mxu0 %v223
  %285 = vmatprep.subr.bf16.mxu0 %v226
  %286 = vmatpush1.bf16.msra.mxu0 %v225
  %287 = vmatprep.subr.bf16.mxu0 %v228
  %288 = vmatpush1.bf16.msra.mxu0 %v227
  %289 = vmatprep.subr.bf16.mxu0 %v230
  %290 = vmatpush1.bf16.msra.mxu0 %v229
  %291 = vmatprep.subr.bf16.mxu0 %v232
  %292 = vmatpush1.bf16.msra.mxu0 %v231
  %293 = vmatprep.subr.bf16.mxu0 0
  %294 = vmatpush1.bf16.msra.mxu0 0
  %295 = vmatprep.subr.bf16.mxu0 0
  %296 = vmatpush1.bf16.msra.mxu0 0
  %297 = vmatprep.mubr.bf16.mxu0 %v263
  %298 = vmatmul.mubr.bf16.gmra.mrb[0].mxu0 %v108
  %v299 = vpop.f32.mrb[0].mxu0
  %v300 = vadd.f32 %v114, %v299
  %v301 = vpop.f32.mrb[0].mxu0
  %v302 = vadd.f32 %v118, %v301
  %v303 = vpop.f32.mrb[0].mxu0
  %v304 = vpop.f32.mrb[0].mxu0
  %305 = vdwg.mxu0
  %v314 = vunpack.c.l.b16 %v99
  %v315 = vunpack.c.h.b16 %v99
  %v316 = vunpack.c.l.b16 %v100
  %v317 = vunpack.c.h.b16 %v100
  %v318 = vunpack.c.l.b16 %v101
  %v319 = vunpack.c.h.b16 %v101
  %v320 = vunpack.c.l.b16 %v102
  %v321 = vunpack.c.h.b16 %v102
  %v322 = vunpack.c.l.b16 %v103
  %v323 = vunpack.c.h.b16 %v103
  %v324 = vunpack.c.l.b16 %v104
  %v325 = vunpack.c.h.b16 %v104
  %v326 = vunpack.c.l.b16 %v105
  %v327 = vunpack.c.h.b16 %v105
  %v328 = vunpack.c.l.b16 %v106
  %v329 = vunpack.c.h.b16 %v106
  %v330 = vpack.c.b16 %v316, %v314
  %v331 = vpack.c.b16 %v317, %v315
  %v332 = vpack.c.b16 %v320, %v318
  %v333 = vpack.c.b16 %v321, %v319
  %v334 = vpack.c.b16 %v324, %v322
  %v335 = vpack.c.b16 %v325, %v323
  %v336 = vpack.c.b16 %v328, %v326
  %v337 = vpack.c.b16 %v329, %v327
  %vm346 = vcmask 523264
  %v348 = vsel %vm346, 0, 0
  %350 = vmatprep.subr.bf16.mxu0 %v331
  %351 = vmatpush1.bf16.msra.mxu0 %v330
  %352 = vmatprep.subr.bf16.mxu0 %v333
  %353 = vmatpush1.bf16.msra.mxu0 %v332
  %354 = vmatprep.subr.bf16.mxu0 %v335
  %355 = vmatpush1.bf16.msra.mxu0 %v334
  %356 = vmatprep.subr.bf16.mxu0 %v337
  %357 = vmatpush1.bf16.msra.mxu0 %v336
  %358 = vmatprep.subr.bf16.mxu0 0
  %359 = vmatpush1.bf16.msra.mxu0 0
  %360 = vmatprep.subr.bf16.mxu0 0
  %361 = vmatpush1.bf16.msra.mxu0 0
  %362 = vmatprep.subr.bf16.mxu0 0
  %363 = vmatpush1.bf16.msra.mxu0 0
  %364 = vmatprep.subr.bf16.mxu0 0
  %365 = vmatpush1.bf16.msra.mxu0 0
  %366 = vmatprep.subr.bf16.mxu0 0
  %367 = vmatpush1.bf16.msra.mxu0 0
  %368 = vmatprep.subr.bf16.mxu0 0
  %369 = vmatpush1.bf16.msra.mxu0 0
  %370 = vmatprep.subr.bf16.mxu0 0
  %371 = vmatpush1.bf16.msra.mxu0 0
  %372 = vmatprep.subr.bf16.mxu0 0
  %373 = vmatpush1.bf16.msra.mxu0 0
  %374 = vmatprep.subr.bf16.mxu0 0
  %375 = vmatpush1.bf16.msra.mxu0 0
  %376 = vmatprep.subr.bf16.mxu0 0
  %377 = vmatpush1.bf16.msra.mxu0 0
  %378 = vmatprep.subr.bf16.mxu0 0
  %379 = vmatpush1.bf16.msra.mxu0 0
  %380 = vmatprep.subr.bf16.mxu0 0
  %381 = vmatpush1.bf16.msra.mxu0 0
  %382 = vmatprep.mubr.bf16.mxu0 0
  %383 = vmatmul.mubr.bf16.gmra.mrb[0].mxu0 %v348
  %v384 = vpop.f32.mrb[0].mxu0
  %v385 = vadd.f32 0.0, %v384
  %v386 = vpop.f32.mrb[0].mxu0
  %v387 = vadd.f32 0.0, %v386
  %v388 = vpop.f32.mrb[0].mxu0
  %v389 = vpop.f32.mrb[0].mxu0
  %390 = vdwg.mxu0
  %v393 = vrot.slane %v300, 7
  %v394 = vrot.slane %v302, 7
  %v397 = vsel %vm67, %v300, %v393
  %v398 = vsel %vm68, %v302, %v394
  %v399 = vadd.f32 %v397, %v385
  %v400 = vadd.f32 %v398, %v387
  %v401 = vxor.u32 %v399, 2147483648
  %v402 = vmul.f32 %v401, 1.442695
  %v403 = vpow.pop %v402
  %v404 = vadd.f32 %v403, 1.0
  %v405 = vrcp.pop %v404
  %v406 = vmul.f32 1.0, %v405
  %v407 = vtanh.pop %v400
  %v408 = vxor.u32 %v400, 2147483648
  %v409 = vmul.f32 %v408, 1.442695
  %v410 = vpow.pop %v409
  %v411 = vadd.f32 %v410, 1.0
  %v412 = vrcp.pop %v411
  %v413 = vmul.f32 1.0, %v412
  %v414 = vmul.f32 %v406, 0.0
  %v415 = vmul.f32 %v406, %v407
  %417 = vrot.lane.b32.xlu0 %v415, 64
  %v418 = vpop.permute.xlu0 %417
  %v420 = vadd.f32 %v414, %v418
  %v421 = vtanh.pop %v420
  %v422 = vmul.f32 %v413, %v421
  %424 = vrot.lane.b32.xlu0 %v422, 64
  %v425 = vpop.permute.xlu0 %424
  %vm427 = vcmask 253952
  %428 = vst.msk [vmem:[#allocation2] sm:$0x1] %vm427, %v425
  %vm429 = vcmask 516352
  %430 = vst.msk [vmem:[#allocation2 + $0x7] sm:$0x1] %vm429, %v425
  %v431 = vpack.c.bf16 %v422, %v422
  %433 = vrot.lane.b32.xlu0 %v431, 64
  %v434 = vpop.permute.xlu0 %433
  %v436 = vsel %vm346, %v434, 0
  %438 = vmatprep.subr.bf16.mxu0 %v331
  %439 = vmatpush1.bf16.msra.mxu0 %v330
  %440 = vmatprep.subr.bf16.mxu0 %v333
  %441 = vmatpush1.bf16.msra.mxu0 %v332
  %442 = vmatprep.subr.bf16.mxu0 %v335
  %443 = vmatpush1.bf16.msra.mxu0 %v334
  %444 = vmatprep.subr.bf16.mxu0 %v337
  %445 = vmatpush1.bf16.msra.mxu0 %v336
  %446 = vmatprep.subr.bf16.mxu0 0
  %447 = vmatpush1.bf16.msra.mxu0 0
  %448 = vmatprep.subr.bf16.mxu0 0
  %449 = vmatpush1.bf16.msra.mxu0 0
  %450 = vmatprep.subr.bf16.mxu0 0
  %451 = vmatpush1.bf16.msra.mxu0 0
  %452 = vmatprep.subr.bf16.mxu0 0
  %453 = vmatpush1.bf16.msra.mxu0 0
  %454 = vmatprep.subr.bf16.mxu0 0
  %455 = vmatpush1.bf16.msra.mxu0 0
  %456 = vmatprep.subr.bf16.mxu0 0
  %457 = vmatpush1.bf16.msra.mxu0 0
  %458 = vmatprep.subr.bf16.mxu0 0
  %459 = vmatpush1.bf16.msra.mxu0 0
  %460 = vmatprep.subr.bf16.mxu0 0
  %461 = vmatpush1.bf16.msra.mxu0 0
  %462 = vmatprep.subr.bf16.mxu0 0
  %463 = vmatpush1.bf16.msra.mxu0 0
  %464 = vmatprep.subr.bf16.mxu0 0
  %465 = vmatpush1.bf16.msra.mxu0 0
  %466 = vmatprep.subr.bf16.mxu0 0
  %467 = vmatpush1.bf16.msra.mxu0 0
  %468 = vmatprep.subr.bf16.mxu0 0
  %469 = vmatpush1.bf16.msra.mxu0 0
  %470 = vmatprep.mubr.bf16.mxu0 0
  %471 = vmatmul.mubr.bf16.gmra.mrb[0].mxu0 %v436
  %v472 = vpop.f32.mrb[0].mxu0
  %v473 = vadd.f32 0.0, %v472
  %v474 = vpop.f32.mrb[0].mxu0
  %v475 = vadd.f32 0.0, %v474
  %v476 = vpop.f32.mrb[0].mxu0
  %v477 = vpop.f32.mrb[0].mxu0
  %478 = vdwg.mxu0
  %v479 = vrot.slane %v300, 5
  %v480 = vrot.slane %v302, 5
  %v483 = vsel %vm67, %v300, %v479
  %v484 = vsel %vm68, %v302, %v480
  %v487 = vrot.slane %v473, 7
  %v488 = vrot.slane %v475, 7
  %v491 = vadd.f32 %v483, %v487
  %v492 = vadd.f32 %v484, %v488
  %v493 = vxor.u32 %v491, 2147483648
  %v494 = vmul.f32 %v493, 1.442695
  %v495 = vpow.pop %v494
  %v496 = vadd.f32 %v495, 1.0
  %v497 = vrcp.pop %v496
  %v498 = vmul.f32 1.0, %v497
  %v499 = vtanh.pop %v492
  %v500 = vxor.u32 %v492, 2147483648
  %v501 = vmul.f32 %v500, 1.442695
  %v502 = vpow.pop %v501
  %v503 = vadd.f32 %v502, 1.0
  %v504 = vrcp.pop %v503
  %v505 = vmul.f32 1.0, %v504
  %v507 = vrot.slane %v420, 7
  %v509 = vmul.f32 %v498, %v507
  %v510 = vmul.f32 %v498, %v499
  %512 = vrot.lane.b32.xlu0 %v510, 64
  %v513 = vpop.permute.xlu0 %512
  %v515 = vadd.f32 %v509, %v513
  %v516 = vtanh.pop %v515
  %v517 = vmul.f32 %v505, %v516
  %519 = vrot.lane.b32.xlu0 %v517, 64
  %v520 = vpop.permute.xlu0 %519
  %vm522 = vcmask 254977
  %523 = vst.msk [vmem:[#allocation2] sm:$0x2] %vm522, %v520
  %vm524 = vcmask 517377
  %525 = vst.msk [vmem:[#allocation2 + $0x5] sm:$0x2] %vm524, %v520
  %v526 = vpack.c.bf16 %v517, %v517
  %v528 = vshrl.u32 %v526, 16
  %530 = vrot.lane.b32.xlu0 %v528, 64
  %v531 = vpop.permute.xlu0 %530
  %v533 = vsel %vm346, %v531, 0
  %535 = vmatprep.subr.bf16.mxu0 %v331
  %536 = vmatpush1.bf16.msra.mxu0 %v330
  %537 = vmatprep.subr.bf16.mxu0 %v333
  %538 = vmatpush1.bf16.msra.mxu0 %v332
  %539 = vmatprep.subr.bf16.mxu0 %v335
  %540 = vmatpush1.bf16.msra.mxu0 %v334
  %541 = vmatprep.subr.bf16.mxu0 %v337
  %542 = vmatpush1.bf16.msra.mxu0 %v336
  %543 = vmatprep.subr.bf16.mxu0 0
  %544 = vmatpush1.bf16.msra.mxu0 0
  %545 = vmatprep.subr.bf16.mxu0 0
  %546 = vmatpush1.bf16.msra.mxu0 0
  %547 = vmatprep.subr.bf16.mxu0 0
  %548 = vmatpush1.bf16.msra.mxu0 0
  %549 = vmatprep.subr.bf16.mxu0 0
  %550 = vmatpush1.bf16.msra.mxu0 0
  %551 = vmatprep.subr.bf16.mxu0 0
  %552 = vmatpush1.bf16.msra.mxu0 0
  %553 = vmatprep.subr.bf16.mxu0 0
  %554 = vmatpush1.bf16.msra.mxu0 0
  %555 = vmatprep.subr.bf16.mxu0 0
  %556 = vmatpush1.bf16.msra.mxu0 0
  %557 = vmatprep.subr.bf16.mxu0 0
  %558 = vmatpush1.bf16.msra.mxu0 0
  %559 = vmatprep.subr.bf16.mxu0 0
  %560 = vmatpush1.bf16.msra.mxu0 0
  %561 = vmatprep.subr.bf16.mxu0 0
  %562 = vmatpush1.bf16.msra.mxu0 0
  %563 = vmatprep.subr.bf16.mxu0 0
  %564 = vmatpush1.bf16.msra.mxu0 0
  %565 = vmatprep.subr.bf16.mxu0 0
  %566 = vmatpush1.bf16.msra.mxu0 0
  %567 = vmatprep.mubr.bf16.mxu0 0
  %568 = vmatmul.mubr.bf16.gmra.mrb[0].mxu0 %v533
  %v569 = vpop.f32.mrb[0].mxu0
  %v570 = vadd.f32 0.0, %v569
  %v571 = vpop.f32.mrb[0].mxu0
  %v572 = vadd.f32 0.0, %v571
  %v573 = vpop.f32.mrb[0].mxu0
  %v574 = vpop.f32.mrb[0].mxu0
  %575 = vdwg.mxu0
  %v576 = vrot.slane %v300, 3
  %v577 = vrot.slane %v302, 3
  %v580 = vsel %vm67, %v300, %v576
  %v581 = vsel %vm68, %v302, %v577
  %v584 = vrot.slane %v570, 6
  %v585 = vrot.slane %v572, 6
  %v588 = vadd.f32 %v580, %v584
  %v589 = vadd.f32 %v581, %v585
  %v590 = vxor.u32 %v588, 2147483648
  %v591 = vmul.f32 %v590, 1.442695
  %v592 = vpow.pop %v591
  %v593 = vadd.f32 %v592, 1.0
  %v594 = vrcp.pop %v593
  %v595 = vmul.f32 1.0, %v594
  %v596 = vtanh.pop %v589
  %v597 = vxor.u32 %v589, 2147483648
  %v598 = vmul.f32 %v597, 1.442695
  %v599 = vpow.pop %v598
  %v600 = vadd.f32 %v599, 1.0
  %v601 = vrcp.pop %v600
  %v602 = vmul.f32 1.0, %v601
  %v604 = vrot.slane %v515, 7
  %v606 = vmul.f32 %v595, %v604
  %v607 = vmul.f32 %v595, %v596
  %609 = vrot.lane.b32.xlu0 %v607, 64
  %v610 = vpop.permute.xlu0 %609
  %v612 = vadd.f32 %v606, %v610
  %v613 = vtanh.pop %v612
  %v614 = vmul.f32 %v602, %v613
  %616 = vrot.lane.b32.xlu0 %v614, 64
  %v617 = vpop.permute.xlu0 %616
  %vm619 = vcmask 256002
  %620 = vst.msk [vmem:[#allocation2] sm:$0x4] %vm619, %v617
  %vm621 = vcmask 518402
  %622 = vst.msk [vmem:[#allocation2 + $0x3] sm:$0x4] %vm621, %v617
  %v623 = vpack.c.bf16 %v614, %v614
  %v625 = vrot.slane %v623, 1
  %626 = vrot.lane.b32.xlu0 %v625, 64
  %v627 = vpop.permute.xlu0 %626
  %v629 = vsel %vm346, %v627, 0
  %631 = vmatprep.subr.bf16.mxu0 %v331
  %632 = vmatpush1.bf16.msra.mxu0 %v330
  %633 = vmatprep.subr.bf16.mxu0 %v333
  %634 = vmatpush1.bf16.msra.mxu0 %v332
  %635 = vmatprep.subr.bf16.mxu0 %v335
  %636 = vmatpush1.bf16.msra.mxu0 %v334
  %637 = vmatprep.subr.bf16.mxu0 %v337
  %638 = vmatpush1.bf16.msra.mxu0 %v336
  %639 = vmatprep.subr.bf16.mxu0 0
  %640 = vmatpush1.bf16.msra.mxu0 0
  %641 = vmatprep.subr.bf16.mxu0 0
  %642 = vmatpush1.bf16.msra.mxu0 0
  %643 = vmatprep.subr.bf16.mxu0 0
  %644 = vmatpush1.bf16.msra.mxu0 0
  %645 = vmatprep.subr.bf16.mxu0 0
  %646 = vmatpush1.bf16.msra.mxu0 0
  %647 = vmatprep.subr.bf16.mxu0 0
  %648 = vmatpush1.bf16.msra.mxu0 0
  %649 = vmatprep.subr.bf16.mxu0 0
  %650 = vmatpush1.bf16.msra.mxu0 0
  %651 = vmatprep.subr.bf16.mxu0 0
  %652 = vmatpush1.bf16.msra.mxu0 0
  %653 = vmatprep.subr.bf16.mxu0 0
  %654 = vmatpush1.bf16.msra.mxu0 0
  %655 = vmatprep.subr.bf16.mxu0 0
  %656 = vmatpush1.bf16.msra.mxu0 0
  %657 = vmatprep.subr.bf16.mxu0 0
  %658 = vmatpush1.bf16.msra.mxu0 0
  %659 = vmatprep.subr.bf16.mxu0 0
  %660 = vmatpush1.bf16.msra.mxu0 0
  %661 = vmatprep.subr.bf16.mxu0 0
  %662 = vmatpush1.bf16.msra.mxu0 0
  %663 = vmatprep.mubr.bf16.mxu0 0
  %664 = vmatmul.mubr.bf16.gmra.mrb[0].mxu0 %v629
  %v665 = vpop.f32.mrb[0].mxu0
  %v666 = vadd.f32 0.0, %v665
  %v667 = vpop.f32.mrb[0].mxu0
  %v668 = vadd.f32 0.0, %v667
  %v669 = vpop.f32.mrb[0].mxu0
  %v670 = vpop.f32.mrb[0].mxu0
  %671 = vdwg.mxu0
  %v672 = vrot.slane %v300, 1
  %v673 = vrot.slane %v302, 1
  %v676 = vsel %vm67, %v300, %v672
  %v677 = vsel %vm68, %v302, %v673
  %v680 = vrot.slane %v666, 5
  %v681 = vrot.slane %v668, 5
  %v684 = vadd.f32 %v676, %v680
  %v685 = vadd.f32 %v677, %v681
  %v686 = vxor.u32 %v684, 2147483648
  %v687 = vmul.f32 %v686, 1.442695
  %v688 = vpow.pop %v687
  %v689 = vadd.f32 %v688, 1.0
  %v690 = vrcp.pop %v689
  %v691 = vmul.f32 1.0, %v690
  %v692 = vtanh.pop %v685
  %v693 = vxor.u32 %v685, 2147483648
  %v694 = vmul.f32 %v693, 1.442695
  %v695 = vpow.pop %v694
  %v696 = vadd.f32 %v695, 1.0
  %v697 = vrcp.pop %v696
  %v698 = vmul.f32 1.0, %v697
  %v700 = vrot.slane %v612, 7
  %v702 = vmul.f32 %v691, %v700
  %v703 = vmul.f32 %v691, %v692
  %705 = vrot.lane.b32.xlu0 %v703, 64
  %v706 = vpop.permute.xlu0 %705
  %v708 = vadd.f32 %v702, %v706
  %v709 = vtanh.pop %v708
  %v710 = vmul.f32 %v698, %v709
  %712 = vrot.lane.b32.xlu0 %v710, 64
  %v713 = vpop.permute.xlu0 %712
  %vm715 = vcmask 257027
  %716 = vst.msk [vmem:[#allocation2] sm:$0x8] %vm715, %v713
  %vm717 = vcmask 519427
  %718 = vst.msk [vmem:[#allocation2 + $0x1] sm:$0x8] %vm717, %v713
  %v719 = vpack.c.bf16 %v710, %v710
  %v721 = vshrl.u32 %v719, 16
  %v723 = vrot.slane %v721, 1
  %724 = vrot.lane.b32.xlu0 %v723, 64
  %v725 = vpop.permute.xlu0 %724
  %v727 = vsel %vm346, %v725, 0
  %729 = vmatprep.subr.bf16.mxu0 %v331
  %730 = vmatpush1.bf16.msra.mxu0 %v330
  %731 = vmatprep.subr.bf16.mxu0 %v333
  %732 = vmatpush1.bf16.msra.mxu0 %v332
  %733 = vmatprep.subr.bf16.mxu0 %v335
  %734 = vmatpush1.bf16.msra.mxu0 %v334
  %735 = vmatprep.subr.bf16.mxu0 %v337
  %736 = vmatpush1.bf16.msra.mxu0 %v336
  %737 = vmatprep.subr.bf16.mxu0 0
  %738 = vmatpush1.bf16.msra.mxu0 0
  %739 = vmatprep.subr.bf16.mxu0 0
  %740 = vmatpush1.bf16.msra.mxu0 0
  %741 = vmatprep.subr.bf16.mxu0 0
  %742 = vmatpush1.bf16.msra.mxu0 0
  %743 = vmatprep.subr.bf16.mxu0 0
  %744 = vmatpush1.bf16.msra.mxu0 0
  %745 = vmatprep.subr.bf16.mxu0 0
  %746 = vmatpush1.bf16.msra.mxu0 0
  %747 = vmatprep.subr.bf16.mxu0 0
  %748 = vmatpush1.bf16.msra.mxu0 0
  %749 = vmatprep.subr.bf16.mxu0 0
  %750 = vmatpush1.bf16.msra.mxu0 0
  %751 = vmatprep.subr.bf16.mxu0 0
  %752 = vmatpush1.bf16.msra.mxu0 0
  %753 = vmatprep.subr.bf16.mxu0 0
  %754 = vmatpush1.bf16.msra.mxu0 0
  %755 = vmatprep.subr.bf16.mxu0 0
  %756 = vmatpush1.bf16.msra.mxu0 0
  %757 = vmatprep.subr.bf16.mxu0 0
  %758 = vmatpush1.bf16.msra.mxu0 0
  %759 = vmatprep.subr.bf16.mxu0 0
  %760 = vmatpush1.bf16.msra.mxu0 0
  %761 = vmatprep.mubr.bf16.mxu0 0
  %762 = vmatmul.mubr.bf16.gmra.mrb[0].mxu0 %v727
  %v763 = vpop.f32.mrb[0].mxu0
  %v764 = vadd.f32 0.0, %v763
  %v765 = vpop.f32.mrb[0].mxu0
  %v766 = vadd.f32 0.0, %v765
  %v767 = vpop.f32.mrb[0].mxu0
  %v768 = vpop.f32.mrb[0].mxu0
  %769 = vdwg.mxu0
  %v772 = vrot.slane %v764, 4
  %v773 = vrot.slane %v766, 4
  %v776 = vadd.f32 %v397, %v772
  %v777 = vadd.f32 %v398, %v773
  %v778 = vxor.u32 %v776, 2147483648
  %v779 = vmul.f32 %v778, 1.442695
  %v780 = vpow.pop %v779
  %v781 = vadd.f32 %v780, 1.0
  %v782 = vrcp.pop %v781
  %v783 = vmul.f32 1.0, %v782
  %v784 = vtanh.pop %v777
  %v785 = vxor.u32 %v777, 2147483648
  %v786 = vmul.f32 %v785, 1.442695
  %v787 = vpow.pop %v786
  %v788 = vadd.f32 %v787, 1.0
  %v789 = vrcp.pop %v788
  %v790 = vmul.f32 1.0, %v789
  %v792 = vrot.slane %v708, 7
  %v794 = vmul.f32 %v783, %v792
  %v795 = vmul.f32 %v783, %v784
  %797 = vrot.lane.b32.xlu0 %v795, 64
  %v798 = vpop.permute.xlu0 %797
  %v800 = vadd.f32 %v794, %v798
  %v801 = vtanh.pop %v800
  %v802 = vmul.f32 %v790, %v801
  %804 = vrot.lane.b32.xlu0 %v802, 64
  %v805 = vpop.permute.xlu0 %804
  %vm807 = vcmask 258052
  %808 = vst.msk [vmem:[#allocation2] sm:$0x10] %vm807, %v805
  %vm809 = vcmask 520452
  %810 = vst.msk [vmem:[#allocation2 - $0x1] sm:$0x10] %vm809, %v805
  %v811 = vpack.c.bf16 %v802, %v802
  %v813 = vrot.slane %v811, 2
  %814 = vrot.lane.b32.xlu0 %v813, 64
  %v815 = vpop.permute.xlu0 %814
  %v817 = vsel %vm346, %v815, 0
  %819 = vmatprep.subr.bf16.mxu0 %v331
  %820 = vmatpush1.bf16.msra.mxu0 %v330
  %821 = vmatprep.subr.bf16.mxu0 %v333
  %822 = vmatpush1.bf16.msra.mxu0 %v332
  %823 = vmatprep.subr.bf16.mxu0 %v335
  %824 = vmatpush1.bf16.msra.mxu0 %v334
  %825 = vmatprep.subr.bf16.mxu0 %v337
  %826 = vmatpush1.bf16.msra.mxu0 %v336
  %827 = vmatprep.subr.bf16.mxu0 0
  %828 = vmatpush1.bf16.msra.mxu0 0
  %829 = vmatprep.subr.bf16.mxu0 0
  %830 = vmatpush1.bf16.msra.mxu0 0
  %831 = vmatprep.subr.bf16.mxu0 0
  %832 = vmatpush1.bf16.msra.mxu0 0
  %833 = vmatprep.subr.bf16.mxu0 0
  %834 = vmatpush1.bf16.msra.mxu0 0
  %835 = vmatprep.subr.bf16.mxu0 0
  %836 = vmatpush1.bf16.msra.mxu0 0
  %837 = vmatprep.subr.bf16.mxu0 0
  %838 = vmatpush1.bf16.msra.mxu0 0
  %839 = vmatprep.subr.bf16.mxu0 0
  %840 = vmatpush1.bf16.msra.mxu0 0
  %841 = vmatprep.subr.bf16.mxu0 0
  %842 = vmatpush1.bf16.msra.mxu0 0
  %843 = vmatprep.subr.bf16.mxu0 0
  %844 = vmatpush1.bf16.msra.mxu0 0
  %845 = vmatprep.subr.bf16.mxu0 0
  %846 = vmatpush1.bf16.msra.mxu0 0
  %847 = vmatprep.subr.bf16.mxu0 0
  %848 = vmatpush1.bf16.msra.mxu0 0
  %849 = vmatprep.subr.bf16.mxu0 0
  %850 = vmatpush1.bf16.msra.mxu0 0
  %851 = vmatprep.mubr.bf16.mxu0 0
  %852 = vmatmul.mubr.bf16.gmra.mrb[0].mxu0 %v817
  %v853 = vpop.f32.mrb[0].mxu0
  %v854 = vadd.f32 0.0, %v853
  %v855 = vpop.f32.mrb[0].mxu0
  %v856 = vadd.f32 0.0, %v855
  %v857 = vpop.f32.mrb[0].mxu0
  %v858 = vpop.f32.mrb[0].mxu0
  %859 = vdwg.mxu0
  %v862 = vrot.slane %v854, 3
  %v863 = vrot.slane %v856, 3
  %v866 = vadd.f32 %v483, %v862
  %v867 = vadd.f32 %v484, %v863
  %v868 = vxor.u32 %v866, 2147483648
  %v869 = vmul.f32 %v868, 1.442695
  %v870 = vpow.pop %v869
  %v871 = vadd.f32 %v870, 1.0
  %v872 = vrcp.pop %v871
  %v873 = vmul.f32 1.0, %v872
  %v874 = vtanh.pop %v867
  %v875 = vxor.u32 %v867, 2147483648
  %v876 = vmul.f32 %v875, 1.442695
  %v877 = vpow.pop %v876
  %v878 = vadd.f32 %v877, 1.0
  %v879 = vrcp.pop %v878
  %v880 = vmul.f32 1.0, %v879
  %v882 = vrot.slane %v800, 7
  %v884 = vmul.f32 %v873, %v882
  %v885 = vmul.f32 %v873, %v874
  %887 = vrot.lane.b32.xlu0 %v885, 64
  %v888 = vpop.permute.xlu0 %887
  %v890 = vadd.f32 %v884, %v888
  %v891 = vtanh.pop %v890
  %v892 = vmul.f32 %v880, %v891
  %894 = vrot.lane.b32.xlu0 %v892, 64
  %v895 = vpop.permute.xlu0 %894
  %vm897 = vcmask 259077
  %898 = vst.msk [vmem:[#allocation2] sm:$0x20] %vm897, %v895
  %vm899 = vcmask 521477
  %900 = vst.msk [vmem:[#allocation2 - $0x3] sm:$0x20] %vm899, %v895
  %v901 = vpack.c.bf16 %v892, %v892
  %v903 = vshrl.u32 %v901, 16
  %v905 = vrot.slane %v903, 2
  %906 = vrot.lane.b32.xlu0 %v905, 64
  %v907 = vpop.permute.xlu0 %906
  %v909 = vsel %vm346, %v907, 0
  %911 = vmatprep.subr.bf16.mxu0 %v331
  %912 = vmatpush1.bf16.msra.mxu0 %v330
  %913 = vmatprep.subr.bf16.mxu0 %v333
  %914 = vmatpush1.bf16.msra.mxu0 %v332
  %915 = vmatprep.subr.bf16.mxu0 %v335
  %916 = vmatpush1.bf16.msra.mxu0 %v334
  %917 = vmatprep.subr.bf16.mxu0 %v337
  %918 = vmatpush1.bf16.msra.mxu0 %v336
  %919 = vmatprep.subr.bf16.mxu0 0
  %920 = vmatpush1.bf16.msra.mxu0 0
  %921 = vmatprep.subr.bf16.mxu0 0
  %922 = vmatpush1.bf16.msra.mxu0 0
  %923 = vmatprep.subr.bf16.mxu0 0
  %924 = vmatpush1.bf16.msra.mxu0 0
  %925 = vmatprep.subr.bf16.mxu0 0
  %926 = vmatpush1.bf16.msra.mxu0 0
  %927 = vmatprep.subr.bf16.mxu0 0
  %928 = vmatpush1.bf16.msra.mxu0 0
  %929 = vmatprep.subr.bf16.mxu0 0
  %930 = vmatpush1.bf16.msra.mxu0 0
  %931 = vmatprep.subr.bf16.mxu0 0
  %932 = vmatpush1.bf16.msra.mxu0 0
  %933 = vmatprep.subr.bf16.mxu0 0
  %934 = vmatpush1.bf16.msra.mxu0 0
  %935 = vmatprep.subr.bf16.mxu0 0
  %936 = vmatpush1.bf16.msra.mxu0 0
  %937 = vmatprep.subr.bf16.mxu0 0
  %938 = vmatpush1.bf16.msra.mxu0 0
  %939 = vmatprep.subr.bf16.mxu0 0
  %940 = vmatpush1.bf16.msra.mxu0 0
  %941 = vmatprep.subr.bf16.mxu0 0
  %942 = vmatpush1.bf16.msra.mxu0 0
  %943 = vmatprep.mubr.bf16.mxu0 0
  %944 = vmatmul.mubr.bf16.gmra.mrb[0].mxu0 %v909
  %v945 = vpop.f32.mrb[0].mxu0
  %v946 = vadd.f32 0.0, %v945
  %v947 = vpop.f32.mrb[0].mxu0
  %v948 = vadd.f32 0.0, %v947
  %v949 = vpop.f32.mrb[0].mxu0
  %v950 = vpop.f32.mrb[0].mxu0
  %951 = vdwg.mxu0
  %v954 = vrot.slane %v946, 2
  %v955 = vrot.slane %v948, 2
  %v958 = vadd.f32 %v580, %v954
  %v959 = vadd.f32 %v581, %v955
  %v960 = vxor.u32 %v958, 2147483648
  %v961 = vmul.f32 %v960, 1.442695
  %v962 = vpow.pop %v961
  %v963 = vadd.f32 %v962, 1.0
  %v964 = vrcp.pop %v963
  %v965 = vmul.f32 1.0, %v964
  %v966 = vtanh.pop %v959
  %v967 = vxor.u32 %v959, 2147483648
  %v968 = vmul.f32 %v967, 1.442695
  %v969 = vpow.pop %v968
  %v970 = vadd.f32 %v969, 1.0
  %v971 = vrcp.pop %v970
  %v972 = vmul.f32 1.0, %v971
  %v974 = vrot.slane %v890, 7
  %v976 = vmul.f32 %v965, %v974
  %v977 = vmul.f32 %v965, %v966
  %979 = vrot.lane.b32.xlu0 %v977, 64
  %v980 = vpop.permute.xlu0 %979
  %v982 = vadd.f32 %v976, %v980
  %v983 = vtanh.pop %v982
  %v984 = vmul.f32 %v972, %v983
  %986 = vrot.lane.b32.xlu0 %v984, 64
  %v987 = vpop.permute.xlu0 %986
  %vm989 = vcmask 260102
  %990 = vst.msk [vmem:[#allocation2] sm:$0x40] %vm989, %v987
  %vm991 = vcmask 522502
  %992 = vst.msk [vmem:[#allocation2 - $0x5] sm:$0x40] %vm991, %v987
  %v993 = vpack.c.bf16 %v984, %v984
  %v995 = vrot.slane %v993, 3
  %996 = vrot.lane.b32.xlu0 %v995, 64
  %v997 = vpop.permute.xlu0 %996
  %v999 = vsel %vm346, %v997, 0
  %1001 = vmatprep.subr.bf16.mxu0 %v331
  %1002 = vmatpush1.bf16.msra.mxu0 %v330
  %1003 = vmatprep.subr.bf16.mxu0 %v333
  %1004 = vmatpush1.bf16.msra.mxu0 %v332
  %1005 = vmatprep.subr.bf16.mxu0 %v335
  %1006 = vmatpush1.bf16.msra.mxu0 %v334
  %1007 = vmatprep.subr.bf16.mxu0 %v337
  %1008 = vmatpush1.bf16.msra.mxu0 %v336
  %1009 = vmatprep.subr.bf16.mxu0 0
  %1010 = vmatpush1.bf16.msra.mxu0 0
  %1011 = vmatprep.subr.bf16.mxu0 0
  %1012 = vmatpush1.bf16.msra.mxu0 0
  %1013 = vmatprep.subr.bf16.mxu0 0
  %1014 = vmatpush1.bf16.msra.mxu0 0
  %1015 = vmatprep.subr.bf16.mxu0 0
  %1016 = vmatpush1.bf16.msra.mxu0 0
  %1017 = vmatprep.subr.bf16.mxu0 0
  %1018 = vmatpush1.bf16.msra.mxu0 0
  %1019 = vmatprep.subr.bf16.mxu0 0
  %1020 = vmatpush1.bf16.msra.mxu0 0
  %1021 = vmatprep.subr.bf16.mxu0 0
  %1022 = vmatpush1.bf16.msra.mxu0 0
  %1023 = vmatprep.subr.bf16.mxu0 0
  %1024 = vmatpush1.bf16.msra.mxu0 0
  %1025 = vmatprep.subr.bf16.mxu0 0
  %1026 = vmatpush1.bf16.msra.mxu0 0
  %1027 = vmatprep.subr.bf16.mxu0 0
  %1028 = vmatpush1.bf16.msra.mxu0 0
  %1029 = vmatprep.subr.bf16.mxu0 0
  %1030 = vmatpush1.bf16.msra.mxu0 0
  %1031 = vmatprep.subr.bf16.mxu0 0
  %1032 = vmatpush1.bf16.msra.mxu0 0
  %1033 = vmatprep.mubr.bf16.mxu0 0
  %1034 = vmatmul.mubr.bf16.gmra.mrb[0].mxu0 %v999
  %v1035 = vpop.f32.mrb[0].mxu0
  %v1036 = vadd.f32 0.0, %v1035
  %v1037 = vpop.f32.mrb[0].mxu0
  %v1038 = vadd.f32 0.0, %v1037
  %v1039 = vpop.f32.mrb[0].mxu0
  %v1040 = vpop.f32.mrb[0].mxu0
  %1041 = vdwg.mxu0
  %v1044 = vrot.slane %v1036, 1
  %v1045 = vrot.slane %v1038, 1
  %v1048 = vadd.f32 %v676, %v1044
  %v1049 = vadd.f32 %v677, %v1045
  %v1050 = vxor.u32 %v1048, 2147483648
  %v1051 = vmul.f32 %v1050, 1.442695
  %v1052 = vpow.pop %v1051
  %v1053 = vadd.f32 %v1052, 1.0
  %v1054 = vrcp.pop %v1053
  %v1055 = vmul.f32 1.0, %v1054
  %v1056 = vtanh.pop %v1049
  %v1057 = vxor.u32 %v1049, 2147483648
  %v1058 = vmul.f32 %v1057, 1.442695
  %v1059 = vpow.pop %v1058
  %v1060 = vadd.f32 %v1059, 1.0
  %v1061 = vrcp.pop %v1060
  %v1062 = vmul.f32 1.0, %v1061
  %v1064 = vrot.slane %v982, 7
  %v1066 = vmul.f32 %v1055, %v1064
  %v1067 = vmul.f32 %v1055, %v1056
  %1069 = vrot.lane.b32.xlu0 %v1067, 64
  %v1070 = vpop.permute.xlu0 %1069
  %v1072 = vadd.f32 %v1066, %v1070
  %v1073 = vtanh.pop %v1072
  %v1074 = vmul.f32 %v1062, %v1073
  %1076 = vrot.lane.b32.xlu0 %v1074, 64
  %v1077 = vpop.permute.xlu0 %1076
  %vm1079 = vcmask 261127
  %1080 = vst.msk [vmem:[#allocation2] sm:$0x80] %vm1079, %v1077
  %vm1081 = vcmask 523527
  %1082 = vst.msk [vmem:[#allocation2 - $0x7] sm:$0x80] %vm1081, %v1077
  %v1083 = vld [vmem:[#allocation2] sm:$0xff]
  %v1084 = vld [vmem:[%s5] sm:$0xff]
  %v1085 = vld [vmem:[%s5 + $0x8] sm:$0xff]
  %v1086 = vld [vmem:[%s5 + $0x10] sm:$0xff]
  %v1087 = vld [vmem:[%s5 + $0x18] sm:$0xff]
  %v1088 = vld [vmem:[%s5 + $0x20] sm:$0xff]
  %v1089 = vld [vmem:[%s5 + $0x28] sm:$0xff]
  %v1090 = vld [vmem:[%s5 + $0x30] sm:$0xff]
  %v1091 = vld [vmem:[%s5 + $0x38] sm:$0xff]
  %v1092 = vld [vmem:[%s6] sm:$0xff]
  %v1093 = vld [vmem:[%s6 + $0x8] sm:$0xff]
  %v1094 = vld [vmem:[%s6 + $0x10] sm:$0xff]
  %v1095 = vld [vmem:[%s6 + $0x18] sm:$0xff]
  %v1096 = vld [vmem:[%s6 + $0x20] sm:$0xff]
  %v1097 = vld [vmem:[%s6 + $0x28] sm:$0xff]
  %v1098 = vld [vmem:[%s6 + $0x30] sm:$0xff]
  %v1099 = vld [vmem:[%s6 + $0x38] sm:$0xff]
  %v1100 = vld [vmem:[%s7] sm:$0x3]
  %v1101 = vpack.c.bf16 %v1083, %v1083
  %v1103 = vlaneseq
  %v1104 = vshrl.u32 %v1103, 7
  %v1105 = vsub.s32 0, %v1104
  %v1106 = vrot.slane %v1100, %v1105
  %v1107 = vlaneseq
  %v1108 = vshrl.u32 %v1107, 7
  %v1109 = vsub.s32 1, %v1108
  %v1110 = vrot.slane %v1100, %v1109
  %v1121 = vunpack.c.l.b16 %v1084
  %v1122 = vunpack.c.h.b16 %v1084
  %v1123 = vunpack.c.l.b16 %v1085
  %v1124 = vunpack.c.h.b16 %v1085
  %v1125 = vunpack.c.l.b16 %v1086
  %v1126 = vunpack.c.h.b16 %v1086
  %v1127 = vunpack.c.l.b16 %v1087
  %v1128 = vunpack.c.h.b16 %v1087
  %v1129 = vunpack.c.l.b16 %v1088
  %v1130 = vunpack.c.h.b16 %v1088
  %v1131 = vunpack.c.l.b16 %v1089
  %v1132 = vunpack.c.h.b16 %v1089
  %v1133 = vunpack.c.l.b16 %v1090
  %v1134 = vunpack.c.h.b16 %v1090
  %v1135 = vunpack.c.l.b16 %v1091
  %v1136 = vunpack.c.h.b16 %v1091
  %v1137 = vpack.c.b16 %v1123, %v1121
  %v1138 = vpack.c.b16 %v1124, %v1122
  %v1139 = vpack.c.b16 %v1127, %v1125
  %v1140 = vpack.c.b16 %v1128, %v1126
  %v1141 = vpack.c.b16 %v1131, %v1129
  %v1142 = vpack.c.b16 %v1132, %v1130
  %v1143 = vpack.c.b16 %v1135, %v1133
  %v1144 = vpack.c.b16 %v1136, %v1134
  %v1154 = vsel %vm346, %v1101, 0
  %1156 = vmatprep.subr.bf16.mxu0 %v1138
  %1157 = vmatpush1.bf16.msra.mxu0 %v1137
  %1158 = vmatprep.subr.bf16.mxu0 %v1140
  %1159 = vmatpush1.bf16.msra.mxu0 %v1139
  %1160 = vmatprep.subr.bf16.mxu0 %v1142
  %1161 = vmatpush1.bf16.msra.mxu0 %v1141
  %1162 = vmatprep.subr.bf16.mxu0 %v1144
  %1163 = vmatpush1.bf16.msra.mxu0 %v1143
  %1164 = vmatprep.subr.bf16.mxu0 0
  %1165 = vmatpush1.bf16.msra.mxu0 0
  %1166 = vmatprep.subr.bf16.mxu0 0
  %1167 = vmatpush1.bf16.msra.mxu0 0
  %1168 = vmatprep.subr.bf16.mxu0 0
  %1169 = vmatpush1.bf16.msra.mxu0 0
  %1170 = vmatprep.subr.bf16.mxu0 0
  %1171 = vmatpush1.bf16.msra.mxu0 0
  %1172 = vmatprep.subr.bf16.mxu0 0
  %1173 = vmatpush1.bf16.msra.mxu0 0
  %1174 = vmatprep.subr.bf16.mxu0 0
  %1175 = vmatpush1.bf16.msra.mxu0 0
  %1176 = vmatprep.subr.bf16.mxu0 0
  %1177 = vmatpush1.bf16.msra.mxu0 0
  %1178 = vmatprep.subr.bf16.mxu0 0
  %1179 = vmatpush1.bf16.msra.mxu0 0
  %1180 = vmatprep.subr.bf16.mxu0 0
  %1181 = vmatpush1.bf16.msra.mxu0 0
  %1182 = vmatprep.subr.bf16.mxu0 0
  %1183 = vmatpush1.bf16.msra.mxu0 0
  %1184 = vmatprep.subr.bf16.mxu0 0
  %1185 = vmatpush1.bf16.msra.mxu0 0
  %1186 = vmatprep.subr.bf16.mxu0 0
  %1187 = vmatpush1.bf16.msra.mxu0 0
  %1188 = vmatprep.mubr.bf16.mxu0 0
  %1189 = vmatmul.mubr.bf16.gmra.mrb[0].mxu0 %v1154
  %v1190 = vpop.f32.mrb[0].mxu0
  %v1191 = vadd.f32 %v1106, %v1190
  %v1192 = vpop.f32.mrb[0].mxu0
  %v1193 = vadd.f32 %v1110, %v1192
  %v1194 = vpop.f32.mrb[0].mxu0
  %v1195 = vpop.f32.mrb[0].mxu0
  %1196 = vdwg.mxu0
  %v1205 = vunpack.c.l.b16 %v1092
  %v1206 = vunpack.c.h.b16 %v1092
  %v1207 = vunpack.c.l.b16 %v1093
  %v1208 = vunpack.c.h.b16 %v1093
  %v1209 = vunpack.c.l.b16 %v1094
  %v1210 = vunpack.c.h.b16 %v1094
  %v1211 = vunpack.c.l.b16 %v1095
  %v1212 = vunpack.c.h.b16 %v1095
  %v1213 = vunpack.c.l.b16 %v1096
  %v1214 = vunpack.c.h.b16 %v1096
  %v1215 = vunpack.c.l.b16 %v1097
  %v1216 = vunpack.c.h.b16 %v1097
  %v1217 = vunpack.c.l.b16 %v1098
  %v1218 = vunpack.c.h.b16 %v1098
  %v1219 = vunpack.c.l.b16 %v1099
  %v1220 = vunpack.c.h.b16 %v1099
  %v1221 = vpack.c.b16 %v1207, %v1205
  %v1222 = vpack.c.b16 %v1208, %v1206
  %v1223 = vpack.c.b16 %v1211, %v1209
  %v1224 = vpack.c.b16 %v1212, %v1210
  %v1225 = vpack.c.b16 %v1215, %v1213
  %v1226 = vpack.c.b16 %v1216, %v1214
  %v1227 = vpack.c.b16 %v1219, %v1217
  %v1228 = vpack.c.b16 %v1220, %v1218
  %1237 = vmatprep.subr.bf16.mxu0 %v1222
  %1238 = vmatpush1.bf16.msra.mxu0 %v1221
  %1239 = vmatprep.subr.bf16.mxu0 %v1224
  %1240 = vmatpush1.bf16.msra.mxu0 %v1223
  %1241 = vmatprep.subr.bf16.mxu0 %v1226
  %1242 = vmatpush1.bf16.msra.mxu0 %v1225
  %1243 = vmatprep.subr.bf16.mxu0 %v1228
  %1244 = vmatpush1.bf16.msra.mxu0 %v1227
  %1245 = vmatprep.subr.bf16.mxu0 0
  %1246 = vmatpush1.bf16.msra.mxu0 0
  %1247 = vmatprep.subr.bf16.mxu0 0
  %1248 = vmatpush1.bf16.msra.mxu0 0
  %1249 = vmatprep.subr.bf16.mxu0 0
  %1250 = vmatpush1.bf16.msra.mxu0 0
  %1251 = vmatprep.subr.bf16.mxu0 0
  %1252 = vmatpush1.bf16.msra.mxu0 0
  %1253 = vmatprep.subr.bf16.mxu0 0
  %1254 = vmatpush1.bf16.msra.mxu0 0
  %1255 = vmatprep.subr.bf16.mxu0 0
  %1256 = vmatpush1.bf16.msra.mxu0 0
  %1257 = vmatprep.subr.bf16.mxu0 0
  %1258 = vmatpush1.bf16.msra.mxu0 0
  %1259 = vmatprep.subr.bf16.mxu0 0
  %1260 = vmatpush1.bf16.msra.mxu0 0
  %1261 = vmatprep.subr.bf16.mxu0 0
  %1262 = vmatpush1.bf16.msra.mxu0 0
  %1263 = vmatprep.subr.bf16.mxu0 0
  %1264 = vmatpush1.bf16.msra.mxu0 0
  %1265 = vmatprep.subr.bf16.mxu0 0
  %1266 = vmatpush1.bf16.msra.mxu0 0
  %1267 = vmatprep.subr.bf16.mxu0 0
  %1268 = vmatpush1.bf16.msra.mxu0 0
  %1269 = vmatprep.mubr.bf16.mxu0 0
  %1270 = vmatmul.mubr.bf16.gmra.mrb[0].mxu0 %v348
  %v1271 = vpop.f32.mrb[0].mxu0
  %v1272 = vadd.f32 0.0, %v1271
  %v1273 = vpop.f32.mrb[0].mxu0
  %v1274 = vadd.f32 0.0, %v1273
  %v1275 = vpop.f32.mrb[0].mxu0
  %v1276 = vpop.f32.mrb[0].mxu0
  %1277 = vdwg.mxu0
  %v1280 = vrot.slane %v1191, 7
  %v1281 = vrot.slane %v1193, 7
  %v1284 = vsel %vm67, %v1191, %v1280
  %v1285 = vsel %vm68, %v1193, %v1281
  %v1286 = vadd.f32 %v1284, %v1272
  %v1287 = vadd.f32 %v1285, %v1274
  %v1288 = vxor.u32 %v1286, 2147483648
  %v1289 = vmul.f32 %v1288, 1.442695
  %v1290 = vpow.pop %v1289
  %v1291 = vadd.f32 %v1290, 1.0
  %v1292 = vrcp.pop %v1291
  %v1293 = vmul.f32 1.0, %v1292
  %v1294 = vtanh.pop %v1287
  %v1295 = vxor.u32 %v1287, 2147483648
  %v1296 = vmul.f32 %v1295, 1.442695
  %v1297 = vpow.pop %v1296
  %v1298 = vadd.f32 %v1297, 1.0
  %v1299 = vrcp.pop %v1298
  %v1300 = vmul.f32 1.0, %v1299
  %v1301 = vmul.f32 %v1293, 0.0
  %v1302 = vmul.f32 %v1293, %v1294
  %1304 = vrot.lane.b32.xlu0 %v1302, 64
  %v1305 = vpop.permute.xlu0 %1304
  %v1307 = vadd.f32 %v1301, %v1305
  %v1308 = vtanh.pop %v1307
  %v1309 = vmul.f32 %v1300, %v1308
  %1311 = vrot.lane.b32.xlu0 %v1309, 64
  %v1312 = vpop.permute.xlu0 %1311
  %1314 = vst.msk [vmem:[#allocation3] sm:$0x1] %vm427, %v1312
  %1315 = vst.msk [vmem:[#allocation3 + $0x7] sm:$0x1] %vm429, %v1312
  %v1316 = vpack.c.bf16 %v1309, %v1309
  %1318 = vrot.lane.b32.xlu0 %v1316, 64
  %v1319 = vpop.permute.xlu0 %1318
  %v1321 = vsel %vm346, %v1319, 0
  %1323 = vmatprep.subr.bf16.mxu0 %v1222
  %1324 = vmatpush1.bf16.msra.mxu0 %v1221
  %1325 = vmatprep.subr.bf16.mxu0 %v1224
  %1326 = vmatpush1.bf16.msra.mxu0 %v1223
  %1327 = vmatprep.subr.bf16.mxu0 %v1226
  %1328 = vmatpush1.bf16.msra.mxu0 %v1225
  %1329 = vmatprep.subr.bf16.mxu0 %v1228
  %1330 = vmatpush1.bf16.msra.mxu0 %v1227
  %1331 = vmatprep.subr.bf16.mxu0 0
  %1332 = vmatpush1.bf16.msra.mxu0 0
  %1333 = vmatprep.subr.bf16.mxu0 0
  %1334 = vmatpush1.bf16.msra.mxu0 0
  %1335 = vmatprep.subr.bf16.mxu0 0
  %1336 = vmatpush1.bf16.msra.mxu0 0
  %1337 = vmatprep.subr.bf16.mxu0 0
  %1338 = vmatpush1.bf16.msra.mxu0 0
  %1339 = vmatprep.subr.bf16.mxu0 0
  %1340 = vmatpush1.bf16.msra.mxu0 0
  %1341 = vmatprep.subr.bf16.mxu0 0
  %1342 = vmatpush1.bf16.msra.mxu0 0
  %1343 = vmatprep.subr.bf16.mxu0 0
  %1344 = vmatpush1.bf16.msra.mxu0 0
  %1345 = vmatprep.subr.bf16.mxu0 0
  %1346 = vmatpush1.bf16.msra.mxu0 0
  %1347 = vmatprep.subr.bf16.mxu0 0
  %1348 = vmatpush1.bf16.msra.mxu0 0
  %1349 = vmatprep.subr.bf16.mxu0 0
  %1350 = vmatpush1.bf16.msra.mxu0 0
  %1351 = vmatprep.subr.bf16.mxu0 0
  %1352 = vmatpush1.bf16.msra.mxu0 0
  %1353 = vmatprep.subr.bf16.mxu0 0
  %1354 = vmatpush1.bf16.msra.mxu0 0
  %1355 = vmatprep.mubr.bf16.mxu0 0
  %1356 = vmatmul.mubr.bf16.gmra.mrb[0].mxu0 %v1321
  %v1357 = vpop.f32.mrb[0].mxu0
  %v1358 = vadd.f32 0.0, %v1357
  %v1359 = vpop.f32.mrb[0].mxu0
  %v1360 = vadd.f32 0.0, %v1359
  %v1361 = vpop.f32.mrb[0].mxu0
  %v1362 = vpop.f32.mrb[0].mxu0
  %1363 = vdwg.mxu0
  %v1364 = vrot.slane %v1191, 5
  %v1365 = vrot.slane %v1193, 5
  %v1368 = vsel %vm67, %v1191, %v1364
  %v1369 = vsel %vm68, %v1193, %v1365
  %v1372 = vrot.slane %v1358, 7
  %v1373 = vrot.slane %v1360, 7
  %v1376 = vadd.f32 %v1368, %v1372
  %v1377 = vadd.f32 %v1369, %v1373
  %v1378 = vxor.u32 %v1376, 2147483648
  %v1379 = vmul.f32 %v1378, 1.442695
  %v1380 = vpow.pop %v1379
  %v1381 = vadd.f32 %v1380, 1.0
  %v1382 = vrcp.pop %v1381
  %v1383 = vmul.f32 1.0, %v1382
  %v1384 = vtanh.pop %v1377
  %v1385 = vxor.u32 %v1377, 2147483648
  %v1386 = vmul.f32 %v1385, 1.442695
  %v1387 = vpow.pop %v1386
  %v1388 = vadd.f32 %v1387, 1.0
  %v1389 = vrcp.pop %v1388
  %v1390 = vmul.f32 1.0, %v1389
  %v1392 = vrot.slane %v1307, 7
  %v1394 = vmul.f32 %v1383, %v1392
  %v1395 = vmul.f32 %v1383, %v1384
  %1397 = vrot.lane.b32.xlu0 %v1395, 64
  %v1398 = vpop.permute.xlu0 %1397
  %v1400 = vadd.f32 %v1394, %v1398
  %v1401 = vtanh.pop %v1400
  %v1402 = vmul.f32 %v1390, %v1401
  %1404 = vrot.lane.b32.xlu0 %v1402, 64
  %v1405 = vpop.permute.xlu0 %1404
  %1407 = vst.msk [vmem:[#allocation3] sm:$0x2] %vm522, %v1405
  %1408 = vst.msk [vmem:[#allocation3 + $0x5] sm:$0x2] %vm524, %v1405
  %v1409 = vpack.c.bf16 %v1402, %v1402
  %v1411 = vshrl.u32 %v1409, 16
  %1413 = vrot.lane.b32.xlu0 %v1411, 64
  %v1414 = vpop.permute.xlu0 %1413
  %v1416 = vsel %vm346, %v1414, 0
  %1418 = vmatprep.subr.bf16.mxu0 %v1222
  %1419 = vmatpush1.bf16.msra.mxu0 %v1221
  %1420 = vmatprep.subr.bf16.mxu0 %v1224
  %1421 = vmatpush1.bf16.msra.mxu0 %v1223
  %1422 = vmatprep.subr.bf16.mxu0 %v1226
  %1423 = vmatpush1.bf16.msra.mxu0 %v1225
  %1424 = vmatprep.subr.bf16.mxu0 %v1228
  %1425 = vmatpush1.bf16.msra.mxu0 %v1227
  %1426 = vmatprep.subr.bf16.mxu0 0
  %1427 = vmatpush1.bf16.msra.mxu0 0
  %1428 = vmatprep.subr.bf16.mxu0 0
  %1429 = vmatpush1.bf16.msra.mxu0 0
  %1430 = vmatprep.subr.bf16.mxu0 0
  %1431 = vmatpush1.bf16.msra.mxu0 0
  %1432 = vmatprep.subr.bf16.mxu0 0
  %1433 = vmatpush1.bf16.msra.mxu0 0
  %1434 = vmatprep.subr.bf16.mxu0 0
  %1435 = vmatpush1.bf16.msra.mxu0 0
  %1436 = vmatprep.subr.bf16.mxu0 0
  %1437 = vmatpush1.bf16.msra.mxu0 0
  %1438 = vmatprep.subr.bf16.mxu0 0
  %1439 = vmatpush1.bf16.msra.mxu0 0
  %1440 = vmatprep.subr.bf16.mxu0 0
  %1441 = vmatpush1.bf16.msra.mxu0 0
  %1442 = vmatprep.subr.bf16.mxu0 0
  %1443 = vmatpush1.bf16.msra.mxu0 0
  %1444 = vmatprep.subr.bf16.mxu0 0
  %1445 = vmatpush1.bf16.msra.mxu0 0
  %1446 = vmatprep.subr.bf16.mxu0 0
  %1447 = vmatpush1.bf16.msra.mxu0 0
  %1448 = vmatprep.subr.bf16.mxu0 0
  %1449 = vmatpush1.bf16.msra.mxu0 0
  %1450 = vmatprep.mubr.bf16.mxu0 0
  %1451 = vmatmul.mubr.bf16.gmra.mrb[0].mxu0 %v1416
  %v1452 = vpop.f32.mrb[0].mxu0
  %v1453 = vadd.f32 0.0, %v1452
  %v1454 = vpop.f32.mrb[0].mxu0
  %v1455 = vadd.f32 0.0, %v1454
  %v1456 = vpop.f32.mrb[0].mxu0
  %v1457 = vpop.f32.mrb[0].mxu0
  %1458 = vdwg.mxu0
  %v1459 = vrot.slane %v1191, 3
  %v1460 = vrot.slane %v1193, 3
  %v1463 = vsel %vm67, %v1191, %v1459
  %v1464 = vsel %vm68, %v1193, %v1460
  %v1467 = vrot.slane %v1453, 6
  %v1468 = vrot.slane %v1455, 6
  %v1471 = vadd.f32 %v1463, %v1467
  %v1472 = vadd.f32 %v1464, %v1468
  %v1473 = vxor.u32 %v1471, 2147483648
  %v1474 = vmul.f32 %v1473, 1.442695
  %v1475 = vpow.pop %v1474
  %v1476 = vadd.f32 %v1475, 1.0
  %v1477 = vrcp.pop %v1476
  %v1478 = vmul.f32 1.0, %v1477
  %v1479 = vtanh.pop %v1472
  %v1480 = vxor.u32 %v1472, 2147483648
  %v1481 = vmul.f32 %v1480, 1.442695
  %v1482 = vpow.pop %v1481
  %v1483 = vadd.f32 %v1482, 1.0
  %v1484 = vrcp.pop %v1483
  %v1485 = vmul.f32 1.0, %v1484
  %v1487 = vrot.slane %v1400, 7
  %v1489 = vmul.f32 %v1478, %v1487
  %v1490 = vmul.f32 %v1478, %v1479
  %1492 = vrot.lane.b32.xlu0 %v1490, 64
  %v1493 = vpop.permute.xlu0 %1492
  %v1495 = vadd.f32 %v1489, %v1493
  %v1496 = vtanh.pop %v1495
  %v1497 = vmul.f32 %v1485, %v1496
  %1499 = vrot.lane.b32.xlu0 %v1497, 64
  %v1500 = vpop.permute.xlu0 %1499
  %1502 = vst.msk [vmem:[#allocation3] sm:$0x4] %vm619, %v1500
  %1503 = vst.msk [vmem:[#allocation3 + $0x3] sm:$0x4] %vm621, %v1500
  %v1504 = vpack.c.bf16 %v1497, %v1497
  %v1506 = vrot.slane %v1504, 1
  %1507 = vrot.lane.b32.xlu0 %v1506, 64
  %v1508 = vpop.permute.xlu0 %1507
  %v1510 = vsel %vm346, %v1508, 0
  %1512 = vmatprep.subr.bf16.mxu0 %v1222
  %1513 = vmatpush1.bf16.msra.mxu0 %v1221
  %1514 = vmatprep.subr.bf16.mxu0 %v1224
  %1515 = vmatpush1.bf16.msra.mxu0 %v1223
  %1516 = vmatprep.subr.bf16.mxu0 %v1226
  %1517 = vmatpush1.bf16.msra.mxu0 %v1225
  %1518 = vmatprep.subr.bf16.mxu0 %v1228
  %1519 = vmatpush1.bf16.msra.mxu0 %v1227
  %1520 = vmatprep.subr.bf16.mxu0 0
  %1521 = vmatpush1.bf16.msra.mxu0 0
  %1522 = vmatprep.subr.bf16.mxu0 0
  %1523 = vmatpush1.bf16.msra.mxu0 0
  %1524 = vmatprep.subr.bf16.mxu0 0
  %1525 = vmatpush1.bf16.msra.mxu0 0
  %1526 = vmatprep.subr.bf16.mxu0 0
  %1527 = vmatpush1.bf16.msra.mxu0 0
  %1528 = vmatprep.subr.bf16.mxu0 0
  %1529 = vmatpush1.bf16.msra.mxu0 0
  %1530 = vmatprep.subr.bf16.mxu0 0
  %1531 = vmatpush1.bf16.msra.mxu0 0
  %1532 = vmatprep.subr.bf16.mxu0 0
  %1533 = vmatpush1.bf16.msra.mxu0 0
  %1534 = vmatprep.subr.bf16.mxu0 0
  %1535 = vmatpush1.bf16.msra.mxu0 0
  %1536 = vmatprep.subr.bf16.mxu0 0
  %1537 = vmatpush1.bf16.msra.mxu0 0
  %1538 = vmatprep.subr.bf16.mxu0 0
  %1539 = vmatpush1.bf16.msra.mxu0 0
  %1540 = vmatprep.subr.bf16.mxu0 0
  %1541 = vmatpush1.bf16.msra.mxu0 0
  %1542 = vmatprep.subr.bf16.mxu0 0
  %1543 = vmatpush1.bf16.msra.mxu0 0
  %1544 = vmatprep.mubr.bf16.mxu0 0
  %1545 = vmatmul.mubr.bf16.gmra.mrb[0].mxu0 %v1510
  %v1546 = vpop.f32.mrb[0].mxu0
  %v1547 = vadd.f32 0.0, %v1546
  %v1548 = vpop.f32.mrb[0].mxu0
  %v1549 = vadd.f32 0.0, %v1548
  %v1550 = vpop.f32.mrb[0].mxu0
  %v1551 = vpop.f32.mrb[0].mxu0
  %1552 = vdwg.mxu0
  %v1553 = vrot.slane %v1191, 1
  %v1554 = vrot.slane %v1193, 1
  %v1557 = vsel %vm67, %v1191, %v1553
  %v1558 = vsel %vm68, %v1193, %v1554
  %v1561 = vrot.slane %v1547, 5
  %v1562 = vrot.slane %v1549, 5
  %v1565 = vadd.f32 %v1557, %v1561
  %v1566 = vadd.f32 %v1558, %v1562
  %v1567 = vxor.u32 %v1565, 2147483648
  %v1568 = vmul.f32 %v1567, 1.442695
  %v1569 = vpow.pop %v1568
  %v1570 = vadd.f32 %v1569, 1.0
  %v1571 = vrcp.pop %v1570
  %v1572 = vmul.f32 1.0, %v1571
  %v1573 = vtanh.pop %v1566
  %v1574 = vxor.u32 %v1566, 2147483648
  %v1575 = vmul.f32 %v1574, 1.442695
  %v1576 = vpow.pop %v1575
  %v1577 = vadd.f32 %v1576, 1.0
  %v1578 = vrcp.pop %v1577
  %v1579 = vmul.f32 1.0, %v1578
  %v1581 = vrot.slane %v1495, 7
  %v1583 = vmul.f32 %v1572, %v1581
  %v1584 = vmul.f32 %v1572, %v1573
  %1586 = vrot.lane.b32.xlu0 %v1584, 64
  %v1587 = vpop.permute.xlu0 %1586
  %v1589 = vadd.f32 %v1583, %v1587
  %v1590 = vtanh.pop %v1589
  %v1591 = vmul.f32 %v1579, %v1590
  %1593 = vrot.lane.b32.xlu0 %v1591, 64
  %v1594 = vpop.permute.xlu0 %1593
  %1596 = vst.msk [vmem:[#allocation3] sm:$0x8] %vm715, %v1594
  %1597 = vst.msk [vmem:[#allocation3 + $0x1] sm:$0x8] %vm717, %v1594
  %v1598 = vpack.c.bf16 %v1591, %v1591
  %v1600 = vshrl.u32 %v1598, 16
  %v1602 = vrot.slane %v1600, 1
  %1603 = vrot.lane.b32.xlu0 %v1602, 64
  %v1604 = vpop.permute.xlu0 %1603
  %v1606 = vsel %vm346, %v1604, 0
  %1608 = vmatprep.subr.bf16.mxu0 %v1222
  %1609 = vmatpush1.bf16.msra.mxu0 %v1221
  %1610 = vmatprep.subr.bf16.mxu0 %v1224
  %1611 = vmatpush1.bf16.msra.mxu0 %v1223
  %1612 = vmatprep.subr.bf16.mxu0 %v1226
  %1613 = vmatpush1.bf16.msra.mxu0 %v1225
  %1614 = vmatprep.subr.bf16.mxu0 %v1228
  %1615 = vmatpush1.bf16.msra.mxu0 %v1227
  %1616 = vmatprep.subr.bf16.mxu0 0
  %1617 = vmatpush1.bf16.msra.mxu0 0
  %1618 = vmatprep.subr.bf16.mxu0 0
  %1619 = vmatpush1.bf16.msra.mxu0 0
  %1620 = vmatprep.subr.bf16.mxu0 0
  %1621 = vmatpush1.bf16.msra.mxu0 0
  %1622 = vmatprep.subr.bf16.mxu0 0
  %1623 = vmatpush1.bf16.msra.mxu0 0
  %1624 = vmatprep.subr.bf16.mxu0 0
  %1625 = vmatpush1.bf16.msra.mxu0 0
  %1626 = vmatprep.subr.bf16.mxu0 0
  %1627 = vmatpush1.bf16.msra.mxu0 0
  %1628 = vmatprep.subr.bf16.mxu0 0
  %1629 = vmatpush1.bf16.msra.mxu0 0
  %1630 = vmatprep.subr.bf16.mxu0 0
  %1631 = vmatpush1.bf16.msra.mxu0 0
  %1632 = vmatprep.subr.bf16.mxu0 0
  %1633 = vmatpush1.bf16.msra.mxu0 0
  %1634 = vmatprep.subr.bf16.mxu0 0
  %1635 = vmatpush1.bf16.msra.mxu0 0
  %1636 = vmatprep.subr.bf16.mxu0 0
  %1637 = vmatpush1.bf16.msra.mxu0 0
  %1638 = vmatprep.subr.bf16.mxu0 0
  %1639 = vmatpush1.bf16.msra.mxu0 0
  %1640 = vmatprep.mubr.bf16.mxu0 0
  %1641 = vmatmul.mubr.bf16.gmra.mrb[0].mxu0 %v1606
  %v1642 = vpop.f32.mrb[0].mxu0
  %v1643 = vadd.f32 0.0, %v1642
  %v1644 = vpop.f32.mrb[0].mxu0
  %v1645 = vadd.f32 0.0, %v1644
  %v1646 = vpop.f32.mrb[0].mxu0
  %v1647 = vpop.f32.mrb[0].mxu0
  %1648 = vdwg.mxu0
  %v1651 = vrot.slane %v1643, 4
  %v1652 = vrot.slane %v1645, 4
  %v1655 = vadd.f32 %v1284, %v1651
  %v1656 = vadd.f32 %v1285, %v1652
  %v1657 = vxor.u32 %v1655, 2147483648
  %v1658 = vmul.f32 %v1657, 1.442695
  %v1659 = vpow.pop %v1658
  %v1660 = vadd.f32 %v1659, 1.0
  %v1661 = vrcp.pop %v1660
  %v1662 = vmul.f32 1.0, %v1661
  %v1663 = vtanh.pop %v1656
  %v1664 = vxor.u32 %v1656, 2147483648
  %v1665 = vmul.f32 %v1664, 1.442695
  %v1666 = vpow.pop %v1665
  %v1667 = vadd.f32 %v1666, 1.0
  %v1668 = vrcp.pop %v1667
  %v1669 = vmul.f32 1.0, %v1668
  %v1671 = vrot.slane %v1589, 7
  %v1673 = vmul.f32 %v1662, %v1671
  %v1674 = vmul.f32 %v1662, %v1663
  %1676 = vrot.lane.b32.xlu0 %v1674, 64
  %v1677 = vpop.permute.xlu0 %1676
  %v1679 = vadd.f32 %v1673, %v1677
  %v1680 = vtanh.pop %v1679
  %v1681 = vmul.f32 %v1669, %v1680
  %1683 = vrot.lane.b32.xlu0 %v1681, 64
  %v1684 = vpop.permute.xlu0 %1683
  %1686 = vst.msk [vmem:[#allocation3] sm:$0x10] %vm807, %v1684
  %1687 = vst.msk [vmem:[#allocation3 - $0x1] sm:$0x10] %vm809, %v1684
  %v1688 = vpack.c.bf16 %v1681, %v1681
  %v1690 = vrot.slane %v1688, 2
  %1691 = vrot.lane.b32.xlu0 %v1690, 64
  %v1692 = vpop.permute.xlu0 %1691
  %v1694 = vsel %vm346, %v1692, 0
  %1696 = vmatprep.subr.bf16.mxu0 %v1222
  %1697 = vmatpush1.bf16.msra.mxu0 %v1221
  %1698 = vmatprep.subr.bf16.mxu0 %v1224
  %1699 = vmatpush1.bf16.msra.mxu0 %v1223
  %1700 = vmatprep.subr.bf16.mxu0 %v1226
  %1701 = vmatpush1.bf16.msra.mxu0 %v1225
  %1702 = vmatprep.subr.bf16.mxu0 %v1228
  %1703 = vmatpush1.bf16.msra.mxu0 %v1227
  %1704 = vmatprep.subr.bf16.mxu0 0
  %1705 = vmatpush1.bf16.msra.mxu0 0
  %1706 = vmatprep.subr.bf16.mxu0 0
  %1707 = vmatpush1.bf16.msra.mxu0 0
  %1708 = vmatprep.subr.bf16.mxu0 0
  %1709 = vmatpush1.bf16.msra.mxu0 0
  %1710 = vmatprep.subr.bf16.mxu0 0
  %1711 = vmatpush1.bf16.msra.mxu0 0
  %1712 = vmatprep.subr.bf16.mxu0 0
  %1713 = vmatpush1.bf16.msra.mxu0 0
  %1714 = vmatprep.subr.bf16.mxu0 0
  %1715 = vmatpush1.bf16.msra.mxu0 0
  %1716 = vmatprep.subr.bf16.mxu0 0
  %1717 = vmatpush1.bf16.msra.mxu0 0
  %1718 = vmatprep.subr.bf16.mxu0 0
  %1719 = vmatpush1.bf16.msra.mxu0 0
  %1720 = vmatprep.subr.bf16.mxu0 0
  %1721 = vmatpush1.bf16.msra.mxu0 0
  %1722 = vmatprep.subr.bf16.mxu0 0
  %1723 = vmatpush1.bf16.msra.mxu0 0
  %1724 = vmatprep.subr.bf16.mxu0 0
  %1725 = vmatpush1.bf16.msra.mxu0 0
  %1726 = vmatprep.subr.bf16.mxu0 0
  %1727 = vmatpush1.bf16.msra.mxu0 0
  %1728 = vmatprep.mubr.bf16.mxu0 0
  %1729 = vmatmul.mubr.bf16.gmra.mrb[0].mxu0 %v1694
  %v1730 = vpop.f32.mrb[0].mxu0
  %v1731 = vadd.f32 0.0, %v1730
  %v1732 = vpop.f32.mrb[0].mxu0
  %v1733 = vadd.f32 0.0, %v1732
  %v1734 = vpop.f32.mrb[0].mxu0
  %v1735 = vpop.f32.mrb[0].mxu0
  %1736 = vdwg.mxu0
  %v1739 = vrot.slane %v1731, 3
  %v1740 = vrot.slane %v1733, 3
  %v1743 = vadd.f32 %v1368, %v1739
  %v1744 = vadd.f32 %v1369, %v1740
  %v1745 = vxor.u32 %v1743, 2147483648
  %v1746 = vmul.f32 %v1745, 1.442695
  %v1747 = vpow.pop %v1746
  %v1748 = vadd.f32 %v1747, 1.0
  %v1749 = vrcp.pop %v1748
  %v1750 = vmul.f32 1.0, %v1749
  %v1751 = vtanh.pop %v1744
  %v1752 = vxor.u32 %v1744, 2147483648
  %v1753 = vmul.f32 %v1752, 1.442695
  %v1754 = vpow.pop %v1753
  %v1755 = vadd.f32 %v1754, 1.0
  %v1756 = vrcp.pop %v1755
  %v1757 = vmul.f32 1.0, %v1756
  %v1759 = vrot.slane %v1679, 7
  %v1761 = vmul.f32 %v1750, %v1759
  %v1762 = vmul.f32 %v1750, %v1751
  %1764 = vrot.lane.b32.xlu0 %v1762, 64
  %v1765 = vpop.permute.xlu0 %1764
  %v1767 = vadd.f32 %v1761, %v1765
  %v1768 = vtanh.pop %v1767
  %v1769 = vmul.f32 %v1757, %v1768
  %1771 = vrot.lane.b32.xlu0 %v1769, 64
  %v1772 = vpop.permute.xlu0 %1771
  %1774 = vst.msk [vmem:[#allocation3] sm:$0x20] %vm897, %v1772
  %1775 = vst.msk [vmem:[#allocation3 - $0x3] sm:$0x20] %vm899, %v1772
  %v1776 = vpack.c.bf16 %v1769, %v1769
  %v1778 = vshrl.u32 %v1776, 16
  %v1780 = vrot.slane %v1778, 2
  %1781 = vrot.lane.b32.xlu0 %v1780, 64
  %v1782 = vpop.permute.xlu0 %1781
  %v1784 = vsel %vm346, %v1782, 0
  %1786 = vmatprep.subr.bf16.mxu0 %v1222
  %1787 = vmatpush1.bf16.msra.mxu0 %v1221
  %1788 = vmatprep.subr.bf16.mxu0 %v1224
  %1789 = vmatpush1.bf16.msra.mxu0 %v1223
  %1790 = vmatprep.subr.bf16.mxu0 %v1226
  %1791 = vmatpush1.bf16.msra.mxu0 %v1225
  %1792 = vmatprep.subr.bf16.mxu0 %v1228
  %1793 = vmatpush1.bf16.msra.mxu0 %v1227
  %1794 = vmatprep.subr.bf16.mxu0 0
  %1795 = vmatpush1.bf16.msra.mxu0 0
  %1796 = vmatprep.subr.bf16.mxu0 0
  %1797 = vmatpush1.bf16.msra.mxu0 0
  %1798 = vmatprep.subr.bf16.mxu0 0
  %1799 = vmatpush1.bf16.msra.mxu0 0
  %1800 = vmatprep.subr.bf16.mxu0 0
  %1801 = vmatpush1.bf16.msra.mxu0 0
  %1802 = vmatprep.subr.bf16.mxu0 0
  %1803 = vmatpush1.bf16.msra.mxu0 0
  %1804 = vmatprep.subr.bf16.mxu0 0
  %1805 = vmatpush1.bf16.msra.mxu0 0
  %1806 = vmatprep.subr.bf16.mxu0 0
  %1807 = vmatpush1.bf16.msra.mxu0 0
  %1808 = vmatprep.subr.bf16.mxu0 0
  %1809 = vmatpush1.bf16.msra.mxu0 0
  %1810 = vmatprep.subr.bf16.mxu0 0
  %1811 = vmatpush1.bf16.msra.mxu0 0
  %1812 = vmatprep.subr.bf16.mxu0 0
  %1813 = vmatpush1.bf16.msra.mxu0 0
  %1814 = vmatprep.subr.bf16.mxu0 0
  %1815 = vmatpush1.bf16.msra.mxu0 0
  %1816 = vmatprep.subr.bf16.mxu0 0
  %1817 = vmatpush1.bf16.msra.mxu0 0
  %1818 = vmatprep.mubr.bf16.mxu0 0
  %1819 = vmatmul.mubr.bf16.gmra.mrb[0].mxu0 %v1784
  %v1820 = vpop.f32.mrb[0].mxu0
  %v1821 = vadd.f32 0.0, %v1820
  %v1822 = vpop.f32.mrb[0].mxu0
  %v1823 = vadd.f32 0.0, %v1822
  %v1824 = vpop.f32.mrb[0].mxu0
  %v1825 = vpop.f32.mrb[0].mxu0
  %1826 = vdwg.mxu0
  %v1829 = vrot.slane %v1821, 2
  %v1830 = vrot.slane %v1823, 2
  %v1833 = vadd.f32 %v1463, %v1829
  %v1834 = vadd.f32 %v1464, %v1830
  %v1835 = vxor.u32 %v1833, 2147483648
  %v1836 = vmul.f32 %v1835, 1.442695
  %v1837 = vpow.pop %v1836
  %v1838 = vadd.f32 %v1837, 1.0
  %v1839 = vrcp.pop %v1838
  %v1840 = vmul.f32 1.0, %v1839
  %v1841 = vtanh.pop %v1834
  %v1842 = vxor.u32 %v1834, 2147483648
  %v1843 = vmul.f32 %v1842, 1.442695
  %v1844 = vpow.pop %v1843
  %v1845 = vadd.f32 %v1844, 1.0
  %v1846 = vrcp.pop %v1845
  %v1847 = vmul.f32 1.0, %v1846
  %v1849 = vrot.slane %v1767, 7
  %v1851 = vmul.f32 %v1840, %v1849
  %v1852 = vmul.f32 %v1840, %v1841
  %1854 = vrot.lane.b32.xlu0 %v1852, 64
  %v1855 = vpop.permute.xlu0 %1854
  %v1857 = vadd.f32 %v1851, %v1855
  %v1858 = vtanh.pop %v1857
  %v1859 = vmul.f32 %v1847, %v1858
  %1861 = vrot.lane.b32.xlu0 %v1859, 64
  %v1862 = vpop.permute.xlu0 %1861
  %1864 = vst.msk [vmem:[#allocation3] sm:$0x40] %vm989, %v1862
  %1865 = vst.msk [vmem:[#allocation3 - $0x5] sm:$0x40] %vm991, %v1862
  %v1866 = vpack.c.bf16 %v1859, %v1859
  %v1868 = vrot.slane %v1866, 3
  %1869 = vrot.lane.b32.xlu0 %v1868, 64
  %v1870 = vpop.permute.xlu0 %1869
  %v1872 = vsel %vm346, %v1870, 0
  %1874 = vmatprep.subr.bf16.mxu0 %v1222
  %1875 = vmatpush1.bf16.msra.mxu0 %v1221
  %1876 = vmatprep.subr.bf16.mxu0 %v1224
  %1877 = vmatpush1.bf16.msra.mxu0 %v1223
  %1878 = vmatprep.subr.bf16.mxu0 %v1226
  %1879 = vmatpush1.bf16.msra.mxu0 %v1225
  %1880 = vmatprep.subr.bf16.mxu0 %v1228
  %1881 = vmatpush1.bf16.msra.mxu0 %v1227
  %1882 = vmatprep.subr.bf16.mxu0 0
  %1883 = vmatpush1.bf16.msra.mxu0 0
  %1884 = vmatprep.subr.bf16.mxu0 0
  %1885 = vmatpush1.bf16.msra.mxu0 0
  %1886 = vmatprep.subr.bf16.mxu0 0
  %1887 = vmatpush1.bf16.msra.mxu0 0
  %1888 = vmatprep.subr.bf16.mxu0 0
  %1889 = vmatpush1.bf16.msra.mxu0 0
  %1890 = vmatprep.subr.bf16.mxu0 0
  %1891 = vmatpush1.bf16.msra.mxu0 0
  %1892 = vmatprep.subr.bf16.mxu0 0
  %1893 = vmatpush1.bf16.msra.mxu0 0
  %1894 = vmatprep.subr.bf16.mxu0 0
  %1895 = vmatpush1.bf16.msra.mxu0 0
  %1896 = vmatprep.subr.bf16.mxu0 0
  %1897 = vmatpush1.bf16.msra.mxu0 0
  %1898 = vmatprep.subr.bf16.mxu0 0
  %1899 = vmatpush1.bf16.msra.mxu0 0
  %1900 = vmatprep.subr.bf16.mxu0 0
  %1901 = vmatpush1.bf16.msra.mxu0 0
  %1902 = vmatprep.subr.bf16.mxu0 0
  %1903 = vmatpush1.bf16.msra.mxu0 0
  %1904 = vmatprep.subr.bf16.mxu0 0
  %1905 = vmatpush1.bf16.msra.mxu0 0
  %1906 = vmatprep.mubr.bf16.mxu0 0
  %1907 = vmatmul.mubr.bf16.gmra.mrb[0].mxu0 %v1872
  %v1908 = vpop.f32.mrb[0].mxu0
  %v1909 = vadd.f32 0.0, %v1908
  %v1910 = vpop.f32.mrb[0].mxu0
  %v1911 = vadd.f32 0.0, %v1910
  %v1912 = vpop.f32.mrb[0].mxu0
  %v1913 = vpop.f32.mrb[0].mxu0
  %1914 = vdwg.mxu0
  %v1917 = vrot.slane %v1909, 1
  %v1918 = vrot.slane %v1911, 1
  %v1921 = vadd.f32 %v1557, %v1917
  %v1922 = vadd.f32 %v1558, %v1918
  %v1923 = vxor.u32 %v1921, 2147483648
  %v1924 = vmul.f32 %v1923, 1.442695
  %v1925 = vpow.pop %v1924
  %v1926 = vadd.f32 %v1925, 1.0
  %v1927 = vrcp.pop %v1926
  %v1928 = vmul.f32 1.0, %v1927
  %v1929 = vtanh.pop %v1922
  %v1930 = vxor.u32 %v1922, 2147483648
  %v1931 = vmul.f32 %v1930, 1.442695
  %v1932 = vpow.pop %v1931
  %v1933 = vadd.f32 %v1932, 1.0
  %v1934 = vrcp.pop %v1933
  %v1935 = vmul.f32 1.0, %v1934
  %v1937 = vrot.slane %v1857, 7
  %v1939 = vmul.f32 %v1928, %v1937
  %v1940 = vmul.f32 %v1928, %v1929
  %1942 = vrot.lane.b32.xlu0 %v1940, 64
  %v1943 = vpop.permute.xlu0 %1942
  %v1945 = vadd.f32 %v1939, %v1943
  %v1946 = vtanh.pop %v1945
  %v1947 = vmul.f32 %v1935, %v1946
  %1949 = vrot.lane.b32.xlu0 %v1947, 64
  %v1950 = vpop.permute.xlu0 %1949
  %1952 = vst.msk [vmem:[#allocation3] sm:$0x80] %vm1079, %v1950
  %1953 = vst.msk [vmem:[#allocation3 - $0x7] sm:$0x80] %vm1081, %v1950
  %s1954 = sld [smem:[#allocation6]]
  %s1955 = sld [smem:[#allocation6 + $0x1]]
  %s1956 = scalar_lea.vmem [#allocation3], %s1954
  %v1957 = vld [vmem:[%s1956] sm:$0x1]
  %s1958 = scalar_lea.vmem [#allocation3], %s1955
  %v1959 = vld [vmem:[%s1958] sm:$0x1]
  %vm1960 = vcmask 516096
  %1961 = vst.msk [vmem:[#allocation4] sm:$0x1] %vm1960, %v1957
  %1963 = vrot.lane.b32.xlu0 %v1959, 64
  %v1964 = vpop.permute.xlu0 %1963
  %vm1966 = vcmask 1040896
  %1967 = vst.msk [vmem:[#allocation4] sm:$0x1] %vm1966, %v1964
  %v1968 = vadd.f32 %v1957, %v1959
  %1969 = vst.msk [vmem:[#allocation4 + $0x4] sm:$0x1] %vm1960, %v1968
  %v1970 = vsub.f32 %v1957, %v1959
  %1972 = vrot.lane.b32.xlu0 %v1970, 64
  %v1973 = vpop.permute.xlu0 %1972
  %1975 = vst.msk [vmem:[#allocation4 + $0x4] sm:$0x1] %vm1966, %v1973
  %s1976 = sld [smem:[#allocation6 + $0x80]]
  %s1977 = sld [smem:[#allocation6 + $0x81]]
  %s1978 = scalar_lea.vmem [#allocation3], %s1976
  %v1979 = vld [vmem:[%s1978] sm:$0x1]
  %s1980 = scalar_lea.vmem [#allocation3], %s1977
  %v1981 = vld [vmem:[%s1980] sm:$0x1]
  %1982 = vst.msk [vmem:[#allocation4 + $0x1] sm:$0x1] %vm1960, %v1979
  %1984 = vrot.lane.b32.xlu0 %v1981, 64
  %v1985 = vpop.permute.xlu0 %1984
  %1987 = vst.msk [vmem:[#allocation4 + $0x1] sm:$0x1] %vm1966, %v1985
  %v1988 = vadd.f32 %v1979, %v1981
  %1989 = vst.msk [vmem:[#allocation4 + $0x5] sm:$0x1] %vm1960, %v1988
  %v1990 = vsub.f32 %v1979, %v1981
  %1992 = vrot.lane.b32.xlu0 %v1990, 64
  %v1993 = vpop.permute.xlu0 %1992
  %1995 = vst.msk [vmem:[#allocation4 + $0x5] sm:$0x1] %vm1966, %v1993
  %s1996 = sld [smem:[#allocation6 + $0x100]]
  %s1997 = sld [smem:[#allocation6 + $0x101]]
  %s1998 = scalar_lea.vmem [#allocation3], %s1996
  %v1999 = vld [vmem:[%s1998] sm:$0x1]
  %s2000 = scalar_lea.vmem [#allocation3], %s1997
  %v2001 = vld [vmem:[%s2000] sm:$0x1]
  %2002 = vst.msk [vmem:[#allocation4 + $0x2] sm:$0x1] %vm1960, %v1999
  %2004 = vrot.lane.b32.xlu0 %v2001, 64
  %v2005 = vpop.permute.xlu0 %2004
  %2007 = vst.msk [vmem:[#allocation4 + $0x2] sm:$0x1] %vm1966, %v2005
  %v2008 = vadd.f32 %v1999, %v2001
  %2009 = vst.msk [vmem:[#allocation4 + $0x6] sm:$0x1] %vm1960, %v2008
  %v2010 = vsub.f32 %v1999, %v2001
  %2012 = vrot.lane.b32.xlu0 %v2010, 64
  %v2013 = vpop.permute.xlu0 %2012
  %2015 = vst.msk [vmem:[#allocation4 + $0x6] sm:$0x1] %vm1966, %v2013
  %s2016 = sld [smem:[#allocation6 + $0x180]]
  %s2017 = sld [smem:[#allocation6 + $0x181]]
  %s2018 = scalar_lea.vmem [#allocation3], %s2016
  %v2019 = vld [vmem:[%s2018] sm:$0x1]
  %s2020 = scalar_lea.vmem [#allocation3], %s2017
  %v2021 = vld [vmem:[%s2020] sm:$0x1]
  %2022 = vst.msk [vmem:[#allocation4 + $0x3] sm:$0x1] %vm1960, %v2019
  %2024 = vrot.lane.b32.xlu0 %v2021, 64
  %v2025 = vpop.permute.xlu0 %2024
  %2027 = vst.msk [vmem:[#allocation4 + $0x3] sm:$0x1] %vm1966, %v2025
  %v2028 = vadd.f32 %v2019, %v2021
  %2029 = vst.msk [vmem:[#allocation4 + $0x7] sm:$0x1] %vm1960, %v2028
  %v2030 = vsub.f32 %v2019, %v2021
  %2032 = vrot.lane.b32.xlu0 %v2030, 64
  %v2033 = vpop.permute.xlu0 %2032
  %2035 = vst.msk [vmem:[#allocation4 + $0x7] sm:$0x1] %vm1966, %v2033
  %v2036 = vld [vmem:[#allocation4] sm:$0xff]
  %v2037 = vld [vmem:[%s8] sm:$0xff]
  %v2038 = vld [vmem:[%s8 + $0x8] sm:$0xff]
  %v2039 = vld [vmem:[%s8 + $0x10] sm:$0xff]
  %v2040 = vld [vmem:[%s8 + $0x18] sm:$0xff]
  %v2041 = vld [vmem:[%s8 + $0x20] sm:$0xff]
  %v2042 = vld [vmem:[%s8 + $0x28] sm:$0xff]
  %v2043 = vld [vmem:[%s8 + $0x30] sm:$0xff]
  %v2044 = vld [vmem:[%s8 + $0x38] sm:$0xff]
  %v2045 = vld [vmem:[%s8 + $0x40] sm:$0xff]
  %v2046 = vld [vmem:[%s8 + $0x48] sm:$0xff]
  %v2047 = vld [vmem:[%s8 + $0x50] sm:$0xff]
  %v2048 = vld [vmem:[%s8 + $0x58] sm:$0xff]
  %v2049 = vld [vmem:[%s8 + $0x60] sm:$0xff]
  %v2050 = vld [vmem:[%s8 + $0x68] sm:$0xff]
  %v2051 = vld [vmem:[%s8 + $0x70] sm:$0xff]
  %v2052 = vld [vmem:[%s8 + $0x78] sm:$0xff]
  %v2053 = vld [vmem:[%s8 + $0x80] sm:$0xff]
  %v2054 = vld [vmem:[%s8 + $0x88] sm:$0xff]
  %v2055 = vld [vmem:[%s8 + $0x90] sm:$0xff]
  %v2056 = vld [vmem:[%s8 + $0x98] sm:$0xff]
  %v2057 = vld [vmem:[%s8 + $0xa0] sm:$0xff]
  %v2058 = vld [vmem:[%s8 + $0xa8] sm:$0xff]
  %v2059 = vld [vmem:[%s8 + $0xb0] sm:$0xff]
  %v2060 = vld [vmem:[%s8 + $0xb8] sm:$0xff]
  %v2061 = vld [vmem:[%s8 + $0xc0] sm:$0xff]
  %v2062 = vld [vmem:[%s8 + $0xc8] sm:$0xff]
  %v2063 = vld [vmem:[%s8 + $0xd0] sm:$0xff]
  %v2064 = vld [vmem:[%s8 + $0xd8] sm:$0xff]
  %v2065 = vld [vmem:[%s8 + $0xe0] sm:$0xff]
  %v2066 = vld [vmem:[%s8 + $0xe8] sm:$0xff]
  %v2067 = vld [vmem:[%s8 + $0xf0] sm:$0xff]
  %v2068 = vld [vmem:[%s8 + $0xf8] sm:$0xff]
  %v2069 = vld [vmem:[%s9] sm:$0x1]
  %v2071 = vlaneseq
  %v2072 = vshrl.u32 %v2071, 7
  %v2073 = vsub.s32 0, %v2072
  %v2074 = vrot.slane %v2069, %v2073
  %v2077 = vcombine.high %v2036, %v2036
  %2079 = vmatprep.subr.mxu0 0.0
  %2080 = vmatpush1.msra.mxu0 %v2037
  %2081 = vmatprep.subr.mxu0 0.0
  %2082 = vmatpush1.msra.mxu0 %v2038
  %2083 = vmatprep.subr.mxu0 0.0
  %2084 = vmatpush1.msra.mxu0 %v2039
  %2085 = vmatprep.subr.mxu0 0.0
  %2086 = vmatpush1.msra.mxu0 %v2040
  %2087 = vmatprep.subr.mxu0 0.0
  %2088 = vmatpush1.msra.mxu0 %v2041
  %2089 = vmatprep.subr.mxu0 0.0
  %2090 = vmatpush1.msra.mxu0 %v2042
  %2091 = vmatprep.subr.mxu0 0.0
  %2092 = vmatpush1.msra.mxu0 %v2043
  %2093 = vmatprep.subr.mxu0 0.0
  %2094 = vmatpush1.msra.mxu0 %v2044
  %2095 = vmatprep.subr.mxu0 0.0
  %2096 = vmatpush1.msra.mxu0 %v2045
  %2097 = vmatprep.subr.mxu0 0.0
  %2098 = vmatpush1.msra.mxu0 %v2046
  %2099 = vmatprep.subr.mxu0 0.0
  %2100 = vmatpush1.msra.mxu0 %v2047
  %2101 = vmatprep.subr.mxu0 0.0
  %2102 = vmatpush1.msra.mxu0 %v2048
  %2103 = vmatprep.subr.mxu0 0.0
  %2104 = vmatpush1.msra.mxu0 %v2049
  %2105 = vmatprep.subr.mxu0 0.0
  %2106 = vmatpush1.msra.mxu0 %v2050
  %2107 = vmatprep.subr.mxu0 0.0
  %2108 = vmatpush1.msra.mxu0 %v2051
  %2109 = vmatprep.subr.mxu0 0.0
  %2110 = vmatpush1.msra.mxu0 %v2052
  %2111 = vmatprep.subr.mxu0 0.0
  %2112 = vmatpush1.msra.mxu0 %v2053
  %2113 = vmatprep.subr.mxu0 0.0
  %2114 = vmatpush1.msra.mxu0 %v2054
  %2115 = vmatprep.subr.mxu0 0.0
  %2116 = vmatpush1.msra.mxu0 %v2055
  %2117 = vmatprep.subr.mxu0 0.0
  %2118 = vmatpush1.msra.mxu0 %v2056
  %2119 = vmatprep.subr.mxu0 0.0
  %2120 = vmatpush1.msra.mxu0 %v2057
  %2121 = vmatprep.subr.mxu0 0.0
  %2122 = vmatpush1.msra.mxu0 %v2058
  %2123 = vmatprep.subr.mxu0 0.0
  %2124 = vmatpush1.msra.mxu0 %v2059
  %2125 = vmatprep.subr.mxu0 0.0
  %2126 = vmatpush1.msra.mxu0 %v2060
  %2127 = vmatprep.subr.mxu0 0.0
  %2128 = vmatpush1.msra.mxu0 %v2061
  %2129 = vmatprep.subr.mxu0 0.0
  %2130 = vmatpush1.msra.mxu0 %v2062
  %2131 = vmatprep.subr.mxu0 0.0
  %2132 = vmatpush1.msra.mxu0 %v2063
  %2133 = vmatprep.subr.mxu0 0.0
  %2134 = vmatpush1.msra.mxu0 %v2064
  %2135 = vmatprep.subr.mxu0 0.0
  %2136 = vmatpush1.msra.mxu0 %v2065
  %2137 = vmatprep.subr.mxu0 0.0
  %2138 = vmatpush1.msra.mxu0 %v2066
  %2139 = vmatprep.subr.mxu0 0.0
  %2140 = vmatpush1.msra.mxu0 %v2067
  %2141 = vmatprep.subr.mxu0 0.0
  %2142 = vmatpush1.msra.mxu0 %v2068
  %2143 = vmatprep.mubr.f32.mxu0 %v2077
  %2144 = vmatmul.mubr.f32.gmra.mrb[0].mxu0 %v2036
  %v2145 = vpop.f32.mrb[0].mxu0
  %v2146 = vadd.f32 %v2074, %v2145
  %v2147 = vpop.f32.mrb[0].mxu0
  %2148 = vdwg.mxu0
  %2150 = vrot.lane.b32.xlu0 %v2146, 1
  %v2151 = vpop.permute.xlu0 %2150
  %v2153 = vsub.f32 %v2146, %v2151
  %v2154 = vmax.f32 %v2153, 0.0
  %v2155 = vand.u32 2147483647, %v2153
  %v2156 = vsub.f32 0.0, %v2155
  %v2157 = vmul.f32 %v2156, 1.442695
  %v2158 = vpow.pop %v2157
  %v2159 = vadd.f32 %v2158, 1.0
  %v2160 = vlog2.pop %v2159
  %v2161 = vmul.f32 %v2160, 0.6931472
  %v2162 = vadd.f32 %v2154, %v2161
  %v2163 = vsub.f32 0.0, %v2162
  %2165 = vrot.lane.b32.xlu0 %v2163, 127
  %v2166 = vpop.permute.xlu0 %2165
  %vm2168 = vcmask 3072
  %2169 = vst.msk [vmem:[%s10] sm:$0xf] %vm2168, %v2166
  %v2170 = vsub.f32 0.0, %v2153
  %v2171 = vmax.f32 %v2170, 0.0
  %v2172 = vand.u32 2147483647, %v2170
  %v2173 = vsub.f32 0.0, %v2172
  %v2174 = vmul.f32 %v2173, 1.442695
  %v2175 = vpow.pop %v2174
  %v2176 = vadd.f32 %v2175, 1.0
  %v2177 = vlog2.pop %v2176
  %v2178 = vmul.f32 %v2177, 0.6931472
  %v2179 = vadd.f32 %v2171, %v2178
  %v2180 = vsub.f32 0.0, %v2179
  %vm2181 = vcmask 11272
  %2182 = vst.msk [vmem:[%s10] sm:$0xf] %vm2181, %v2180
  // Predicated region
  $region38: #{pred_finder_forward.1} parent=0 // pred_check
    _
  $region39: #{pred_finder_forward.1} parent=0 // pred_check_branch
    %2184 = sbr.rel (0) target = $region41
  $region40: #{pred_finder_forward.1} parent=0 // pred_region
    _
  $region41: #{pred_finder_forward.1} parent=0 // pred_fallthru
    _
  // Predicated region
  $region42: #{pred_finder_forward.1} parent=0 // pred_check
    _
  $region43: #{pred_finder_forward.1} parent=0 // pred_check_branch
    %2186 = sbr.rel (0) target = $region45
  $region44: #{pred_finder_forward.1} parent=0 // pred_region
    _
  $region45: #{pred_finder_forward.1} parent=0 // pred_fallthru
    _

</llo_original>
